<compile_context>
chip_gen: v5e
topology: v5e:2x2
jax: 0.10.0
libtpu: 0.0.40
codegen_flags: <defaults>
</compile_context>

<pallas_src>
import math

import jax
import jax.numpy as jnp
from jax import lax
from jax.experimental import pallas as pl
from jax.experimental.pallas import tpu as pltpu

# ----------------------------- tiny BERT config -----------------------------
HIDDEN = 32
NUM_LAYERS = 2
NUM_HEADS = 4
HEAD_DIM = HIDDEN // NUM_HEADS
INTERMEDIATE = 64
VOCAB = 128
MAX_POS = 64
NUM_CLASSES = 5
CLS_PAD = 128          # lane-dense padded classifier width (sliced in wrapper)
LN_EPS = 1e-12


# ------------------------------ fused kernel --------------------------------
def _bert_seq_kernel(
    ids_ref,       # (1, S, 1)   int32 token ids for this sequence
    msk_ref,       # (1, 1, S)   f32 key-padding mask (1 = keep)
    word_emb_ref,  # (VOCAB, H)  f32
    pos_emb_ref,   # (MAX_POS, H) f32
    type_row_ref,  # (1, H)      f32 (token_type_ids == 0 row)
    emb_ln_g_ref,  # (1, H)
    emb_ln_b_ref,  # (1, H)
    wqkv_ref,      # (L, 3*NH, H, D) bf16  head-major fused Q|K|V weights
    bqkv_ref,      # (L, 3*NH, 1, D) f32
    wo_ref,        # (L, NH, D, H)   bf16  per-head output-projection slabs
    bo_ref,        # (L, 1, H)       f32
    ln1_g_ref,     # (L, 1, H)
    ln1_b_ref,     # (L, 1, H)
    w1_ref,        # (L, H, I)       bf16
    b1_ref,        # (L, 1, I)       f32
    w2_ref,        # (L, I, H)       bf16
    b2_ref,        # (L, 1, H)       f32
    ln2_g_ref,     # (L, 1, H)
    ln2_b_ref,     # (L, 1, H)
    pool_w_ref,    # (H, H)          bf16
    pool_b_ref,    # (1, H)          f32
    cls_w_ref,     # (H, CLS_PAD)    bf16 (zero-padded columns)
    cls_b_ref,     # (1, CLS_PAD)    f32
    out_ref,       # (1, 1, CLS_PAD) f32 logits for this sequence's CLS token
):
    f32 = jnp.float32
    bf16 = jnp.bfloat16
    S = ids_ref.shape[1]

    def layer_norm(x, g, b):
        mean = jnp.mean(x, axis=-1, keepdims=True)
        var = jnp.mean(jnp.square(x - mean), axis=-1, keepdims=True)
        return (x - mean) * lax.rsqrt(var + LN_EPS) * g + b

    def gelu(x):
        # TODO(synk): HF bert-base default is erf-based gelu; tanh approx used.
        c = math.sqrt(2.0 / math.pi)
        return 0.5 * x * (1.0 + jnp.tanh(c * (x + 0.044715 * x * x * x)))

    # ---- fused embedding lookup: exact one-hot matmul (no gather) ----------
    ids = ids_ref[0]                                               # (S, 1) int32
    word_oh = (lax.broadcasted_iota(jnp.int32, (S, VOCAB), 1) == ids).astype(f32)
    word_vec = jnp.dot(word_oh, word_emb_ref[...],
                       preferred_element_type=f32)                 # (S, H)
    emb = word_vec + pos_emb_ref[0:S, :] + type_row_ref[...]
    # embedding dropout (p=0.1) is identity at inference
    x = layer_norm(emb, emb_ln_g_ref[...], emb_ln_b_ref[...])      # (S, H) f32

    # additive key-padding mask; cross-sequence masking is unnecessary because
    # each grid step handles exactly one sequence.
    add_mask = (1.0 - msk_ref[...].astype(f32)) * (-10000.0)       # (1, 1, S)
    scale = 1.0 / math.sqrt(HEAD_DIM)

    # ---- transformer encoder layers (static unrolled) -----------------------
    for l in range(NUM_LAYERS):
        # head-batched fused Q|K|V projection: (3NH, S, H) @ (3NH, H, D)
        xb = jnp.broadcast_to(x.astype(bf16)[None], (3 * NUM_HEADS, S, HIDDEN))
        qkv = jnp.einsum('hmd,hde->hme', xb, wqkv_ref[l],
                         preferred_element_type=f32) + bqkv_ref[l]  # (3NH, S, D)
        q = qkv[0:NUM_HEADS].astype(bf16)                           # (NH, S, D)
        k = qkv[NUM_HEADS:2 * NUM_HEADS].astype(bf16)
        v = qkv[2 * NUM_HEADS:3 * NUM_HEADS].astype(bf16)

        s = jnp.einsum('hmd,hnd->hmn', q, k,
                       preferred_element_type=f32) * scale + add_mask  # (NH,S,S)
        s = s - jnp.max(s, axis=-1, keepdims=True)
        p = jnp.exp(s)
        p = p / jnp.sum(p, axis=-1, keepdims=True)                  # exact div
        ctx = jnp.einsum('hmn,hnd->hmd', p.astype(bf16), v,
                         preferred_element_type=f32)                # (NH, S, D)
        # head merge folded into the output projection, summed over heads
        attn = jnp.sum(jnp.einsum('hmd,hdk->hmk', ctx.astype(bf16), wo_ref[l],
                                  preferred_element_type=f32), axis=0)
        attn = attn + bo_ref[l]
        x = layer_norm(attn + x, ln1_g_ref[l], ln1_b_ref[l])

        # feed-forward
        h1 = gelu(jnp.dot(x.astype(bf16), w1_ref[l],
                          preferred_element_type=f32) + b1_ref[l])
        h2 = jnp.dot(h1.astype(bf16), w2_ref[l],
                     preferred_element_type=f32) + b2_ref[l]
        x = layer_norm(h2 + x, ln2_g_ref[l], ln2_b_ref[l])

    # ---- pooler (tanh dense) on CLS row + classifier (dropout = identity) ---
    cls = x[0:1, :]                                                 # (1, H)
    pooled = jnp.tanh(jnp.dot(cls.astype(bf16), pool_w_ref[...],
                              preferred_element_type=f32) + pool_b_ref[...])
    logits = jnp.dot(pooled.astype(bf16), cls_w_ref[...],
                     preferred_element_type=f32) + cls_b_ref[...]   # (1, CLS_PAD)
    out_ref[0] = logits.astype(out_ref.dtype)


# ----------------------- parameters (packed ONCE here) ----------------------
def init_params(key):
    keys = iter(jax.random.split(key, 64))

    def w(shape, scale=0.02):
        return scale * jax.random.normal(next(keys), shape, dtype=jnp.float32)

    zeros = lambda s: jnp.zeros(s, jnp.float32)
    ones = lambda s: jnp.ones(s, jnp.float32)
    bf = jnp.bfloat16

    word_emb = w((VOCAB, HIDDEN))
    pos_emb = w((MAX_POS, HIDDEN))
    type_emb = w((2, HIDDEN))

    layers = []
    for _ in range(NUM_LAYERS):
        layers.append(dict(
            wq=w((HIDDEN, HIDDEN)), bq=zeros((HIDDEN,)),
            wk=w((HIDDEN, HIDDEN)), bk=zeros((HIDDEN,)),
            wv=w((HIDDEN, HIDDEN)), bv=zeros((HIDDEN,)),
            wo=w((HIDDEN, HIDDEN)), bo=zeros((HIDDEN,)),
            ln1_g=ones((HIDDEN,)), ln1_b=zeros((HIDDEN,)),
            w1=w((HIDDEN, INTERMEDIATE)), b1=zeros((INTERMEDIATE,)),
            w2=w((INTERMEDIATE, HIDDEN)), b2=zeros((HIDDEN,)),
            ln2_g=ones((HIDDEN,)), ln2_b=zeros((HIDDEN,)),
        ))

    # --- one-time packing, hoisted out of the per-call forward path ---------
    def head_cols(m):      # (H, NH*D) -> (NH, H, D): per-head column slabs
        return jnp.stack([m[:, h * HEAD_DIM:(h + 1) * HEAD_DIM]
                          for h in range(NUM_HEADS)], axis=0)

    def head_bias(b):      # (NH*D,) -> (NH, 1, D)
        return b.reshape(NUM_HEADS, 1, HEAD_DIM)

    wqkv_h = jnp.stack([
        jnp.concatenate([head_cols(lp["wq"]), head_cols(lp["wk"]),
                         head_cols(lp["wv"])], axis=0)
        for lp in layers]).astype(bf)                               # (L,3NH,H,D)
    bqkv_h = jnp.stack([
        jnp.concatenate([head_bias(lp["bq"]), head_bias(lp["bk"]),
                         head_bias(lp["bv"])], axis=0)
        for lp in layers])                                          # (L,3NH,1,D)
    wo_h = jnp.stack([lp["wo"].reshape(NUM_HEADS, HEAD_DIM, HIDDEN)
                      for lp in layers]).astype(bf)                 # (L,NH,D,H)

    stack_row = lambda name, width: jnp.stack(
        [lp[name].reshape(1, width) for lp in layers])              # (L,1,width)

    cls_w_raw = w((HIDDEN, NUM_CLASSES))
    cls_w = jnp.zeros((HIDDEN, CLS_PAD), jnp.float32
                      ).at[:, :NUM_CLASSES].set(cls_w_raw).astype(bf)
    cls_b = zeros((1, CLS_PAD))

    return {
        "word_emb": word_emb,
        "pos_emb": pos_emb,
        "type_row": type_emb[0:1],
        "emb_ln_g": ones((1, HIDDEN)),
        "emb_ln_b": zeros((1, HIDDEN)),
        "wqkv_h": wqkv_h, "bqkv_h": bqkv_h,
        "wo_h": wo_h, "bo": stack_row("bo", HIDDEN),
        "ln1_g": stack_row("ln1_g", HIDDEN), "ln1_b": stack_row("ln1_b", HIDDEN),
        "w1": jnp.stack([lp["w1"] for lp in layers]).astype(bf),
        "b1": stack_row("b1", INTERMEDIATE),
        "w2": jnp.stack([lp["w2"] for lp in layers]).astype(bf),
        "b2": stack_row("b2", HIDDEN),
        "ln2_g": stack_row("ln2_g", HIDDEN), "ln2_b": stack_row("ln2_b", HIDDEN),
        "pool_w": w((HIDDEN, HIDDEN)).astype(bf),
        "pool_b": zeros((1, HIDDEN)),
        "cls_w": cls_w, "cls_b": cls_b,
    }


# -------------------------------- forward pass -------------------------------
def bert_classifier_forward(params, input_ids, attention_mask):
    B, S = input_ids.shape
    ids3 = input_ids.astype(jnp.int32).reshape(B, S, 1)
    msk3 = attention_mask.astype(jnp.float32).reshape(B, 1, S)

    def full_spec(a):   # weight resident in VMEM, same block for every step
        return pl.BlockSpec(a.shape, lambda b, nd=a.ndim: (0,) * nd)

    operands = (
        ids3, msk3,
        params["word_emb"], params["pos_emb"], params["type_row"],
        params["emb_ln_g"], params["emb_ln_b"],
        params["wqkv_h"], params["bqkv_h"],
        params["wo_h"], params["bo"],
        params["ln1_g"], params["ln1_b"],
        params["w1"], params["b1"], params["w2"], params["b2"],
        params["ln2_g"], params["ln2_b"],
        params["pool_w"], params["pool_b"],
        params["cls_w"], params["cls_b"],
    )
    in_specs = [
        pl.BlockSpec((1, S, 1), lambda b: (b, 0, 0)),
        pl.BlockSpec((1, 1, S), lambda b: (b, 0, 0)),
    ] + [full_spec(a) for a in operands[2:]]

    logits = pl.pallas_call(
        _bert_seq_kernel,
        grid=(B,),
        in_specs=in_specs,
        out_specs=pl.BlockSpec((1, 1, CLS_PAD), lambda b: (b, 0, 0)),
        out_shape=jax.ShapeDtypeStruct((B, 1, CLS_PAD), jnp.float32),
        compiler_params=pltpu.CompilerParams(
            dimension_semantics=("parallel",)),   # shards sequences on v7x TCs
    )(*operands)

    # un-pad the lane-dense classifier output
    return logits[:, 0, :NUM_CLASSES]


# ----------------------------------- main ------------------------------------
if __name__ == "__main__":
    key = jax.random.PRNGKey(0)
    k_param, k_ids = jax.random.split(key)

    B, S = 2, 8
    params = init_params(k_param)
    input_ids = jax.random.randint(k_ids, (B, S), 0, VOCAB, dtype=jnp.int32)
    attention_mask = jnp.array(
        [[1, 1, 1, 1, 1, 1, 1, 1],
         [1, 1, 1, 1, 1, 1, 0, 0]], dtype=jnp.float32)

    logits = jax.jit(bert_classifier_forward)(params, input_ids, attention_mask)
    logits = jax.block_until_ready(logits)
    assert logits.shape == (B, NUM_CLASSES)
    assert bool(jnp.all(jnp.isfinite(logits)))
    print("KERNEL_OK")
</pallas_src>

<mosaic_0001>
module attributes {stable_mosaic.version = 11 : i64} {
  func.func @_bert_seq_kernel(%arg0: i32, %arg1: memref<1x8x1xi32, #tpu.memory_space<vmem>>, %arg2: memref<1x1x8xf32, #tpu.memory_space<vmem>>, %arg3: memref<128x32xf32, #tpu.memory_space<vmem>>, %arg4: memref<64x32xf32, #tpu.memory_space<vmem>>, %arg5: memref<1x32xf32, #tpu.memory_space<vmem>>, %arg6: memref<1x32xf32, #tpu.memory_space<vmem>>, %arg7: memref<1x32xf32, #tpu.memory_space<vmem>>, %arg8: memref<2x12x32x8xbf16, #tpu.memory_space<vmem>>, %arg9: memref<2x12x1x8xf32, #tpu.memory_space<vmem>>, %arg10: memref<2x4x8x32xbf16, #tpu.memory_space<vmem>>, %arg11: memref<2x1x32xf32, #tpu.memory_space<vmem>>, %arg12: memref<2x1x32xf32, #tpu.memory_space<vmem>>, %arg13: memref<2x1x32xf32, #tpu.memory_space<vmem>>, %arg14: memref<2x32x64xbf16, #tpu.memory_space<vmem>>, %arg15: memref<2x1x64xf32, #tpu.memory_space<vmem>>, %arg16: memref<2x64x32xbf16, #tpu.memory_space<vmem>>, %arg17: memref<2x1x32xf32, #tpu.memory_space<vmem>>, %arg18: memref<2x1x32xf32, #tpu.memory_space<vmem>>, %arg19: memref<2x1x32xf32, #tpu.memory_space<vmem>>, %arg20: memref<32x32xbf16, #tpu.memory_space<vmem>>, %arg21: memref<1x32xf32, #tpu.memory_space<vmem>>, %arg22: memref<32x128xbf16, #tpu.memory_space<vmem>>, %arg23: memref<1x128xf32, #tpu.memory_space<vmem>>, %arg24: memref<1x1x128xf32, #tpu.memory_space<vmem>>) attributes {dimension_semantics = [#tpu.dimension_semantics<parallel>], iteration_bounds = array<i64: 2>, scalar_prefetch = 0 : i64, scratch_operands = 0 : i64, tpu.core_type = #tpu.core_type<tc>, window_params = [{transform_indices = @transform_0, window_bounds = array<i64: 1, 8, 1>}, {transform_indices = @transform_1, window_bounds = array<i64: 1, 1, 8>}, {pipeline_mode = #tpu.pipeline_mode<synchronous>, transform_indices = @transform_2, window_bounds = array<i64: 128, 32>}, {pipeline_mode = #tpu.pipeline_mode<synchronous>, transform_indices = @transform_3, window_bounds = array<i64: 64, 32>}, {pipeline_mode = #tpu.pipeline_mode<synchronous>, transform_indices = @transform_4, window_bounds = array<i64: 1, 32>}, {pipeline_mode = #tpu.pipeline_mode<synchronous>, transform_indices = @transform_5, window_bounds = array<i64: 1, 32>}, {pipeline_mode = #tpu.pipeline_mode<synchronous>, transform_indices = @transform_6, window_bounds = array<i64: 1, 32>}, {pipeline_mode = #tpu.pipeline_mode<synchronous>, transform_indices = @transform_7, window_bounds = array<i64: 2, 12, 32, 8>}, {pipeline_mode = #tpu.pipeline_mode<synchronous>, transform_indices = @transform_8, window_bounds = array<i64: 2, 12, 1, 8>}, {pipeline_mode = #tpu.pipeline_mode<synchronous>, transform_indices = @transform_9, window_bounds = array<i64: 2, 4, 8, 32>}, {pipeline_mode = #tpu.pipeline_mode<synchronous>, transform_indices = @transform_10, window_bounds = array<i64: 2, 1, 32>}, {pipeline_mode = #tpu.pipeline_mode<synchronous>, transform_indices = @transform_11, window_bounds = array<i64: 2, 1, 32>}, {pipeline_mode = #tpu.pipeline_mode<synchronous>, transform_indices = @transform_12, window_bounds = array<i64: 2, 1, 32>}, {pipeline_mode = #tpu.pipeline_mode<synchronous>, transform_indices = @transform_13, window_bounds = array<i64: 2, 32, 64>}, {pipeline_mode = #tpu.pipeline_mode<synchronous>, transform_indices = @transform_14, window_bounds = array<i64: 2, 1, 64>}, {pipeline_mode = #tpu.pipeline_mode<synchronous>, transform_indices = @transform_15, window_bounds = array<i64: 2, 64, 32>}, {pipeline_mode = #tpu.pipeline_mode<synchronous>, transform_indices = @transform_16, window_bounds = array<i64: 2, 1, 32>}, {pipeline_mode = #tpu.pipeline_mode<synchronous>, transform_indices = @transform_17, window_bounds = array<i64: 2, 1, 32>}, {pipeline_mode = #tpu.pipeline_mode<synchronous>, transform_indices = @transform_18, window_bounds = array<i64: 2, 1, 32>}, {pipeline_mode = #tpu.pipeline_mode<synchronous>, transform_indices = @transform_19, window_bounds = array<i64: 32, 32>}, {pipeline_mode = #tpu.pipeline_mode<synchronous>, transform_indices = @transform_20, window_bounds = array<i64: 1, 32>}, {pipeline_mode = #tpu.pipeline_mode<synchronous>, transform_indices = @transform_21, window_bounds = array<i64: 32, 128>}, {pipeline_mode = #tpu.pipeline_mode<synchronous>, transform_indices = @transform_22, window_bounds = array<i64: 1, 128>}, {transform_indices = @transform_23, window_bounds = array<i64: 1, 1, 128>}]} {
    %c0 = arith.constant 0 : index
    %c0_0 = arith.constant 0 : index
    %c0_1 = arith.constant 0 : index
    %0 = vector.load %arg1[%c0, %c0_0, %c0_1] : memref<1x8x1xi32, #tpu.memory_space<vmem>>, vector<1x8x1xi32>
    %1 = vector.shape_cast %0 : vector<1x8x1xi32> to vector<8x1xi32>
    %2 = tpu.iota {dimensions = array<i32: 1>} : vector<8x128xi32>
    %3 = vector.broadcast %1 : vector<8x1xi32> to vector<8x128xi32>
    %4 = arith.cmpi eq, %2, %3 : vector<8x128xi32>
    %5 = arith.extui %4 : vector<8x128xi1> to vector<8x128xi32>
    %6 = arith.sitofp %5 : vector<8x128xi32> to vector<8x128xf32>
    %c0_2 = arith.constant 0 : index
    %c0_3 = arith.constant 0 : index
    %7 = vector.load %arg3[%c0_2, %c0_3] : memref<128x32xf32, #tpu.memory_space<vmem>>, vector<128x32xf32>
    %cst = arith.constant dense<0.000000e+00> : vector<8x32xf32>
    %8 = tpu.matmul %6, %7, %cst {dimension_numbers = #tpu.dot_dimension_numbers<[1], [0], [0], [1], [0, 0, 1, 1], [], []>} : vector<8x128xf32>, vector<128x32xf32>, vector<8x32xf32> -> vector<8x32xf32>
    %c0_4 = arith.constant 0 : index
    %c0_5 = arith.constant 0 : index
    %9 = vector.load %arg4[%c0_4, %c0_5] : memref<64x32xf32, #tpu.memory_space<vmem>>, vector<8x32xf32>
    %10 = arith.addf %8, %9 : vector<8x32xf32>
    %c0_6 = arith.constant 0 : index
    %c0_7 = arith.constant 0 : index
    %11 = vector.load %arg5[%c0_6, %c0_7] : memref<1x32xf32, #tpu.memory_space<vmem>>, vector<1x32xf32>
    %12 = vector.broadcast %11 : vector<1x32xf32> to vector<8x32xf32>
    %13 = arith.addf %10, %12 : vector<8x32xf32>
    %c0_8 = arith.constant 0 : index
    %c0_9 = arith.constant 0 : index
    %14 = vector.load %arg6[%c0_8, %c0_9] : memref<1x32xf32, #tpu.memory_space<vmem>>, vector<1x32xf32>
    %c0_10 = arith.constant 0 : index
    %c0_11 = arith.constant 0 : index
    %15 = vector.load %arg7[%c0_10, %c0_11] : memref<1x32xf32, #tpu.memory_space<vmem>>, vector<1x32xf32>
    %cst_12 = arith.constant dense<0.000000e+00> : vector<8xf32>
    %16 = vector.multi_reduction <add>, %13, %cst_12 [1] : vector<8x32xf32> to vector<8xf32>
    %17 = vector.shape_cast %16 : vector<8xf32> to vector<8x1xf32>
    %cst_13 = arith.constant 3.200000e+01 : f32
    %18 = vector.broadcast %cst_13 : f32 to vector<8x1xf32>
    %19 = arith.divf %17, %18 : vector<8x1xf32>
    %20 = vector.broadcast %19 : vector<8x1xf32> to vector<8x32xf32>
    %21 = arith.subf %13, %20 : vector<8x32xf32>
    %22 = arith.mulf %21, %21 : vector<8x32xf32>
    %cst_14 = arith.constant dense<0.000000e+00> : vector<8xf32>
    %23 = vector.multi_reduction <add>, %22, %cst_14 [1] : vector<8x32xf32> to vector<8xf32>
    %24 = vector.shape_cast %23 : vector<8xf32> to vector<8x1xf32>
    %cst_15 = arith.constant 3.200000e+01 : f32
    %25 = vector.broadcast %cst_15 : f32 to vector<8x1xf32>
    %26 = arith.divf %24, %25 : vector<8x1xf32>
    %27 = vector.broadcast %19 : vector<8x1xf32> to vector<8x32xf32>
    %28 = arith.subf %13, %27 : vector<8x32xf32>
    %cst_16 = arith.constant 9.99999996E-13 : f32
    %29 = vector.broadcast %cst_16 : f32 to vector<8x1xf32>
    %30 = arith.addf %26, %29 : vector<8x1xf32>
    %31 = math.rsqrt %30 : vector<8x1xf32>
    %32 = vector.broadcast %31 : vector<8x1xf32> to vector<8x32xf32>
    %33 = arith.mulf %28, %32 : vector<8x32xf32>
    %34 = vector.broadcast %14 : vector<1x32xf32> to vector<8x32xf32>
    %35 = arith.mulf %33, %34 : vector<8x32xf32>
    %36 = vector.broadcast %15 : vector<1x32xf32> to vector<8x32xf32>
    %37 = arith.addf %35, %36 : vector<8x32xf32>
    %c0_17 = arith.constant 0 : index
    %c0_18 = arith.constant 0 : index
    %c0_19 = arith.constant 0 : index
    %38 = vector.load %arg2[%c0_17, %c0_18, %c0_19] : memref<1x1x8xf32, #tpu.memory_space<vmem>>, vector<1x1x8xf32>
    %cst_20 = arith.constant 1.000000e+00 : f32
    %39 = vector.broadcast %cst_20 : f32 to vector<1x1x8xf32>
    %40 = arith.subf %39, %38 : vector<1x1x8xf32>
    %cst_21 = arith.constant -1.000000e+04 : f32
    %41 = vector.broadcast %cst_21 : f32 to vector<1x1x8xf32>
    %42 = arith.mulf %40, %41 : vector<1x1x8xf32>
    %43 = arith.truncf %37 : vector<8x32xf32> to vector<8x32xbf16>
    %44 = vector.shape_cast %43 : vector<8x32xbf16> to vector<1x8x32xbf16>
    %45 = vector.shape_cast %44 : vector<1x8x32xbf16> to vector<1x8x32xbf16>
    %46 = vector.broadcast %45 : vector<1x8x32xbf16> to vector<12x8x32xbf16>
    %c0_22 = arith.constant 0 : index
    %c0_23 = arith.constant 0 : index
    %c0_24 = arith.constant 0 : index
    %c0_25 = arith.constant 0 : index
    %47 = vector.load %arg8[%c0_22, %c0_23, %c0_24, %c0_25] : memref<2x12x32x8xbf16, #tpu.memory_space<vmem>>, vector<1x12x32x8xbf16>
    %48 = vector.shape_cast %47 : vector<1x12x32x8xbf16> to vector<12x32x8xbf16>
    "tpu.trace_start"() <{level = 10 : i32, message = "hmd,hde->hme"}> : () -> ()
    %cst_26 = arith.constant dense<0.000000e+00> : vector<12x8x8xf32>
    %49 = tpu.matmul %46, %48, %cst_26 {dimension_numbers = #tpu.dot_dimension_numbers<[2], [1], [1], [2], [0, 0, 0, 1, 1, 2], [0], [0]>} : vector<12x8x32xbf16>, vector<12x32x8xbf16>, vector<12x8x8xf32> -> vector<12x8x8xf32>
    "tpu.trace_stop"() : () -> ()
    %c0_27 = arith.constant 0 : index
    %c0_28 = arith.constant 0 : index
    %c0_29 = arith.constant 0 : index
    %c0_30 = arith.constant 0 : index
    %50 = vector.load %arg9[%c0_27, %c0_28, %c0_29, %c0_30] : memref<2x12x1x8xf32, #tpu.memory_space<vmem>>, vector<1x12x1x8xf32>
    %51 = vector.shape_cast %50 : vector<1x12x1x8xf32> to vector<12x1x8xf32>
    %52 = vector.broadcast %51 : vector<12x1x8xf32> to vector<12x8x8xf32>
    %53 = arith.addf %49, %52 : vector<12x8x8xf32>
    %54 = vector.extract_strided_slice %53 {offsets = [0, 0, 0], sizes = [4, 8, 8], strides = [1, 1, 1]} : vector<12x8x8xf32> to vector<4x8x8xf32>
    %55 = arith.truncf %54 : vector<4x8x8xf32> to vector<4x8x8xbf16>
    %56 = vector.extract_strided_slice %53 {offsets = [4, 0, 0], sizes = [4, 8, 8], strides = [1, 1, 1]} : vector<12x8x8xf32> to vector<4x8x8xf32>
    %57 = arith.truncf %56 : vector<4x8x8xf32> to vector<4x8x8xbf16>
    %58 = vector.extract_strided_slice %53 {offsets = [8, 0, 0], sizes = [4, 8, 8], strides = [1, 1, 1]} : vector<12x8x8xf32> to vector<4x8x8xf32>
    %59 = arith.truncf %58 : vector<4x8x8xf32> to vector<4x8x8xbf16>
    "tpu.trace_start"() <{level = 10 : i32, message = "hmd,hnd->hmn"}> : () -> ()
    %cst_31 = arith.constant dense<0.000000e+00> : vector<4x8x8xf32>
    %60 = tpu.matmul %55, %57, %cst_31 {dimension_numbers = #tpu.dot_dimension_numbers<[2], [2], [1], [1], [0, 0, 0, 1, 1, 1], [0], [0]>} : vector<4x8x8xbf16>, vector<4x8x8xbf16>, vector<4x8x8xf32> -> vector<4x8x8xf32>
    "tpu.trace_stop"() : () -> ()
    %cst_32 = arith.constant 0.353553385 : f32
    %61 = vector.broadcast %cst_32 : f32 to vector<4x8x8xf32>
    %62 = arith.mulf %60, %61 : vector<4x8x8xf32>
    %63 = vector.broadcast %42 : vector<1x1x8xf32> to vector<4x8x8xf32>
    %64 = arith.addf %62, %63 : vector<4x8x8xf32>
    %cst_33 = arith.constant dense<0xFF800000> : vector<4x8xf32>
    %65 = vector.multi_reduction <maximumf>, %64, %cst_33 [2] : vector<4x8x8xf32> to vector<4x8xf32>
    %66 = vector.shape_cast %65 : vector<4x8xf32> to vector<4x8x1xf32>
    %67 = vector.broadcast %66 : vector<4x8x1xf32> to vector<4x8x8xf32>
    %68 = arith.subf %64, %67 : vector<4x8x8xf32>
    %69 = math.exp %68 : vector<4x8x8xf32>
    %cst_34 = arith.constant dense<0.000000e+00> : vector<4x8xf32>
    %70 = vector.multi_reduction <add>, %69, %cst_34 [2] : vector<4x8x8xf32> to vector<4x8xf32>
    %71 = vector.shape_cast %70 : vector<4x8xf32> to vector<4x8x1xf32>
    %72 = vector.broadcast %71 : vector<4x8x1xf32> to vector<4x8x8xf32>
    %73 = arith.divf %69, %72 : vector<4x8x8xf32>
    %74 = arith.truncf %73 : vector<4x8x8xf32> to vector<4x8x8xbf16>
    "tpu.trace_start"() <{level = 10 : i32, message = "hmn,hnd->hmd"}> : () -> ()
    %cst_35 = arith.constant dense<0.000000e+00> : vector<4x8x8xf32>
    %75 = tpu.matmul %74, %59, %cst_35 {dimension_numbers = #tpu.dot_dimension_numbers<[2], [1], [1], [2], [0, 0, 0, 1, 1, 2], [0], [0]>} : vector<4x8x8xbf16>, vector<4x8x8xbf16>, vector<4x8x8xf32> -> vector<4x8x8xf32>
    "tpu.trace_stop"() : () -> ()
    %76 = arith.truncf %75 : vector<4x8x8xf32> to vector<4x8x8xbf16>
    %c0_36 = arith.constant 0 : index
    %c0_37 = arith.constant 0 : index
    %c0_38 = arith.constant 0 : index
    %c0_39 = arith.constant 0 : index
    %77 = vector.load %arg10[%c0_36, %c0_37, %c0_38, %c0_39] : memref<2x4x8x32xbf16, #tpu.memory_space<vmem>>, vector<1x4x8x32xbf16>
    %78 = vector.shape_cast %77 : vector<1x4x8x32xbf16> to vector<4x8x32xbf16>
    "tpu.trace_start"() <{level = 10 : i32, message = "hmd,hdk->hmk"}> : () -> ()
    %cst_40 = arith.constant dense<0.000000e+00> : vector<4x8x32xf32>
    %79 = tpu.matmul %76, %78, %cst_40 {dimension_numbers = #tpu.dot_dimension_numbers<[2], [1], [1], [2], [0, 0, 0, 1, 1, 2], [0], [0]>} : vector<4x8x8xbf16>, vector<4x8x32xbf16>, vector<4x8x32xf32> -> vector<4x8x32xf32>
    "tpu.trace_stop"() : () -> ()
    %cst_41 = arith.constant dense<0.000000e+00> : vector<8x32xf32>
    %80 = vector.multi_reduction <add>, %79, %cst_41 [0] : vector<4x8x32xf32> to vector<8x32xf32>
    %c0_42 = arith.constant 0 : index
    %c0_43 = arith.constant 0 : index
    %c0_44 = arith.constant 0 : index
    %81 = vector.load %arg11[%c0_42, %c0_43, %c0_44] : memref<2x1x32xf32, #tpu.memory_space<vmem>>, vector<1x1x32xf32>
    %82 = vector.shape_cast %81 : vector<1x1x32xf32> to vector<1x32xf32>
    %83 = vector.broadcast %82 : vector<1x32xf32> to vector<8x32xf32>
    %84 = arith.addf %80, %83 : vector<8x32xf32>
    %85 = arith.addf %84, %37 : vector<8x32xf32>
    %c0_45 = arith.constant 0 : index
    %c0_46 = arith.constant 0 : index
    %c0_47 = arith.constant 0 : index
    %86 = vector.load %arg12[%c0_45, %c0_46, %c0_47] : memref<2x1x32xf32, #tpu.memory_space<vmem>>, vector<1x1x32xf32>
    %87 = vector.shape_cast %86 : vector<1x1x32xf32> to vector<1x32xf32>
    %c0_48 = arith.constant 0 : index
    %c0_49 = arith.constant 0 : index
    %c0_50 = arith.constant 0 : index
    %88 = vector.load %arg13[%c0_48, %c0_49, %c0_50] : memref<2x1x32xf32, #tpu.memory_space<vmem>>, vector<1x1x32xf32>
    %89 = vector.shape_cast %88 : vector<1x1x32xf32> to vector<1x32xf32>
    %cst_51 = arith.constant dense<0.000000e+00> : vector<8xf32>
    %90 = vector.multi_reduction <add>, %85, %cst_51 [1] : vector<8x32xf32> to vector<8xf32>
    %91 = vector.shape_cast %90 : vector<8xf32> to vector<8x1xf32>
    %cst_52 = arith.constant 3.200000e+01 : f32
    %92 = vector.broadcast %cst_52 : f32 to vector<8x1xf32>
    %93 = arith.divf %91, %92 : vector<8x1xf32>
    %94 = vector.broadcast %93 : vector<8x1xf32> to vector<8x32xf32>
    %95 = arith.subf %85, %94 : vector<8x32xf32>
    %96 = arith.mulf %95, %95 : vector<8x32xf32>
    %cst_53 = arith.constant dense<0.000000e+00> : vector<8xf32>
    %97 = vector.multi_reduction <add>, %96, %cst_53 [1] : vector<8x32xf32> to vector<8xf32>
    %98 = vector.shape_cast %97 : vector<8xf32> to vector<8x1xf32>
    %cst_54 = arith.constant 3.200000e+01 : f32
    %99 = vector.broadcast %cst_54 : f32 to vector<8x1xf32>
    %100 = arith.divf %98, %99 : vector<8x1xf32>
    %101 = vector.broadcast %93 : vector<8x1xf32> to vector<8x32xf32>
    %102 = arith.subf %85, %101 : vector<8x32xf32>
    %cst_55 = arith.constant 9.99999996E-13 : f32
    %103 = vector.broadcast %cst_55 : f32 to vector<8x1xf32>
    %104 = arith.addf %100, %103 : vector<8x1xf32>
    %105 = math.rsqrt %104 : vector<8x1xf32>
    %106 = vector.broadcast %105 : vector<8x1xf32> to vector<8x32xf32>
    %107 = arith.mulf %102, %106 : vector<8x32xf32>
    %108 = vector.broadcast %87 : vector<1x32xf32> to vector<8x32xf32>
    %109 = arith.mulf %107, %108 : vector<8x32xf32>
    %110 = vector.broadcast %89 : vector<1x32xf32> to vector<8x32xf32>
    %111 = arith.addf %109, %110 : vector<8x32xf32>
    %112 = arith.truncf %111 : vector<8x32xf32> to vector<8x32xbf16>
    %c0_56 = arith.constant 0 : index
    %c0_57 = arith.constant 0 : index
    %c0_58 = arith.constant 0 : index
    %113 = vector.load %arg14[%c0_56, %c0_57, %c0_58] : memref<2x32x64xbf16, #tpu.memory_space<vmem>>, vector<1x32x64xbf16>
    %114 = vector.shape_cast %113 : vector<1x32x64xbf16> to vector<32x64xbf16>
    %cst_59 = arith.constant dense<0.000000e+00> : vector<8x64xf32>
    %115 = tpu.matmul %112, %114, %cst_59 {dimension_numbers = #tpu.dot_dimension_numbers<[1], [0], [0], [1], [0, 0, 1, 1], [], []>} : vector<8x32xbf16>, vector<32x64xbf16>, vector<8x64xf32> -> vector<8x64xf32>
    %c0_60 = arith.constant 0 : index
    %c0_61 = arith.constant 0 : index
    %c0_62 = arith.constant 0 : index
    %116 = vector.load %arg15[%c0_60, %c0_61, %c0_62] : memref<2x1x64xf32, #tpu.memory_space<vmem>>, vector<1x1x64xf32>
    %117 = vector.shape_cast %116 : vector<1x1x64xf32> to vector<1x64xf32>
    %118 = vector.broadcast %117 : vector<1x64xf32> to vector<8x64xf32>
    %119 = arith.addf %115, %118 : vector<8x64xf32>
    %cst_63 = arith.constant 5.000000e-01 : f32
    %120 = vector.broadcast %cst_63 : f32 to vector<8x64xf32>
    %121 = arith.mulf %120, %119 : vector<8x64xf32>
    %cst_64 = arith.constant 4.471500e-02 : f32
    %122 = vector.broadcast %cst_64 : f32 to vector<8x64xf32>
    %123 = arith.mulf %122, %119 : vector<8x64xf32>
    %124 = arith.mulf %123, %119 : vector<8x64xf32>
    %125 = arith.mulf %124, %119 : vector<8x64xf32>
    %126 = arith.addf %119, %125 : vector<8x64xf32>
    %cst_65 = arith.constant 0.797884583 : f32
    %127 = vector.broadcast %cst_65 : f32 to vector<8x64xf32>
    %128 = arith.mulf %127, %126 : vector<8x64xf32>
    %129 = math.tanh %128 : vector<8x64xf32>
    %cst_66 = arith.constant 1.000000e+00 : f32
    %130 = vector.broadcast %cst_66 : f32 to vector<8x64xf32>
    %131 = arith.addf %130, %129 : vector<8x64xf32>
    %132 = arith.mulf %121, %131 : vector<8x64xf32>
    %133 = arith.truncf %132 : vector<8x64xf32> to vector<8x64xbf16>
    %c0_67 = arith.constant 0 : index
    %c0_68 = arith.constant 0 : index
    %c0_69 = arith.constant 0 : index
    %134 = vector.load %arg16[%c0_67, %c0_68, %c0_69] : memref<2x64x32xbf16, #tpu.memory_space<vmem>>, vector<1x64x32xbf16>
    %135 = vector.shape_cast %134 : vector<1x64x32xbf16> to vector<64x32xbf16>
    %cst_70 = arith.constant dense<0.000000e+00> : vector<8x32xf32>
    %136 = tpu.matmul %133, %135, %cst_70 {dimension_numbers = #tpu.dot_dimension_numbers<[1], [0], [0], [1], [0, 0, 1, 1], [], []>} : vector<8x64xbf16>, vector<64x32xbf16>, vector<8x32xf32> -> vector<8x32xf32>
    %c0_71 = arith.constant 0 : index
    %c0_72 = arith.constant 0 : index
    %c0_73 = arith.constant 0 : index
    %137 = vector.load %arg17[%c0_71, %c0_72, %c0_73] : memref<2x1x32xf32, #tpu.memory_space<vmem>>, vector<1x1x32xf32>
    %138 = vector.shape_cast %137 : vector<1x1x32xf32> to vector<1x32xf32>
    %139 = vector.broadcast %138 : vector<1x32xf32> to vector<8x32xf32>
    %140 = arith.addf %136, %139 : vector<8x32xf32>
    %141 = arith.addf %140, %111 : vector<8x32xf32>
    %c0_74 = arith.constant 0 : index
    %c0_75 = arith.constant 0 : index
    %c0_76 = arith.constant 0 : index
    %142 = vector.load %arg18[%c0_74, %c0_75, %c0_76] : memref<2x1x32xf32, #tpu.memory_space<vmem>>, vector<1x1x32xf32>
    %143 = vector.shape_cast %142 : vector<1x1x32xf32> to vector<1x32xf32>
    %c0_77 = arith.constant 0 : index
    %c0_78 = arith.constant 0 : index
    %c0_79 = arith.constant 0 : index
    %144 = vector.load %arg19[%c0_77, %c0_78, %c0_79] : memref<2x1x32xf32, #tpu.memory_space<vmem>>, vector<1x1x32xf32>
    %145 = vector.shape_cast %144 : vector<1x1x32xf32> to vector<1x32xf32>
    %cst_80 = arith.constant dense<0.000000e+00> : vector<8xf32>
    %146 = vector.multi_reduction <add>, %141, %cst_80 [1] : vector<8x32xf32> to vector<8xf32>
    %147 = vector.shape_cast %146 : vector<8xf32> to vector<8x1xf32>
    %cst_81 = arith.constant 3.200000e+01 : f32
    %148 = vector.broadcast %cst_81 : f32 to vector<8x1xf32>
    %149 = arith.divf %147, %148 : vector<8x1xf32>
    %150 = vector.broadcast %149 : vector<8x1xf32> to vector<8x32xf32>
    %151 = arith.subf %141, %150 : vector<8x32xf32>
    %152 = arith.mulf %151, %151 : vector<8x32xf32>
    %cst_82 = arith.constant dense<0.000000e+00> : vector<8xf32>
    %153 = vector.multi_reduction <add>, %152, %cst_82 [1] : vector<8x32xf32> to vector<8xf32>
    %154 = vector.shape_cast %153 : vector<8xf32> to vector<8x1xf32>
    %cst_83 = arith.constant 3.200000e+01 : f32
    %155 = vector.broadcast %cst_83 : f32 to vector<8x1xf32>
    %156 = arith.divf %154, %155 : vector<8x1xf32>
    %157 = vector.broadcast %149 : vector<8x1xf32> to vector<8x32xf32>
    %158 = arith.subf %141, %157 : vector<8x32xf32>
    %cst_84 = arith.constant 9.99999996E-13 : f32
    %159 = vector.broadcast %cst_84 : f32 to vector<8x1xf32>
    %160 = arith.addf %156, %159 : vector<8x1xf32>
    %161 = math.rsqrt %160 : vector<8x1xf32>
    %162 = vector.broadcast %161 : vector<8x1xf32> to vector<8x32xf32>
    %163 = arith.mulf %158, %162 : vector<8x32xf32>
    %164 = vector.broadcast %143 : vector<1x32xf32> to vector<8x32xf32>
    %165 = arith.mulf %163, %164 : vector<8x32xf32>
    %166 = vector.broadcast %145 : vector<1x32xf32> to vector<8x32xf32>
    %167 = arith.addf %165, %166 : vector<8x32xf32>
    %168 = arith.truncf %167 : vector<8x32xf32> to vector<8x32xbf16>
    %169 = vector.shape_cast %168 : vector<8x32xbf16> to vector<1x8x32xbf16>
    %170 = vector.shape_cast %169 : vector<1x8x32xbf16> to vector<1x8x32xbf16>
    %171 = vector.broadcast %170 : vector<1x8x32xbf16> to vector<12x8x32xbf16>
    %c1 = arith.constant 1 : index
    %c0_85 = arith.constant 0 : index
    %c0_86 = arith.constant 0 : index
    %c0_87 = arith.constant 0 : index
    %172 = vector.load %arg8[%c1, %c0_85, %c0_86, %c0_87] : memref<2x12x32x8xbf16, #tpu.memory_space<vmem>>, vector<1x12x32x8xbf16>
    %173 = vector.shape_cast %172 : vector<1x12x32x8xbf16> to vector<12x32x8xbf16>
    "tpu.trace_start"() <{level = 10 : i32, message = "hmd,hde->hme"}> : () -> ()
    %cst_88 = arith.constant dense<0.000000e+00> : vector<12x8x8xf32>
    %174 = tpu.matmul %171, %173, %cst_88 {dimension_numbers = #tpu.dot_dimension_numbers<[2], [1], [1], [2], [0, 0, 0, 1, 1, 2], [0], [0]>} : vector<12x8x32xbf16>, vector<12x32x8xbf16>, vector<12x8x8xf32> -> vector<12x8x8xf32>
    "tpu.trace_stop"() : () -> ()
    %c1_89 = arith.constant 1 : index
    %c0_90 = arith.constant 0 : index
    %c0_91 = arith.constant 0 : index
    %c0_92 = arith.constant 0 : index
    %175 = vector.load %arg9[%c1_89, %c0_90, %c0_91, %c0_92] : memref<2x12x1x8xf32, #tpu.memory_space<vmem>>, vector<1x12x1x8xf32>
    %176 = vector.shape_cast %175 : vector<1x12x1x8xf32> to vector<12x1x8xf32>
    %177 = vector.broadcast %176 : vector<12x1x8xf32> to vector<12x8x8xf32>
    %178 = arith.addf %174, %177 : vector<12x8x8xf32>
    %179 = vector.extract_strided_slice %178 {offsets = [0, 0, 0], sizes = [4, 8, 8], strides = [1, 1, 1]} : vector<12x8x8xf32> to vector<4x8x8xf32>
    %180 = arith.truncf %179 : vector<4x8x8xf32> to vector<4x8x8xbf16>
    %181 = vector.extract_strided_slice %178 {offsets = [4, 0, 0], sizes = [4, 8, 8], strides = [1, 1, 1]} : vector<12x8x8xf32> to vector<4x8x8xf32>
    %182 = arith.truncf %181 : vector<4x8x8xf32> to vector<4x8x8xbf16>
    %183 = vector.extract_strided_slice %178 {offsets = [8, 0, 0], sizes = [4, 8, 8], strides = [1, 1, 1]} : vector<12x8x8xf32> to vector<4x8x8xf32>
    %184 = arith.truncf %183 : vector<4x8x8xf32> to vector<4x8x8xbf16>
    "tpu.trace_start"() <{level = 10 : i32, message = "hmd,hnd->hmn"}> : () -> ()
    %cst_93 = arith.constant dense<0.000000e+00> : vector<4x8x8xf32>
    %185 = tpu.matmul %180, %182, %cst_93 {dimension_numbers = #tpu.dot_dimension_numbers<[2], [2], [1], [1], [0, 0, 0, 1, 1, 1], [0], [0]>} : vector<4x8x8xbf16>, vector<4x8x8xbf16>, vector<4x8x8xf32> -> vector<4x8x8xf32>
    "tpu.trace_stop"() : () -> ()
    %cst_94 = arith.constant 0.353553385 : f32
    %186 = vector.broadcast %cst_94 : f32 to vector<4x8x8xf32>
    %187 = arith.mulf %185, %186 : vector<4x8x8xf32>
    %188 = vector.broadcast %42 : vector<1x1x8xf32> to vector<4x8x8xf32>
    %189 = arith.addf %187, %188 : vector<4x8x8xf32>
    %cst_95 = arith.constant dense<0xFF800000> : vector<4x8xf32>
    %190 = vector.multi_reduction <maximumf>, %189, %cst_95 [2] : vector<4x8x8xf32> to vector<4x8xf32>
    %191 = vector.shape_cast %190 : vector<4x8xf32> to vector<4x8x1xf32>
    %192 = vector.broadcast %191 : vector<4x8x1xf32> to vector<4x8x8xf32>
    %193 = arith.subf %189, %192 : vector<4x8x8xf32>
    %194 = math.exp %193 : vector<4x8x8xf32>
    %cst_96 = arith.constant dense<0.000000e+00> : vector<4x8xf32>
    %195 = vector.multi_reduction <add>, %194, %cst_96 [2] : vector<4x8x8xf32> to vector<4x8xf32>
    %196 = vector.shape_cast %195 : vector<4x8xf32> to vector<4x8x1xf32>
    %197 = vector.broadcast %196 : vector<4x8x1xf32> to vector<4x8x8xf32>
    %198 = arith.divf %194, %197 : vector<4x8x8xf32>
    %199 = arith.truncf %198 : vector<4x8x8xf32> to vector<4x8x8xbf16>
    "tpu.trace_start"() <{level = 10 : i32, message = "hmn,hnd->hmd"}> : () -> ()
    %cst_97 = arith.constant dense<0.000000e+00> : vector<4x8x8xf32>
    %200 = tpu.matmul %199, %184, %cst_97 {dimension_numbers = #tpu.dot_dimension_numbers<[2], [1], [1], [2], [0, 0, 0, 1, 1, 2], [0], [0]>} : vector<4x8x8xbf16>, vector<4x8x8xbf16>, vector<4x8x8xf32> -> vector<4x8x8xf32>
    "tpu.trace_stop"() : () -> ()
    %201 = arith.truncf %200 : vector<4x8x8xf32> to vector<4x8x8xbf16>
    %c1_98 = arith.constant 1 : index
    %c0_99 = arith.constant 0 : index
    %c0_100 = arith.constant 0 : index
    %c0_101 = arith.constant 0 : index
    %202 = vector.load %arg10[%c1_98, %c0_99, %c0_100, %c0_101] : memref<2x4x8x32xbf16, #tpu.memory_space<vmem>>, vector<1x4x8x32xbf16>
    %203 = vector.shape_cast %202 : vector<1x4x8x32xbf16> to vector<4x8x32xbf16>
    "tpu.trace_start"() <{level = 10 : i32, message = "hmd,hdk->hmk"}> : () -> ()
    %cst_102 = arith.constant dense<0.000000e+00> : vector<4x8x32xf32>
    %204 = tpu.matmul %201, %203, %cst_102 {dimension_numbers = #tpu.dot_dimension_numbers<[2], [1], [1], [2], [0, 0, 0, 1, 1, 2], [0], [0]>} : vector<4x8x8xbf16>, vector<4x8x32xbf16>, vector<4x8x32xf32> -> vector<4x8x32xf32>
    "tpu.trace_stop"() : () -> ()
    %cst_103 = arith.constant dense<0.000000e+00> : vector<8x32xf32>
    %205 = vector.multi_reduction <add>, %204, %cst_103 [0] : vector<4x8x32xf32> to vector<8x32xf32>
    %c1_104 = arith.constant 1 : index
    %c0_105 = arith.constant 0 : index
    %c0_106 = arith.constant 0 : index
    %206 = vector.load %arg11[%c1_104, %c0_105, %c0_106] : memref<2x1x32xf32, #tpu.memory_space<vmem>>, vector<1x1x32xf32>
    %207 = vector.shape_cast %206 : vector<1x1x32xf32> to vector<1x32xf32>
    %208 = vector.broadcast %207 : vector<1x32xf32> to vector<8x32xf32>
    %209 = arith.addf %205, %208 : vector<8x32xf32>
    %210 = arith.addf %209, %167 : vector<8x32xf32>
    %c1_107 = arith.constant 1 : index
    %c0_108 = arith.constant 0 : index
    %c0_109 = arith.constant 0 : index
    %211 = vector.load %arg12[%c1_107, %c0_108, %c0_109] : memref<2x1x32xf32, #tpu.memory_space<vmem>>, vector<1x1x32xf32>
    %212 = vector.shape_cast %211 : vector<1x1x32xf32> to vector<1x32xf32>
    %c1_110 = arith.constant 1 : index
    %c0_111 = arith.constant 0 : index
    %c0_112 = arith.constant 0 : index
    %213 = vector.load %arg13[%c1_110, %c0_111, %c0_112] : memref<2x1x32xf32, #tpu.memory_space<vmem>>, vector<1x1x32xf32>
    %214 = vector.shape_cast %213 : vector<1x1x32xf32> to vector<1x32xf32>
    %cst_113 = arith.constant dense<0.000000e+00> : vector<8xf32>
    %215 = vector.multi_reduction <add>, %210, %cst_113 [1] : vector<8x32xf32> to vector<8xf32>
    %216 = vector.shape_cast %215 : vector<8xf32> to vector<8x1xf32>
    %cst_114 = arith.constant 3.200000e+01 : f32
    %217 = vector.broadcast %cst_114 : f32 to vector<8x1xf32>
    %218 = arith.divf %216, %217 : vector<8x1xf32>
    %219 = vector.broadcast %218 : vector<8x1xf32> to vector<8x32xf32>
    %220 = arith.subf %210, %219 : vector<8x32xf32>
    %221 = arith.mulf %220, %220 : vector<8x32xf32>
    %cst_115 = arith.constant dense<0.000000e+00> : vector<8xf32>
    %222 = vector.multi_reduction <add>, %221, %cst_115 [1] : vector<8x32xf32> to vector<8xf32>
    %223 = vector.shape_cast %222 : vector<8xf32> to vector<8x1xf32>
    %cst_116 = arith.constant 3.200000e+01 : f32
    %224 = vector.broadcast %cst_116 : f32 to vector<8x1xf32>
    %225 = arith.divf %223, %224 : vector<8x1xf32>
    %226 = vector.broadcast %218 : vector<8x1xf32> to vector<8x32xf32>
    %227 = arith.subf %210, %226 : vector<8x32xf32>
    %cst_117 = arith.constant 9.99999996E-13 : f32
    %228 = vector.broadcast %cst_117 : f32 to vector<8x1xf32>
    %229 = arith.addf %225, %228 : vector<8x1xf32>
    %230 = math.rsqrt %229 : vector<8x1xf32>
    %231 = vector.broadcast %230 : vector<8x1xf32> to vector<8x32xf32>
    %232 = arith.mulf %227, %231 : vector<8x32xf32>
    %233 = vector.broadcast %212 : vector<1x32xf32> to vector<8x32xf32>
    %234 = arith.mulf %232, %233 : vector<8x32xf32>
    %235 = vector.broadcast %214 : vector<1x32xf32> to vector<8x32xf32>
    %236 = arith.addf %234, %235 : vector<8x32xf32>
    %237 = arith.truncf %236 : vector<8x32xf32> to vector<8x32xbf16>
    %c1_118 = arith.constant 1 : index
    %c0_119 = arith.constant 0 : index
    %c0_120 = arith.constant 0 : index
    %238 = vector.load %arg14[%c1_118, %c0_119, %c0_120] : memref<2x32x64xbf16, #tpu.memory_space<vmem>>, vector<1x32x64xbf16>
    %239 = vector.shape_cast %238 : vector<1x32x64xbf16> to vector<32x64xbf16>
    %cst_121 = arith.constant dense<0.000000e+00> : vector<8x64xf32>
    %240 = tpu.matmul %237, %239, %cst_121 {dimension_numbers = #tpu.dot_dimension_numbers<[1], [0], [0], [1], [0, 0, 1, 1], [], []>} : vector<8x32xbf16>, vector<32x64xbf16>, vector<8x64xf32> -> vector<8x64xf32>
    %c1_122 = arith.constant 1 : index
    %c0_123 = arith.constant 0 : index
    %c0_124 = arith.constant 0 : index
    %241 = vector.load %arg15[%c1_122, %c0_123, %c0_124] : memref<2x1x64xf32, #tpu.memory_space<vmem>>, vector<1x1x64xf32>
    %242 = vector.shape_cast %241 : vector<1x1x64xf32> to vector<1x64xf32>
    %243 = vector.broadcast %242 : vector<1x64xf32> to vector<8x64xf32>
    %244 = arith.addf %240, %243 : vector<8x64xf32>
    %cst_125 = arith.constant 5.000000e-01 : f32
    %245 = vector.broadcast %cst_125 : f32 to vector<8x64xf32>
    %246 = arith.mulf %245, %244 : vector<8x64xf32>
    %cst_126 = arith.constant 4.471500e-02 : f32
    %247 = vector.broadcast %cst_126 : f32 to vector<8x64xf32>
    %248 = arith.mulf %247, %244 : vector<8x64xf32>
    %249 = arith.mulf %248, %244 : vector<8x64xf32>
    %250 = arith.mulf %249, %244 : vector<8x64xf32>
    %251 = arith.addf %244, %250 : vector<8x64xf32>
    %cst_127 = arith.constant 0.797884583 : f32
    %252 = vector.broadcast %cst_127 : f32 to vector<8x64xf32>
    %253 = arith.mulf %252, %251 : vector<8x64xf32>
    %254 = math.tanh %253 : vector<8x64xf32>
    %cst_128 = arith.constant 1.000000e+00 : f32
    %255 = vector.broadcast %cst_128 : f32 to vector<8x64xf32>
    %256 = arith.addf %255, %254 : vector<8x64xf32>
    %257 = arith.mulf %246, %256 : vector<8x64xf32>
    %258 = arith.truncf %257 : vector<8x64xf32> to vector<8x64xbf16>
    %c1_129 = arith.constant 1 : index
    %c0_130 = arith.constant 0 : index
    %c0_131 = arith.constant 0 : index
    %259 = vector.load %arg16[%c1_129, %c0_130, %c0_131] : memref<2x64x32xbf16, #tpu.memory_space<vmem>>, vector<1x64x32xbf16>
    %260 = vector.shape_cast %259 : vector<1x64x32xbf16> to vector<64x32xbf16>
    %cst_132 = arith.constant dense<0.000000e+00> : vector<8x32xf32>
    %261 = tpu.matmul %258, %260, %cst_132 {dimension_numbers = #tpu.dot_dimension_numbers<[1], [0], [0], [1], [0, 0, 1, 1], [], []>} : vector<8x64xbf16>, vector<64x32xbf16>, vector<8x32xf32> -> vector<8x32xf32>
    %c1_133 = arith.constant 1 : index
    %c0_134 = arith.constant 0 : index
    %c0_135 = arith.constant 0 : index
    %262 = vector.load %arg17[%c1_133, %c0_134, %c0_135] : memref<2x1x32xf32, #tpu.memory_space<vmem>>, vector<1x1x32xf32>
    %263 = vector.shape_cast %262 : vector<1x1x32xf32> to vector<1x32xf32>
    %264 = vector.broadcast %263 : vector<1x32xf32> to vector<8x32xf32>
    %265 = arith.addf %261, %264 : vector<8x32xf32>
    %266 = arith.addf %265, %236 : vector<8x32xf32>
    %c1_136 = arith.constant 1 : index
    %c0_137 = arith.constant 0 : index
    %c0_138 = arith.constant 0 : index
    %267 = vector.load %arg18[%c1_136, %c0_137, %c0_138] : memref<2x1x32xf32, #tpu.memory_space<vmem>>, vector<1x1x32xf32>
    %268 = vector.shape_cast %267 : vector<1x1x32xf32> to vector<1x32xf32>
    %c1_139 = arith.constant 1 : index
    %c0_140 = arith.constant 0 : index
    %c0_141 = arith.constant 0 : index
    %269 = vector.load %arg19[%c1_139, %c0_140, %c0_141] : memref<2x1x32xf32, #tpu.memory_space<vmem>>, vector<1x1x32xf32>
    %270 = vector.shape_cast %269 : vector<1x1x32xf32> to vector<1x32xf32>
    %cst_142 = arith.constant dense<0.000000e+00> : vector<8xf32>
    %271 = vector.multi_reduction <add>, %266, %cst_142 [1] : vector<8x32xf32> to vector<8xf32>
    %272 = vector.shape_cast %271 : vector<8xf32> to vector<8x1xf32>
    %cst_143 = arith.constant 3.200000e+01 : f32
    %273 = vector.broadcast %cst_143 : f32 to vector<8x1xf32>
    %274 = arith.divf %272, %273 : vector<8x1xf32>
    %275 = vector.broadcast %274 : vector<8x1xf32> to vector<8x32xf32>
    %276 = arith.subf %266, %275 : vector<8x32xf32>
    %277 = arith.mulf %276, %276 : vector<8x32xf32>
    %cst_144 = arith.constant dense<0.000000e+00> : vector<8xf32>
    %278 = vector.multi_reduction <add>, %277, %cst_144 [1] : vector<8x32xf32> to vector<8xf32>
    %279 = vector.shape_cast %278 : vector<8xf32> to vector<8x1xf32>
    %cst_145 = arith.constant 3.200000e+01 : f32
    %280 = vector.broadcast %cst_145 : f32 to vector<8x1xf32>
    %281 = arith.divf %279, %280 : vector<8x1xf32>
    %282 = vector.broadcast %274 : vector<8x1xf32> to vector<8x32xf32>
    %283 = arith.subf %266, %282 : vector<8x32xf32>
    %cst_146 = arith.constant 9.99999996E-13 : f32
    %284 = vector.broadcast %cst_146 : f32 to vector<8x1xf32>
    %285 = arith.addf %281, %284 : vector<8x1xf32>
    %286 = math.rsqrt %285 : vector<8x1xf32>
    %287 = vector.broadcast %286 : vector<8x1xf32> to vector<8x32xf32>
    %288 = arith.mulf %283, %287 : vector<8x32xf32>
    %289 = vector.broadcast %268 : vector<1x32xf32> to vector<8x32xf32>
    %290 = arith.mulf %288, %289 : vector<8x32xf32>
    %291 = vector.broadcast %270 : vector<1x32xf32> to vector<8x32xf32>
    %292 = arith.addf %290, %291 : vector<8x32xf32>
    %293 = vector.extract_strided_slice %292 {offsets = [0, 0], sizes = [1, 32], strides = [1, 1]} : vector<8x32xf32> to vector<1x32xf32>
    %294 = arith.truncf %293 : vector<1x32xf32> to vector<1x32xbf16>
    %c0_147 = arith.constant 0 : index
    %c0_148 = arith.constant 0 : index
    %295 = vector.load %arg20[%c0_147, %c0_148] : memref<32x32xbf16, #tpu.memory_space<vmem>>, vector<32x32xbf16>
    %cst_149 = arith.constant dense<0.000000e+00> : vector<1x32xf32>
    %296 = tpu.matmul %294, %295, %cst_149 {dimension_numbers = #tpu.dot_dimension_numbers<[1], [0], [0], [1], [0, 0, 1, 1], [], []>} : vector<1x32xbf16>, vector<32x32xbf16>, vector<1x32xf32> -> vector<1x32xf32>
    %c0_150 = arith.constant 0 : index
    %c0_151 = arith.constant 0 : index
    %297 = vector.load %arg21[%c0_150, %c0_151] : memref<1x32xf32, #tpu.memory_space<vmem>>, vector<1x32xf32>
    %298 = arith.addf %296, %297 : vector<1x32xf32>
    %299 = math.tanh %298 : vector<1x32xf32>
    %300 = arith.truncf %299 : vector<1x32xf32> to vector<1x32xbf16>
    %c0_152 = arith.constant 0 : index
    %c0_153 = arith.constant 0 : index
    %301 = vector.load %arg22[%c0_152, %c0_153] : memref<32x128xbf16, #tpu.memory_space<vmem>>, vector<32x128xbf16>
    %cst_154 = arith.constant dense<0.000000e+00> : vector<1x128xf32>
    %302 = tpu.matmul %300, %301, %cst_154 {dimension_numbers = #tpu.dot_dimension_numbers<[1], [0], [0], [1], [0, 0, 1, 1], [], []>} : vector<1x32xbf16>, vector<32x128xbf16>, vector<1x128xf32> -> vector<1x128xf32>
    %c0_155 = arith.constant 0 : index
    %c0_156 = arith.constant 0 : index
    %303 = vector.load %arg23[%c0_155, %c0_156] : memref<1x128xf32, #tpu.memory_space<vmem>>, vector<1x128xf32>
    %304 = arith.addf %302, %303 : vector<1x128xf32>
    %c0_157 = arith.constant 0 : index
    %c0_158 = arith.constant 0 : index
    %c0_159 = arith.constant 0 : index
    %305 = vector.load %arg24[%c0_157, %c0_158, %c0_159] : memref<1x1x128xf32, #tpu.memory_space<vmem>>, vector<1x1x128xf32>
    %306 = vector.shape_cast %305 : vector<1x1x128xf32> to vector<1x128xf32>
    %307 = vector.shape_cast %304 : vector<1x128xf32> to vector<1x1x128xf32>
    tpu.vector_store %arg24[%c0_157, %c0_158, %c0_159], %307 {strides = array<i32>} : memref<1x1x128xf32, #tpu.memory_space<vmem>>, vector<1x1x128xf32>,
    return
  }
  func.func @transform_0(%arg0: i32) -> (i32, i32, i32) {
    %c0_i32 = arith.constant 0 : i32
    %c0_i32_0 = arith.constant 0 : i32
    %c0_i32_1 = arith.constant 0 : i32
    return %arg0, %c0_i32, %c0_i32_0 : i32, i32, i32
  }
  func.func @transform_1(%arg0: i32) -> (i32, i32, i32) {
    %c0_i32 = arith.constant 0 : i32
    %c0_i32_0 = arith.constant 0 : i32
    %c0_i32_1 = arith.constant 0 : i32
    return %arg0, %c0_i32, %c0_i32_0 : i32, i32, i32
  }
  func.func @transform_2(%arg0: i32) -> (i32, i32) {
    %c0_i32 = arith.constant 0 : i32
    %c0_i32_0 = arith.constant 0 : i32
    %c0_i32_1 = arith.constant 0 : i32
    return %c0_i32, %c0_i32_0 : i32, i32
  }
  func.func @transform_3(%arg0: i32) -> (i32, i32) {
    %c0_i32 = arith.constant 0 : i32
    %c0_i32_0 = arith.constant 0 : i32
    %c0_i32_1 = arith.constant 0 : i32
    return %c0_i32, %c0_i32_0 : i32, i32
  }
  func.func @transform_4(%arg0: i32) -> (i32, i32) {
    %c0_i32 = arith.constant 0 : i32
    %c0_i32_0 = arith.constant 0 : i32
    %c0_i32_1 = arith.constant 0 : i32
    return %c0_i32, %c0_i32_0 : i32, i32
  }
  func.func @transform_5(%arg0: i32) -> (i32, i32) {
    %c0_i32 = arith.constant 0 : i32
    %c0_i32_0 = arith.constant 0 : i32
    %c0_i32_1 = arith.constant 0 : i32
    return %c0_i32, %c0_i32_0 : i32, i32
  }
  func.func @transform_6(%arg0: i32) -> (i32, i32) {
    %c0_i32 = arith.constant 0 : i32
    %c0_i32_0 = arith.constant 0 : i32
    %c0_i32_1 = arith.constant 0 : i32
    return %c0_i32, %c0_i32_0 : i32, i32
  }
  func.func @transform_7(%arg0: i32) -> (i32, i32, i32, i32) {
    %c0_i32 = arith.constant 0 : i32
    %c0_i32_0 = arith.constant 0 : i32
    %c0_i32_1 = arith.constant 0 : i32
    %c0_i32_2 = arith.constant 0 : i32
    %c0_i32_3 = arith.constant 0 : i32
    return %c0_i32, %c0_i32_0, %c0_i32_1, %c0_i32_2 : i32, i32, i32, i32
  }
  func.func @transform_8(%arg0: i32) -> (i32, i32, i32, i32) {
    %c0_i32 = arith.constant 0 : i32
    %c0_i32_0 = arith.constant 0 : i32
    %c0_i32_1 = arith.constant 0 : i32
    %c0_i32_2 = arith.constant 0 : i32
    %c0_i32_3 = arith.constant 0 : i32
    return %c0_i32, %c0_i32_0, %c0_i32_1, %c0_i32_2 : i32, i32, i32, i32
  }
  func.func @transform_9(%arg0: i32) -> (i32, i32, i32, i32) {
    %c0_i32 = arith.constant 0 : i32
    %c0_i32_0 = arith.constant 0 : i32
    %c0_i32_1 = arith.constant 0 : i32
    %c0_i32_2 = arith.constant 0 : i32
    %c0_i32_3 = arith.constant 0 : i32
    return %c0_i32, %c0_i32_0, %c0_i32_1, %c0_i32_2 : i32, i32, i32, i32
  }
  func.func @transform_10(%arg0: i32) -> (i32, i32, i32) {
    %c0_i32 = arith.constant 0 : i32
    %c0_i32_0 = arith.constant 0 : i32
    %c0_i32_1 = arith.constant 0 : i32
    %c0_i32_2 = arith.constant 0 : i32
    return %c0_i32, %c0_i32_0, %c0_i32_1 : i32, i32, i32
  }
  func.func @transform_11(%arg0: i32) -> (i32, i32, i32) {
    %c0_i32 = arith.constant 0 : i32
    %c0_i32_0 = arith.constant 0 : i32
    %c0_i32_1 = arith.constant 0 : i32
    %c0_i32_2 = arith.constant 0 : i32
    return %c0_i32, %c0_i32_0, %c0_i32_1 : i32, i32, i32
  }
  func.func @transform_12(%arg0: i32) -> (i32, i32, i32) {
    %c0_i32 = arith.constant 0 : i32
    %c0_i32_0 = arith.constant 0 : i32
    %c0_i32_1 = arith.constant 0 : i32
    %c0_i32_2 = arith.constant 0 : i32
    return %c0_i32, %c0_i32_0, %c0_i32_1 : i32, i32, i32
  }
  func.func @transform_13(%arg0: i32) -> (i32, i32, i32) {
    %c0_i32 = arith.constant 0 : i32
    %c0_i32_0 = arith.constant 0 : i32
    %c0_i32_1 = arith.constant 0 : i32
    %c0_i32_2 = arith.constant 0 : i32
    return %c0_i32, %c0_i32_0, %c0_i32_1 : i32, i32, i32
  }
  func.func @transform_14(%arg0: i32) -> (i32, i32, i32) {
    %c0_i32 = arith.constant 0 : i32
    %c0_i32_0 = arith.constant 0 : i32
    %c0_i32_1 = arith.constant 0 : i32
    %c0_i32_2 = arith.constant 0 : i32
    return %c0_i32, %c0_i32_0, %c0_i32_1 : i32, i32, i32
  }
  func.func @transform_15(%arg0: i32) -> (i32, i32, i32) {
    %c0_i32 = arith.constant 0 : i32
    %c0_i32_0 = arith.constant 0 : i32
    %c0_i32_1 = arith.constant 0 : i32
    %c0_i32_2 = arith.constant 0 : i32
    return %c0_i32, %c0_i32_0, %c0_i32_1 : i32, i32, i32
  }
  func.func @transform_16(%arg0: i32) -> (i32, i32, i32) {
    %c0_i32 = arith.constant 0 : i32
    %c0_i32_0 = arith.constant 0 : i32
    %c0_i32_1 = arith.constant 0 : i32
    %c0_i32_2 = arith.constant 0 : i32
    return %c0_i32, %c0_i32_0, %c0_i32_1 : i32, i32, i32
  }
  func.func @transform_17(%arg0: i32) -> (i32, i32, i32) {
    %c0_i32 = arith.constant 0 : i32
    %c0_i32_0 = arith.constant 0 : i32
    %c0_i32_1 = arith.constant 0 : i32
    %c0_i32_2 = arith.constant 0 : i32
    return %c0_i32, %c0_i32_0, %c0_i32_1 : i32, i32, i32
  }
  func.func @transform_18(%arg0: i32) -> (i32, i32, i32) {
    %c0_i32 = arith.constant 0 : i32
    %c0_i32_0 = arith.constant 0 : i32
    %c0_i32_1 = arith.constant 0 : i32
    %c0_i32_2 = arith.constant 0 : i32
    return %c0_i32, %c0_i32_0, %c0_i32_1 : i32, i32, i32
  }
  func.func @transform_19(%arg0: i32) -> (i32, i32) {
    %c0_i32 = arith.constant 0 : i32
    %c0_i32_0 = arith.constant 0 : i32
    %c0_i32_1 = arith.constant 0 : i32
    return %c0_i32, %c0_i32_0 : i32, i32
  }
  func.func @transform_20(%arg0: i32) -> (i32, i32) {
    %c0_i32 = arith.constant 0 : i32
    %c0_i32_0 = arith.constant 0 : i32
    %c0_i32_1 = arith.constant 0 : i32
    return %c0_i32, %c0_i32_0 : i32, i32
  }
  func.func @transform_21(%arg0: i32) -> (i32, i32) {
    %c0_i32 = arith.constant 0 : i32
    %c0_i32_0 = arith.constant 0 : i32
    %c0_i32_1 = arith.constant 0 : i32
    return %c0_i32, %c0_i32_0 : i32, i32
  }
  func.func @transform_22(%arg0: i32) -> (i32, i32) {
    %c0_i32 = arith.constant 0 : i32
    %c0_i32_0 = arith.constant 0 : i32
    %c0_i32_1 = arith.constant 0 : i32
    return %c0_i32, %c0_i32_0 : i32, i32
  }
  func.func @transform_23(%arg0: i32) -> (i32, i32, i32) {
    %c0_i32 = arith.constant 0 : i32
    %c0_i32_0 = arith.constant 0 : i32
    %c0_i32_1 = arith.constant 0 : i32
    return %arg0, %c0_i32, %c0_i32_0 : i32, i32, i32
  }
}

</mosaic_0001>

<llo_original>
// kernel: bert_classifier_forward.1
$region0: #{bert_classifier_forward.1}
  #allocation0 [shape = 'u32[]', space=smem, size = 0x4, offset = 0x4, fixed_abs, tag = 'smem constant byte address 0x4 - core index']
  #allocation1 [shape = 'u32[72,128]{1,0:T(1,128)}', space=vmem, size = 0x9000, scoped, tag = 'internal scratch']
  %s0 = inlined_call_operand.vmem [shape: s32[2,8,1], index: 0, kind: input, shape index: {}]
  %s1 = inlined_call_operand.vmem [shape: f32[2,1,8], index: 1, kind: input, shape index: {}]
  %s2 = inlined_call_operand.vmem [shape: f32[128,32], index: 2, kind: input, shape index: {}]
  %s3 = inlined_call_operand.vmem [shape: f32[64,32], index: 3, kind: input, shape index: {}]
  %s4 = inlined_call_operand.vmem [shape: f32[1,32], index: 4, kind: input, shape index: {}]
  %s5 = inlined_call_operand.vmem [shape: f32[1,32], index: 5, kind: input, shape index: {}]
  %s6 = inlined_call_operand.vmem [shape: f32[1,32], index: 6, kind: input, shape index: {}]
  %s7 = inlined_call_operand.vmem [shape: bf16[2,12,32,8], index: 7, kind: input, shape index: {}]
  %s8 = inlined_call_operand.vmem [shape: f32[2,12,1,8], index: 8, kind: input, shape index: {}]
  %s9 = inlined_call_operand.vmem [shape: bf16[2,4,8,32], index: 9, kind: input, shape index: {}]
  %s10 = inlined_call_operand.vmem [shape: f32[2,1,32], index: 10, kind: input, shape index: {}]
  %s11 = inlined_call_operand.vmem [shape: f32[2,1,32], index: 11, kind: input, shape index: {}]
  %s12 = inlined_call_operand.vmem [shape: f32[2,1,32], index: 12, kind: input, shape index: {}]
  %s13 = inlined_call_operand.vmem [shape: bf16[2,32,64], index: 13, kind: input, shape index: {}]
  %s14 = inlined_call_operand.vmem [shape: f32[2,1,64], index: 14, kind: input, shape index: {}]
  %s15 = inlined_call_operand.vmem [shape: bf16[2,64,32], index: 15, kind: input, shape index: {}]
  %s16 = inlined_call_operand.vmem [shape: f32[2,1,32], index: 16, kind: input, shape index: {}]
  %s17 = inlined_call_operand.vmem [shape: f32[2,1,32], index: 17, kind: input, shape index: {}]
  %s18 = inlined_call_operand.vmem [shape: f32[2,1,32], index: 18, kind: input, shape index: {}]
  %s19 = inlined_call_operand.vmem [shape: bf16[32,32], index: 19, kind: input, shape index: {}]
  %s20 = inlined_call_operand.vmem [shape: f32[1,32], index: 20, kind: input, shape index: {}]
  %s21 = inlined_call_operand.vmem [shape: bf16[32,128], index: 21, kind: input, shape index: {}]
  %s22 = inlined_call_operand.vmem [shape: f32[1,128], index: 22, kind: input, shape index: {}]
  %s23 = inlined_call_operand.hbm [shape: f32[2,1,128], index: 23, kind: output, shape index: {}]
  %s24 = sld [smem:[#allocation0]]
  $region125: #{bert_classifier_forward.1} parent=0
    _
  %s26 = ssub.s32 1, %s24
  %s27 = scalar_select 0, %s26, %s24
  $region1: #{bert_classifier_forward.1} parent=0
    #allocation2 [shape = 'u8[1024]{0}', space=vmem, size = 0x400, scoped, tag = 'output window, operand 0']
    #allocation3 [shape = 's32[2]{0}', space=sflag, size = 0x8, scoped, tag = 'scoped memory for bert_classifier_forward.1']
    %28 = vsyncpa [#allocation3], 0
    %s29 = scalar_lea.sflag [#allocation3], 1
    %30 = vsyncpa %s29, 0
    loop: start=0, step=1, limit=4
    $region2: #{bert_classifier_forward.1} parent=1 // loop_pre_header
      _
    $region3: #{bert_classifier_forward.1} parent=1 // loop_header
      %s32 = sphi 0, %s36
      %p33 = scmp.ge.s32.totalorder %s32, 4
      %s42 = sphi 0, %s44
      %s45 = sphi 0, %s42
      %s46 = sphi 0, %s45
      %s62 = sphi 0, %s46
      %s68 = sphi 0, %s70
      %s71 = sphi 0, %s68
      %s72 = sphi 0, %s71
      %s88 = sphi 0, %s72
      %s92 = sphi 0, %s92
      %s94 = sphi 0, %s92
      %s95 = sphi 0, %s94
      %s109 = sphi 0, %s95
      %s113 = sphi 0, %s113
      %s115 = sphi 0, %s113
      %s116 = sphi 0, %s115
      %s130 = sphi 0, %s116
      %s134 = sphi 0, %s134
      %s136 = sphi 0, %s134
      %s137 = sphi 0, %s136
      %s151 = sphi 0, %s137
      %s155 = sphi 0, %s155
      %s157 = sphi 0, %s155
      %s158 = sphi 0, %s157
      %s172 = sphi 0, %s158
      %s176 = sphi 0, %s176
      %s178 = sphi 0, %s176
      %s179 = sphi 0, %s178
      %s193 = sphi 0, %s179
      %s197 = sphi 0, %s197
      %s199 = sphi 0, %s197
      %s200 = sphi 0, %s199
      %s214 = sphi 0, %s200
      %s218 = sphi 0, %s218
      %s220 = sphi 0, %s218
      %s221 = sphi 0, %s220
      %s235 = sphi 0, %s221
      %s239 = sphi 0, %s239
      %s241 = sphi 0, %s239
      %s242 = sphi 0, %s241
      %s256 = sphi 0, %s242
      %s260 = sphi 0, %s260
      %s262 = sphi 0, %s260
      %s263 = sphi 0, %s262
      %s277 = sphi 0, %s263
      %s281 = sphi 0, %s281
      %s283 = sphi 0, %s281
      %s284 = sphi 0, %s283
      %s298 = sphi 0, %s284
      %s302 = sphi 0, %s302
      %s304 = sphi 0, %s302
      %s305 = sphi 0, %s304
      %s319 = sphi 0, %s305
      %s323 = sphi 0, %s323
      %s325 = sphi 0, %s323
      %s326 = sphi 0, %s325
      %s340 = sphi 0, %s326
      %s344 = sphi 0, %s344
      %s346 = sphi 0, %s344
      %s347 = sphi 0, %s346
      %s361 = sphi 0, %s347
      %s365 = sphi 0, %s365
      %s367 = sphi 0, %s365
      %s368 = sphi 0, %s367
      %s382 = sphi 0, %s368
      %s386 = sphi 0, %s386
      %s388 = sphi 0, %s386
      %s389 = sphi 0, %s388
      %s403 = sphi 0, %s389
      %s407 = sphi 0, %s407
      %s409 = sphi 0, %s407
      %s410 = sphi 0, %s409
      %s424 = sphi 0, %s410
      %s428 = sphi 0, %s428
      %s430 = sphi 0, %s428
      %s431 = sphi 0, %s430
      %s445 = sphi 0, %s431
      %s449 = sphi 0, %s449
      %s451 = sphi 0, %s449
      %s452 = sphi 0, %s451
      %s466 = sphi 0, %s452
      %s470 = sphi 0, %s470
      %s472 = sphi 0, %s470
      %s473 = sphi 0, %s472
      %s487 = sphi 0, %s473
      %s491 = sphi 0, %s491
      %s493 = sphi 0, %s491
      %s494 = sphi 0, %s493
      %s508 = sphi 0, %s494
      %s512 = sphi 0, %s512
      %s514 = sphi 0, %s512
      %s515 = sphi 0, %s514
      %s529 = sphi 0, %s515
      %s535 = sphi 0, %s537
      %s538 = sphi 0, %s535
      %s539 = sphi 0, %s538
      %s555 = sphi 0, %s539
    $region4: #{bert_classifier_forward.1} parent=1 // loop_header_branch
      %35 = sbr.rel (%p33) target = $region8
    $region5: #{bert_classifier_forward.1} parent=1 // loop_body
      %s37 = ssub.s32 %s32, 1
      %s38 = ssub.s32 %s32, 2
      %s39 = sadd.s32 %s32, 1
      %s40 = ssub.s32 %s32, %s39
      %p41 = scmp.eq.s32.totalorder %s40, 0
      %s43 = sadd.s32 %s42, 1
      %s44 = scalar_select %p41, %s42, %s43
      %p47 = pneg %p41
      %p48 = scmp.eq.s32.totalorder %s32, 1
      %p49 = por %p47, %p48
      %p50 = scmp.ne.s32.totalorder %s42, %s45
      %p51 = scmp.eq.s32.totalorder %s32, 0
      %p52 = por %p50, %p51
      %p53 = scmp.ne.s32.totalorder %s42, %s45
      %p54 = scmp.eq.s32.totalorder %s37, 1
      %p55 = por %p53, %p54
      %p56 = scmp.ne.s32.totalorder %s45, %s46
      %p57 = scmp.eq.s32.totalorder %s37, 0
      %p58 = por %p56, %p57
      %p59 = scmp.ne.s32.totalorder %s45, %s46
      %p60 = scmp.eq.s32.totalorder %s38, 1
      %p61 = por %p59, %p60
      %p63 = scmp.ne.s32.totalorder %s46, %s62
      %p64 = scmp.eq.s32.totalorder %s38, 0
      %p65 = por %p63, %p64
      %s66 = ssub.s32 %s32, %s39
      %p67 = scmp.eq.s32.totalorder %s66, 0
      %s69 = sadd.s32 %s68, 1
      %s70 = scalar_select %p67, %s68, %s69
      %p73 = pneg %p67
      %p74 = scmp.eq.s32.totalorder %s32, 1
      %p75 = por %p73, %p74
      %p76 = scmp.ne.s32.totalorder %s68, %s71
      %p77 = scmp.eq.s32.totalorder %s32, 0
      %p78 = por %p76, %p77
      %p79 = scmp.ne.s32.totalorder %s68, %s71
      %p80 = scmp.eq.s32.totalorder %s37, 1
      %p81 = por %p79, %p80
      %p82 = scmp.ne.s32.totalorder %s71, %s72
      %p83 = scmp.eq.s32.totalorder %s37, 0
      %p84 = por %p82, %p83
      %p85 = scmp.ne.s32.totalorder %s71, %s72
      %p86 = scmp.eq.s32.totalorder %s38, 1
      %p87 = por %p85, %p86
      %p89 = scmp.ne.s32.totalorder %s72, %s88
      %p90 = scmp.eq.s32.totalorder %s38, 0
      %p91 = por %p89, %p90
      %s93 = sadd.s32 %s92, 1
      %p96 = scmp.eq.s32.totalorder %s32, 1
      %p97 = scmp.ne.s32.totalorder %s92, %s94
      %p98 = scmp.eq.s32.totalorder %s32, 0
      %p99 = por %p97, %p98
      %p100 = scmp.ne.s32.totalorder %s92, %s94
      %p101 = scmp.eq.s32.totalorder %s37, 1
      %p102 = por %p100, %p101
      %p103 = scmp.ne.s32.totalorder %s94, %s95
      %p104 = scmp.eq.s32.totalorder %s37, 0
      %p105 = por %p103, %p104
      %p106 = scmp.ne.s32.totalorder %s94, %s95
      %p107 = scmp.eq.s32.totalorder %s38, 1
      %p108 = por %p106, %p107
      %p110 = scmp.ne.s32.totalorder %s95, %s109
      %p111 = scmp.eq.s32.totalorder %s38, 0
      %p112 = por %p110, %p111
      %s114 = sadd.s32 %s113, 1
      %p117 = scmp.eq.s32.totalorder %s32, 1
      %p118 = scmp.ne.s32.totalorder %s113, %s115
      %p119 = scmp.eq.s32.totalorder %s32, 0
      %p120 = por %p118, %p119
      %p121 = scmp.ne.s32.totalorder %s113, %s115
      %p122 = scmp.eq.s32.totalorder %s37, 1
      %p123 = por %p121, %p122
      %p124 = scmp.ne.s32.totalorder %s115, %s116
      %p125 = scmp.eq.s32.totalorder %s37, 0
      %p126 = por %p124, %p125
      %p127 = scmp.ne.s32.totalorder %s115, %s116
      %p128 = scmp.eq.s32.totalorder %s38, 1
      %p129 = por %p127, %p128
      %p131 = scmp.ne.s32.totalorder %s116, %s130
      %p132 = scmp.eq.s32.totalorder %s38, 0
      %p133 = por %p131, %p132
      %s135 = sadd.s32 %s134, 1
      %p138 = scmp.eq.s32.totalorder %s32, 1
      %p139 = scmp.ne.s32.totalorder %s134, %s136
      %p140 = scmp.eq.s32.totalorder %s32, 0
      %p141 = por %p139, %p140
      %p142 = scmp.ne.s32.totalorder %s134, %s136
      %p143 = scmp.eq.s32.totalorder %s37, 1
      %p144 = por %p142, %p143
      %p145 = scmp.ne.s32.totalorder %s136, %s137
      %p146 = scmp.eq.s32.totalorder %s37, 0
      %p147 = por %p145, %p146
      %p148 = scmp.ne.s32.totalorder %s136, %s137
      %p149 = scmp.eq.s32.totalorder %s38, 1
      %p150 = por %p148, %p149
      %p152 = scmp.ne.s32.totalorder %s137, %s151
      %p153 = scmp.eq.s32.totalorder %s38, 0
      %p154 = por %p152, %p153
      %s156 = sadd.s32 %s155, 1
      %p159 = scmp.eq.s32.totalorder %s32, 1
      %p160 = scmp.ne.s32.totalorder %s155, %s157
      %p161 = scmp.eq.s32.totalorder %s32, 0
      %p162 = por %p160, %p161
      %p163 = scmp.ne.s32.totalorder %s155, %s157
      %p164 = scmp.eq.s32.totalorder %s37, 1
      %p165 = por %p163, %p164
      %p166 = scmp.ne.s32.totalorder %s157, %s158
      %p167 = scmp.eq.s32.totalorder %s37, 0
      %p168 = por %p166, %p167
      %p169 = scmp.ne.s32.totalorder %s157, %s158
      %p170 = scmp.eq.s32.totalorder %s38, 1
      %p171 = por %p169, %p170
      %p173 = scmp.ne.s32.totalorder %s158, %s172
      %p174 = scmp.eq.s32.totalorder %s38, 0
      %p175 = por %p173, %p174
      %s177 = sadd.s32 %s176, 1
      %p180 = scmp.eq.s32.totalorder %s32, 1
      %p181 = scmp.ne.s32.totalorder %s176, %s178
      %p182 = scmp.eq.s32.totalorder %s32, 0
      %p183 = por %p181, %p182
      %p184 = scmp.ne.s32.totalorder %s176, %s178
      %p185 = scmp.eq.s32.totalorder %s37, 1
      %p186 = por %p184, %p185
      %p187 = scmp.ne.s32.totalorder %s178, %s179
      %p188 = scmp.eq.s32.totalorder %s37, 0
      %p189 = por %p187, %p188
      %p190 = scmp.ne.s32.totalorder %s178, %s179
      %p191 = scmp.eq.s32.totalorder %s38, 1
      %p192 = por %p190, %p191
      %p194 = scmp.ne.s32.totalorder %s179, %s193
      %p195 = scmp.eq.s32.totalorder %s38, 0
      %p196 = por %p194, %p195
      %s198 = sadd.s32 %s197, 1
      %p201 = scmp.eq.s32.totalorder %s32, 1
      %p202 = scmp.ne.s32.totalorder %s197, %s199
      %p203 = scmp.eq.s32.totalorder %s32, 0
      %p204 = por %p202, %p203
      %p205 = scmp.ne.s32.totalorder %s197, %s199
      %p206 = scmp.eq.s32.totalorder %s37, 1
      %p207 = por %p205, %p206
      %p208 = scmp.ne.s32.totalorder %s199, %s200
      %p209 = scmp.eq.s32.totalorder %s37, 0
      %p210 = por %p208, %p209
      %p211 = scmp.ne.s32.totalorder %s199, %s200
      %p212 = scmp.eq.s32.totalorder %s38, 1
      %p213 = por %p211, %p212
      %p215 = scmp.ne.s32.totalorder %s200, %s214
      %p216 = scmp.eq.s32.totalorder %s38, 0
      %p217 = por %p215, %p216
      %s219 = sadd.s32 %s218, 1
      %p222 = scmp.eq.s32.totalorder %s32, 1
      %p223 = scmp.ne.s32.totalorder %s218, %s220
      %p224 = scmp.eq.s32.totalorder %s32, 0
      %p225 = por %p223, %p224
      %p226 = scmp.ne.s32.totalorder %s218, %s220
      %p227 = scmp.eq.s32.totalorder %s37, 1
      %p228 = por %p226, %p227
      %p229 = scmp.ne.s32.totalorder %s220, %s221
      %p230 = scmp.eq.s32.totalorder %s37, 0
      %p231 = por %p229, %p230
      %p232 = scmp.ne.s32.totalorder %s220, %s221
      %p233 = scmp.eq.s32.totalorder %s38, 1
      %p234 = por %p232, %p233
      %p236 = scmp.ne.s32.totalorder %s221, %s235
      %p237 = scmp.eq.s32.totalorder %s38, 0
      %p238 = por %p236, %p237
      %s240 = sadd.s32 %s239, 1
      %p243 = scmp.eq.s32.totalorder %s32, 1
      %p244 = scmp.ne.s32.totalorder %s239, %s241
      %p245 = scmp.eq.s32.totalorder %s32, 0
      %p246 = por %p244, %p245
      %p247 = scmp.ne.s32.totalorder %s239, %s241
      %p248 = scmp.eq.s32.totalorder %s37, 1
      %p249 = por %p247, %p248
      %p250 = scmp.ne.s32.totalorder %s241, %s242
      %p251 = scmp.eq.s32.totalorder %s37, 0
      %p252 = por %p250, %p251
      %p253 = scmp.ne.s32.totalorder %s241, %s242
      %p254 = scmp.eq.s32.totalorder %s38, 1
      %p255 = por %p253, %p254
      %p257 = scmp.ne.s32.totalorder %s242, %s256
      %p258 = scmp.eq.s32.totalorder %s38, 0
      %p259 = por %p257, %p258
      %s261 = sadd.s32 %s260, 1
      %p264 = scmp.eq.s32.totalorder %s32, 1
      %p265 = scmp.ne.s32.totalorder %s260, %s262
      %p266 = scmp.eq.s32.totalorder %s32, 0
      %p267 = por %p265, %p266
      %p268 = scmp.ne.s32.totalorder %s260, %s262
      %p269 = scmp.eq.s32.totalorder %s37, 1
      %p270 = por %p268, %p269
      %p271 = scmp.ne.s32.totalorder %s262, %s263
      %p272 = scmp.eq.s32.totalorder %s37, 0
      %p273 = por %p271, %p272
      %p274 = scmp.ne.s32.totalorder %s262, %s263
      %p275 = scmp.eq.s32.totalorder %s38, 1
      %p276 = por %p274, %p275
      %p278 = scmp.ne.s32.totalorder %s263, %s277
      %p279 = scmp.eq.s32.totalorder %s38, 0
      %p280 = por %p278, %p279
      %s282 = sadd.s32 %s281, 1
      %p285 = scmp.eq.s32.totalorder %s32, 1
      %p286 = scmp.ne.s32.totalorder %s281, %s283
      %p287 = scmp.eq.s32.totalorder %s32, 0
      %p288 = por %p286, %p287
      %p289 = scmp.ne.s32.totalorder %s281, %s283
      %p290 = scmp.eq.s32.totalorder %s37, 1
      %p291 = por %p289, %p290
      %p292 = scmp.ne.s32.totalorder %s283, %s284
      %p293 = scmp.eq.s32.totalorder %s37, 0
      %p294 = por %p292, %p293
      %p295 = scmp.ne.s32.totalorder %s283, %s284
      %p296 = scmp.eq.s32.totalorder %s38, 1
      %p297 = por %p295, %p296
      %p299 = scmp.ne.s32.totalorder %s284, %s298
      %p300 = scmp.eq.s32.totalorder %s38, 0
      %p301 = por %p299, %p300
      %s303 = sadd.s32 %s302, 1
      %p306 = scmp.eq.s32.totalorder %s32, 1
      %p307 = scmp.ne.s32.totalorder %s302, %s304
      %p308 = scmp.eq.s32.totalorder %s32, 0
      %p309 = por %p307, %p308
      %p310 = scmp.ne.s32.totalorder %s302, %s304
      %p311 = scmp.eq.s32.totalorder %s37, 1
      %p312 = por %p310, %p311
      %p313 = scmp.ne.s32.totalorder %s304, %s305
      %p314 = scmp.eq.s32.totalorder %s37, 0
      %p315 = por %p313, %p314
      %p316 = scmp.ne.s32.totalorder %s304, %s305
      %p317 = scmp.eq.s32.totalorder %s38, 1
      %p318 = por %p316, %p317
      %p320 = scmp.ne.s32.totalorder %s305, %s319
      %p321 = scmp.eq.s32.totalorder %s38, 0
      %p322 = por %p320, %p321
      %s324 = sadd.s32 %s323, 1
      %p327 = scmp.eq.s32.totalorder %s32, 1
      %p328 = scmp.ne.s32.totalorder %s323, %s325
      %p329 = scmp.eq.s32.totalorder %s32, 0
      %p330 = por %p328, %p329
      %p331 = scmp.ne.s32.totalorder %s323, %s325
      %p332 = scmp.eq.s32.totalorder %s37, 1
      %p333 = por %p331, %p332
      %p334 = scmp.ne.s32.totalorder %s325, %s326
      %p335 = scmp.eq.s32.totalorder %s37, 0
      %p336 = por %p334, %p335
      %p337 = scmp.ne.s32.totalorder %s325, %s326
      %p338 = scmp.eq.s32.totalorder %s38, 1
      %p339 = por %p337, %p338
      %p341 = scmp.ne.s32.totalorder %s326, %s340
      %p342 = scmp.eq.s32.totalorder %s38, 0
      %p343 = por %p341, %p342
      %s345 = sadd.s32 %s344, 1
      %p348 = scmp.eq.s32.totalorder %s32, 1
      %p349 = scmp.ne.s32.totalorder %s344, %s346
      %p350 = scmp.eq.s32.totalorder %s32, 0
      %p351 = por %p349, %p350
      %p352 = scmp.ne.s32.totalorder %s344, %s346
      %p353 = scmp.eq.s32.totalorder %s37, 1
      %p354 = por %p352, %p353
      %p355 = scmp.ne.s32.totalorder %s346, %s347
      %p356 = scmp.eq.s32.totalorder %s37, 0
      %p357 = por %p355, %p356
      %p358 = scmp.ne.s32.totalorder %s346, %s347
      %p359 = scmp.eq.s32.totalorder %s38, 1
      %p360 = por %p358, %p359
      %p362 = scmp.ne.s32.totalorder %s347, %s361
      %p363 = scmp.eq.s32.totalorder %s38, 0
      %p364 = por %p362, %p363
      %s366 = sadd.s32 %s365, 1
      %p369 = scmp.eq.s32.totalorder %s32, 1
      %p370 = scmp.ne.s32.totalorder %s365, %s367
      %p371 = scmp.eq.s32.totalorder %s32, 0
      %p372 = por %p370, %p371
      %p373 = scmp.ne.s32.totalorder %s365, %s367
      %p374 = scmp.eq.s32.totalorder %s37, 1
      %p375 = por %p373, %p374
      %p376 = scmp.ne.s32.totalorder %s367, %s368
      %p377 = scmp.eq.s32.totalorder %s37, 0
      %p378 = por %p376, %p377
      %p379 = scmp.ne.s32.totalorder %s367, %s368
      %p380 = scmp.eq.s32.totalorder %s38, 1
      %p381 = por %p379, %p380
      %p383 = scmp.ne.s32.totalorder %s368, %s382
      %p384 = scmp.eq.s32.totalorder %s38, 0
      %p385 = por %p383, %p384
      %s387 = sadd.s32 %s386, 1
      %p390 = scmp.eq.s32.totalorder %s32, 1
      %p391 = scmp.ne.s32.totalorder %s386, %s388
      %p392 = scmp.eq.s32.totalorder %s32, 0
      %p393 = por %p391, %p392
      %p394 = scmp.ne.s32.totalorder %s386, %s388
      %p395 = scmp.eq.s32.totalorder %s37, 1
      %p396 = por %p394, %p395
      %p397 = scmp.ne.s32.totalorder %s388, %s389
      %p398 = scmp.eq.s32.totalorder %s37, 0
      %p399 = por %p397, %p398
      %p400 = scmp.ne.s32.totalorder %s388, %s389
      %p401 = scmp.eq.s32.totalorder %s38, 1
      %p402 = por %p400, %p401
      %p404 = scmp.ne.s32.totalorder %s389, %s403
      %p405 = scmp.eq.s32.totalorder %s38, 0
      %p406 = por %p404, %p405
      %s408 = sadd.s32 %s407, 1
      %p411 = scmp.eq.s32.totalorder %s32, 1
      %p412 = scmp.ne.s32.totalorder %s407, %s409
      %p413 = scmp.eq.s32.totalorder %s32, 0
      %p414 = por %p412, %p413
      %p415 = scmp.ne.s32.totalorder %s407, %s409
      %p416 = scmp.eq.s32.totalorder %s37, 1
      %p417 = por %p415, %p416
      %p418 = scmp.ne.s32.totalorder %s409, %s410
      %p419 = scmp.eq.s32.totalorder %s37, 0
      %p420 = por %p418, %p419
      %p421 = scmp.ne.s32.totalorder %s409, %s410
      %p422 = scmp.eq.s32.totalorder %s38, 1
      %p423 = por %p421, %p422
      %p425 = scmp.ne.s32.totalorder %s410, %s424
      %p426 = scmp.eq.s32.totalorder %s38, 0
      %p427 = por %p425, %p426
      %s429 = sadd.s32 %s428, 1
      %p432 = scmp.eq.s32.totalorder %s32, 1
      %p433 = scmp.ne.s32.totalorder %s428, %s430
      %p434 = scmp.eq.s32.totalorder %s32, 0
      %p435 = por %p433, %p434
      %p436 = scmp.ne.s32.totalorder %s428, %s430
      %p437 = scmp.eq.s32.totalorder %s37, 1
      %p438 = por %p436, %p437
      %p439 = scmp.ne.s32.totalorder %s430, %s431
      %p440 = scmp.eq.s32.totalorder %s37, 0
      %p441 = por %p439, %p440
      %p442 = scmp.ne.s32.totalorder %s430, %s431
      %p443 = scmp.eq.s32.totalorder %s38, 1
      %p444 = por %p442, %p443
      %p446 = scmp.ne.s32.totalorder %s431, %s445
      %p447 = scmp.eq.s32.totalorder %s38, 0
      %p448 = por %p446, %p447
      %s450 = sadd.s32 %s449, 1
      %p453 = scmp.eq.s32.totalorder %s32, 1
      %p454 = scmp.ne.s32.totalorder %s449, %s451
      %p455 = scmp.eq.s32.totalorder %s32, 0
      %p456 = por %p454, %p455
      %p457 = scmp.ne.s32.totalorder %s449, %s451
      %p458 = scmp.eq.s32.totalorder %s37, 1
      %p459 = por %p457, %p458
      %p460 = scmp.ne.s32.totalorder %s451, %s452
      %p461 = scmp.eq.s32.totalorder %s37, 0
      %p462 = por %p460, %p461
      %p463 = scmp.ne.s32.totalorder %s451, %s452
      %p464 = scmp.eq.s32.totalorder %s38, 1
      %p465 = por %p463, %p464
      %p467 = scmp.ne.s32.totalorder %s452, %s466
      %p468 = scmp.eq.s32.totalorder %s38, 0
      %p469 = por %p467, %p468
      %s471 = sadd.s32 %s470, 1
      %p474 = scmp.eq.s32.totalorder %s32, 1
      %p475 = scmp.ne.s32.totalorder %s470, %s472
      %p476 = scmp.eq.s32.totalorder %s32, 0
      %p477 = por %p475, %p476
      %p478 = scmp.ne.s32.totalorder %s470, %s472
      %p479 = scmp.eq.s32.totalorder %s37, 1
      %p480 = por %p478, %p479
      %p481 = scmp.ne.s32.totalorder %s472, %s473
      %p482 = scmp.eq.s32.totalorder %s37, 0
      %p483 = por %p481, %p482
      %p484 = scmp.ne.s32.totalorder %s472, %s473
      %p485 = scmp.eq.s32.totalorder %s38, 1
      %p486 = por %p484, %p485
      %p488 = scmp.ne.s32.totalorder %s473, %s487
      %p489 = scmp.eq.s32.totalorder %s38, 0
      %p490 = por %p488, %p489
      %s492 = sadd.s32 %s491, 1
      %p495 = scmp.eq.s32.totalorder %s32, 1
      %p496 = scmp.ne.s32.totalorder %s491, %s493
      %p497 = scmp.eq.s32.totalorder %s32, 0
      %p498 = por %p496, %p497
      %p499 = scmp.ne.s32.totalorder %s491, %s493
      %p500 = scmp.eq.s32.totalorder %s37, 1
      %p501 = por %p499, %p500
      %p502 = scmp.ne.s32.totalorder %s493, %s494
      %p503 = scmp.eq.s32.totalorder %s37, 0
      %p504 = por %p502, %p503
      %p505 = scmp.ne.s32.totalorder %s493, %s494
      %p506 = scmp.eq.s32.totalorder %s38, 1
      %p507 = por %p505, %p506
      %p509 = scmp.ne.s32.totalorder %s494, %s508
      %p510 = scmp.eq.s32.totalorder %s38, 0
      %p511 = por %p509, %p510
      %s513 = sadd.s32 %s512, 1
      %p516 = scmp.eq.s32.totalorder %s32, 1
      %p517 = scmp.ne.s32.totalorder %s512, %s514
      %p518 = scmp.eq.s32.totalorder %s32, 0
      %p519 = por %p517, %p518
      %p520 = scmp.ne.s32.totalorder %s512, %s514
      %p521 = scmp.eq.s32.totalorder %s37, 1
      %p522 = por %p520, %p521
      %p523 = scmp.ne.s32.totalorder %s514, %s515
      %p524 = scmp.eq.s32.totalorder %s37, 0
      %p525 = por %p523, %p524
      %p526 = scmp.ne.s32.totalorder %s514, %s515
      %p527 = scmp.eq.s32.totalorder %s38, 1
      %p528 = por %p526, %p527
      %p530 = scmp.ne.s32.totalorder %s515, %s529
      %p531 = scmp.eq.s32.totalorder %s38, 0
      %p532 = por %p530, %p531
      %s533 = ssub.s32 %s32, %s39
      %p534 = scmp.eq.s32.totalorder %s533, 0
      %s536 = sadd.s32 %s535, 1
      %s537 = scalar_select %p534, %s535, %s536
      %p540 = pneg %p534
      %p541 = scmp.eq.s32.totalorder %s32, 1
      %p542 = por %p540, %p541
      %p543 = scmp.ne.s32.totalorder %s535, %s538
      %p544 = scmp.eq.s32.totalorder %s32, 0
      %p545 = por %p543, %p544
      %p546 = scmp.ne.s32.totalorder %s535, %s538
      %p547 = scmp.eq.s32.totalorder %s37, 1
      %p548 = por %p546, %p547
      %p549 = scmp.ne.s32.totalorder %s538, %s539
      %p550 = scmp.eq.s32.totalorder %s37, 0
      %p551 = por %p549, %p550
      %p552 = scmp.ne.s32.totalorder %s538, %s539
      %p553 = scmp.eq.s32.totalorder %s38, 1
      %p554 = por %p552, %p553
      %p556 = scmp.ne.s32.totalorder %s539, %s555
      %p557 = scmp.eq.s32.totalorder %s38, 0
      %p558 = por %p556, %p557
      %p559 = scmp.le.s32.totalorder 1, %s32
      %p560 = scmp.lt.s32.totalorder %s32, 3
      %p561 = pnand %p559, %p560
      %p562 = pneg %p561
      // Predicated region
      $region9: #{bert_classifier_forward.1} parent=5 // pred_check
        _
      $region10: #{bert_classifier_forward.1} parent=5 // pred_check_branch
        %564 = sbr.rel (%p561) target = $region12
      $region11: #{bert_classifier_forward.1} parent=5 // pred_region
        %s565 = ssub.s32 %s32, 1
        // Predicated region
        $region13: #{bert_classifier_forward.1} parent=11 // pred_check
          %p566 = pneg %p105
        $region14: #{bert_classifier_forward.1} parent=11 // pred_check_branch
          %568 = sbr.rel (%p566) target = $region16
        $region15: #{bert_classifier_forward.1} parent=11 // pred_region
          _
        $region16: #{bert_classifier_forward.1} parent=11 // pred_fallthru
          _
        // Predicated region
        $region17: #{bert_classifier_forward.1} parent=11 // pred_check
          %p569 = pneg %p126
        $region18: #{bert_classifier_forward.1} parent=11 // pred_check_branch
          %571 = sbr.rel (%p569) target = $region20
        $region19: #{bert_classifier_forward.1} parent=11 // pred_region
          _
        $region20: #{bert_classifier_forward.1} parent=11 // pred_fallthru
          _
        // Predicated region
        $region21: #{bert_classifier_forward.1} parent=11 // pred_check
          %p572 = pneg %p147
        $region22: #{bert_classifier_forward.1} parent=11 // pred_check_branch
          %574 = sbr.rel (%p572) target = $region24
        $region23: #{bert_classifier_forward.1} parent=11 // pred_region
          _
        $region24: #{bert_classifier_forward.1} parent=11 // pred_fallthru
          _
        // Predicated region
        $region25: #{bert_classifier_forward.1} parent=11 // pred_check
          %p575 = pneg %p168
        $region26: #{bert_classifier_forward.1} parent=11 // pred_check_branch
          %577 = sbr.rel (%p575) target = $region28
        $region27: #{bert_classifier_forward.1} parent=11 // pred_region
          _
        $region28: #{bert_classifier_forward.1} parent=11 // pred_fallthru
          _
        // Predicated region
        $region29: #{bert_classifier_forward.1} parent=11 // pred_check
          %p578 = pneg %p189
        $region30: #{bert_classifier_forward.1} parent=11 // pred_check_branch
          %580 = sbr.rel (%p578) target = $region32
        $region31: #{bert_classifier_forward.1} parent=11 // pred_region
          _
        $region32: #{bert_classifier_forward.1} parent=11 // pred_fallthru
          _
        // Predicated region
        $region33: #{bert_classifier_forward.1} parent=11 // pred_check
          %p581 = pneg %p210
        $region34: #{bert_classifier_forward.1} parent=11 // pred_check_branch
          %583 = sbr.rel (%p581) target = $region36
        $region35: #{bert_classifier_forward.1} parent=11 // pred_region
          _
        $region36: #{bert_classifier_forward.1} parent=11 // pred_fallthru
          _
        // Predicated region
        $region37: #{bert_classifier_forward.1} parent=11 // pred_check
          %p584 = pneg %p231
        $region38: #{bert_classifier_forward.1} parent=11 // pred_check_branch
          %586 = sbr.rel (%p584) target = $region40
        $region39: #{bert_classifier_forward.1} parent=11 // pred_region
          _
        $region40: #{bert_classifier_forward.1} parent=11 // pred_fallthru
          _
        // Predicated region
        $region41: #{bert_classifier_forward.1} parent=11 // pred_check
          %p587 = pneg %p252
        $region42: #{bert_classifier_forward.1} parent=11 // pred_check_branch
          %589 = sbr.rel (%p587) target = $region44
        $region43: #{bert_classifier_forward.1} parent=11 // pred_region
          _
        $region44: #{bert_classifier_forward.1} parent=11 // pred_fallthru
          _
        // Predicated region
        $region45: #{bert_classifier_forward.1} parent=11 // pred_check
          %p590 = pneg %p273
        $region46: #{bert_classifier_forward.1} parent=11 // pred_check_branch
          %592 = sbr.rel (%p590) target = $region48
        $region47: #{bert_classifier_forward.1} parent=11 // pred_region
          _
        $region48: #{bert_classifier_forward.1} parent=11 // pred_fallthru
          _
        // Predicated region
        $region49: #{bert_classifier_forward.1} parent=11 // pred_check
          %p593 = pneg %p294
        $region50: #{bert_classifier_forward.1} parent=11 // pred_check_branch
          %595 = sbr.rel (%p593) target = $region52
        $region51: #{bert_classifier_forward.1} parent=11 // pred_region
          _
        $region52: #{bert_classifier_forward.1} parent=11 // pred_fallthru
          _
        // Predicated region
        $region53: #{bert_classifier_forward.1} parent=11 // pred_check
          %p596 = pneg %p315
        $region54: #{bert_classifier_forward.1} parent=11 // pred_check_branch
          %598 = sbr.rel (%p596) target = $region56
        $region55: #{bert_classifier_forward.1} parent=11 // pred_region
          _
        $region56: #{bert_classifier_forward.1} parent=11 // pred_fallthru
          _
        // Predicated region
        $region57: #{bert_classifier_forward.1} parent=11 // pred_check
          %p599 = pneg %p336
        $region58: #{bert_classifier_forward.1} parent=11 // pred_check_branch
          %601 = sbr.rel (%p599) target = $region60
        $region59: #{bert_classifier_forward.1} parent=11 // pred_region
          _
        $region60: #{bert_classifier_forward.1} parent=11 // pred_fallthru
          _
        // Predicated region
        $region61: #{bert_classifier_forward.1} parent=11 // pred_check
          %p602 = pneg %p357
        $region62: #{bert_classifier_forward.1} parent=11 // pred_check_branch
          %604 = sbr.rel (%p602) target = $region64
        $region63: #{bert_classifier_forward.1} parent=11 // pred_region
          _
        $region64: #{bert_classifier_forward.1} parent=11 // pred_fallthru
          _
        // Predicated region
        $region65: #{bert_classifier_forward.1} parent=11 // pred_check
          %p605 = pneg %p378
        $region66: #{bert_classifier_forward.1} parent=11 // pred_check_branch
          %607 = sbr.rel (%p605) target = $region68
        $region67: #{bert_classifier_forward.1} parent=11 // pred_region
          _
        $region68: #{bert_classifier_forward.1} parent=11 // pred_fallthru
          _
        // Predicated region
        $region69: #{bert_classifier_forward.1} parent=11 // pred_check
          %p608 = pneg %p399
        $region70: #{bert_classifier_forward.1} parent=11 // pred_check_branch
          %610 = sbr.rel (%p608) target = $region72
        $region71: #{bert_classifier_forward.1} parent=11 // pred_region
          _
        $region72: #{bert_classifier_forward.1} parent=11 // pred_fallthru
          _
        // Predicated region
        $region73: #{bert_classifier_forward.1} parent=11 // pred_check
          %p611 = pneg %p420
        $region74: #{bert_classifier_forward.1} parent=11 // pred_check_branch
          %613 = sbr.rel (%p611) target = $region76
        $region75: #{bert_classifier_forward.1} parent=11 // pred_region
          _
        $region76: #{bert_classifier_forward.1} parent=11 // pred_fallthru
          _
        // Predicated region
        $region77: #{bert_classifier_forward.1} parent=11 // pred_check
          %p614 = pneg %p441
        $region78: #{bert_classifier_forward.1} parent=11 // pred_check_branch
          %616 = sbr.rel (%p614) target = $region80
        $region79: #{bert_classifier_forward.1} parent=11 // pred_region
          _
        $region80: #{bert_classifier_forward.1} parent=11 // pred_fallthru
          _
        // Predicated region
        $region81: #{bert_classifier_forward.1} parent=11 // pred_check
          %p617 = pneg %p462
        $region82: #{bert_classifier_forward.1} parent=11 // pred_check_branch
          %619 = sbr.rel (%p617) target = $region84
        $region83: #{bert_classifier_forward.1} parent=11 // pred_region
          _
        $region84: #{bert_classifier_forward.1} parent=11 // pred_fallthru
          _
        // Predicated region
        $region85: #{bert_classifier_forward.1} parent=11 // pred_check
          %p620 = pneg %p483
        $region86: #{bert_classifier_forward.1} parent=11 // pred_check_branch
          %622 = sbr.rel (%p620) target = $region88
        $region87: #{bert_classifier_forward.1} parent=11 // pred_region
          _
        $region88: #{bert_classifier_forward.1} parent=11 // pred_fallthru
          _
        // Predicated region
        $region89: #{bert_classifier_forward.1} parent=11 // pred_check
          %p623 = pneg %p504
        $region90: #{bert_classifier_forward.1} parent=11 // pred_check_branch
          %625 = sbr.rel (%p623) target = $region92
        $region91: #{bert_classifier_forward.1} parent=11 // pred_region
          _
        $region92: #{bert_classifier_forward.1} parent=11 // pred_fallthru
          _
        // Predicated region
        $region93: #{bert_classifier_forward.1} parent=11 // pred_check
          %p626 = pneg %p525
        $region94: #{bert_classifier_forward.1} parent=11 // pred_check_branch
          %628 = sbr.rel (%p626) target = $region96
        $region95: #{bert_classifier_forward.1} parent=11 // pred_region
          _
        $region96: #{bert_classifier_forward.1} parent=11 // pred_fallthru
          _
      $region12: #{bert_classifier_forward.1} parent=5 // pred_fallthru
        _
      %p629 = scmp.lt.s32.totalorder %s32, 2
      // Predicated region
      $region97: #{bert_classifier_forward.1} parent=5 // pred_check
        %p630 = pneg %p629
      $region98: #{bert_classifier_forward.1} parent=5 // pred_check_branch
        %632 = sbr.rel (%p630) target = $region100
      $region99: #{bert_classifier_forward.1} parent=5 // pred_region
        // Predicated region
        $region101: #{bert_classifier_forward.1} parent=99 // pred_check
          %p633 = pneg %p52
        $region102: #{bert_classifier_forward.1} parent=99 // pred_check_branch
          %635 = sbr.rel (%p633) target = $region104
        $region103: #{bert_classifier_forward.1} parent=99 // pred_region
          %p636 = scmp.lt.s32.totalorder %s32, 1
          %s637 = scalar_select %p636, %s32, 1
          %s638 = smul.addr %s637, 8
          %s639 = scalar_lea.vmem %s0, %s638
        $region104: #{bert_classifier_forward.1} parent=99 // pred_fallthru
          _
        // Predicated region
        $region105: #{bert_classifier_forward.1} parent=99 // pred_check
          %p640 = pneg %p78
        $region106: #{bert_classifier_forward.1} parent=99 // pred_check_branch
          %642 = sbr.rel (%p640) target = $region108
        $region107: #{bert_classifier_forward.1} parent=99 // pred_region
          %p643 = scmp.lt.s32.totalorder %s32, 1
          %s644 = scalar_select %p643, %s32, 1
          %s645 = scalar_lea.vmem %s1, %s644
        $region108: #{bert_classifier_forward.1} parent=99 // pred_fallthru
          _
      $region100: #{bert_classifier_forward.1} parent=5 // pred_fallthru
        _
      %p646 = scmp.le.s32.totalorder 1, %s32
      %p647 = scmp.lt.s32.totalorder %s32, 3
      %p648 = pnand %p646, %p647
      %p649 = pneg %p648
      // Predicated region
      $region109: #{bert_classifier_forward.1} parent=5 // pred_check
        _
      $region110: #{bert_classifier_forward.1} parent=5 // pred_check_branch
        %651 = sbr.rel (%p648) target = $region112
      $region111: #{bert_classifier_forward.1} parent=5 // pred_region
        %s652 = ssub.s32 %s32, 1
        %p653 = scmp.lt.s32.totalorder %s37, 1
        %s654 = scalar_select %p653, %s37, 1
        %s655 = smul.addr %s654, 8
        %s656 = scalar_lea.vmem %s0, %s655
        %p657 = pneg %p58
        %p658 = pneg %p55
        %p659 = scmp.lt.s32.totalorder %s37, 1
        %s660 = scalar_select %p659, %s37, 1
        %s661 = scalar_lea.vmem %s1, %s660
        %p662 = pneg %p84
        %p663 = pneg %p81
        %p664 = pneg %p105
        %p665 = pneg %p102
        %p666 = pneg %p126
        %p667 = pneg %p123
        %p668 = pneg %p147
        %p669 = pneg %p144
        %p670 = pneg %p168
        %p671 = pneg %p165
        %p672 = pneg %p189
        %p673 = pneg %p186
        %p674 = pneg %p210
        %p675 = pneg %p207
        %p676 = pneg %p231
        %p677 = pneg %p228
        %p678 = pneg %p252
        %p679 = pneg %p249
        %p680 = pneg %p273
        %p681 = pneg %p270
        %p682 = pneg %p294
        %p683 = pneg %p291
        %p684 = pneg %p315
        %p685 = pneg %p312
        %p686 = pneg %p336
        %p687 = pneg %p333
        %p688 = pneg %p357
        %p689 = pneg %p354
        %p690 = pneg %p378
        %p691 = pneg %p375
        %p692 = pneg %p399
        %p693 = pneg %p396
        %p694 = pneg %p420
        %p695 = pneg %p417
        %p696 = pneg %p441
        %p697 = pneg %p438
        %p698 = pneg %p462
        %p699 = pneg %p459
        %p700 = pneg %p483
        %p701 = pneg %p480
        %p702 = pneg %p504
        %p703 = pneg %p501
        %p704 = pneg %p525
        %p705 = pneg %p522
        %p706 = pneg %p551
        %p707 = pneg %p548
        %s708 = sand.u32 %s538, 1
        %s709 = scalar_lea.sflag [#allocation3], %s708
        %s710 = sand.u32 %s538, 1
        %s711 = scalar_lea.vmem [#allocation2], %s710
        %p712 = scmp.lt.s32.totalorder %s37, 1
        %s713 = scalar_select %p712, %s37, 1
        %s714 = smul.addr %s713, 8
        %s715 = scalar_lea.vmem %s0, %s714
        %p716 = scmp.lt.s32.totalorder %s37, 1
        %s717 = scalar_select %p716, %s37, 1
        %s718 = scalar_lea.vmem %s1, %s717
        %v720 = vld [vmem:[%s715] sm:$0xff]
        %v721 = vlaneseq
        %v722 = vand.u32 %v721, 127
        %723 = vset.pattern.permute.xlu0 0
        %724 = vperm.xlu0 %723, %v720
        %v725 = vpop.permute.xlu0 %724
        %vm726 = vcmp.eq.s32.totalorder %v722, %v725
        %v727 = vsel %vm726, 1, 0
        %v728 = vcvt.s32.f32 %v727
        %v729 = vld [vmem:[%s2] sm:$0xff]
        %v730 = vld [vmem:[%s2 + $0x8] sm:$0xff]
        %v731 = vld [vmem:[%s2 + $0x10] sm:$0xff]
        %v732 = vld [vmem:[%s2 + $0x18] sm:$0xff]
        %v733 = vld [vmem:[%s2 + $0x20] sm:$0xff]
        %v734 = vld [vmem:[%s2 + $0x28] sm:$0xff]
        %v735 = vld [vmem:[%s2 + $0x30] sm:$0xff]
        %v736 = vld [vmem:[%s2 + $0x38] sm:$0xff]
        %v737 = vld [vmem:[%s2 + $0x40] sm:$0xff]
        %v738 = vld [vmem:[%s2 + $0x48] sm:$0xff]
        %v739 = vld [vmem:[%s2 + $0x50] sm:$0xff]
        %v740 = vld [vmem:[%s2 + $0x58] sm:$0xff]
        %v741 = vld [vmem:[%s2 + $0x60] sm:$0xff]
        %v742 = vld [vmem:[%s2 + $0x68] sm:$0xff]
        %v743 = vld [vmem:[%s2 + $0x70] sm:$0xff]
        %v744 = vld [vmem:[%s2 + $0x78] sm:$0xff]
        %v745 = vld [vmem:[%s3] sm:$0xff]
        %746 = vmatpush.msra.mxu0 %v744
        %747 = vmatpush.msra.mxu0 %v743
        %748 = vmatpush.msra.mxu0 %v742
        %749 = vmatpush.msra.mxu0 %v741
        %750 = vmatpush.msra.mxu0 %v740
        %751 = vmatpush.msra.mxu0 %v739
        %752 = vmatpush.msra.mxu0 %v738
        %753 = vmatpush.msra.mxu0 %v737
        %754 = vmatpush.msra.mxu0 %v736
        %755 = vmatpush.msra.mxu0 %v735
        %756 = vmatpush.msra.mxu0 %v734
        %757 = vmatpush.msra.mxu0 %v733
        %758 = vmatpush.msra.mxu0 %v732
        %759 = vmatpush.msra.mxu0 %v731
        %760 = vmatpush.msra.mxu0 %v730
        %761 = vmatpush.msra.mxu0 %v729
        %762 = vmatmul.f32.gmra.mxu0 %v728
        %v763 = vpop.f32.mrf.mxu0
        %v764 = vadd.f32 %v745, %v763
        %765 = vdwg.mxu0
        %v766 = vld [vmem:[%s4] sm:$0x1]
        %v768 = vperm.slane %v766, 0
        %v770 = vadd.f32 %v764, %v768
        %v771 = vld [vmem:[%s5] sm:$0x1]
        %v772 = vld [vmem:[%s6] sm:$0x1]
        %vm773 = vcmask 261120
        %v774 = vsel %vm773, %v770, 0.0
        %775 = vadd.xlane.f32.xlu0 %v774
        %v776 = vpop.xlane.xlu0 %775
        %v777 = vrcp.pop 32.0
        %v778 = vmul.f32 32.0, %v777
        %v779 = vsub.f32 1.0, %v778
        %v780 = vmul.f32 %v777, %v779
        %v781 = vadd.f32 %v777, %v780
        %vm782 = vweird.f32 %v777
        %v783 = vsel %vm782, %v777, %v781
        %v784 = vmul.f32 %v776, %v783
        %v785 = vsub.f32 %v770, %v784
        %v786 = vmul.f32 %v785, %v785
        %v787 = vsel %vm773, %v786, 0.0
        %788 = vadd.xlane.f32.xlu0 %v787
        %v789 = vpop.xlane.xlu0 %788
        %v790 = vmul.f32 %v789, %v783
        %v791 = vadd.f32 %v790, 1e-12
        %v792 = vrsqrt.pop %v791
        %v793 = vmul.f32 %v792, %v791
        %v794 = vmul.f32 %v793, %v792
        %v795 = vmul.f32 0.5, %v794
        %v796 = vsub.f32 1.5, %v795
        %v797 = vmul.f32 %v792, %v796
        %vm798 = vweird.f32 %v791
        %vm799 = vweird.f32 %v792
        %vm800 = vmor %vm798, %vm799
        %v801 = vsel %vm800, %v792, %v797
        %v802 = vmul.f32 %v785, %v801
        %v804 = vperm.slane %v771, 0
        %v806 = vmul.f32 %v802, %v804
        %v808 = vperm.slane %v772, 0
        %v810 = vadd.f32 %v806, %v808
        %v811 = vld [vmem:[%s718] sm:$0x1]
        %v812 = vsub.f32 1.0, %v811
        %v813 = vmul.f32 %v812, -10000.0
        %v814 = vpack.c.bf16 %v810, %v810
        %v815 = vld [vmem:[%s7] sm:$0xf]
        %v816 = vld [vmem:[%s7 + $0x4] sm:$0xf]
        %v817 = vld [vmem:[%s7 + $0x8] sm:$0xf]
        %v818 = vld [vmem:[%s7 + $0xc] sm:$0xf]
        %v819 = vld [vmem:[%s7 + $0x10] sm:$0xf]
        %v820 = vld [vmem:[%s7 + $0x14] sm:$0xf]
        %v821 = vld [vmem:[%s7 + $0x18] sm:$0xf]
        %v822 = vld [vmem:[%s7 + $0x1c] sm:$0xf]
        %v823 = vld [vmem:[%s7 + $0x20] sm:$0xf]
        %v824 = vld [vmem:[%s7 + $0x24] sm:$0xf]
        %v825 = vld [vmem:[%s7 + $0x28] sm:$0xf]
        %v826 = vld [vmem:[%s7 + $0x2c] sm:$0xf]
        %v827 = vld [vmem:[%s7 + $0x30] sm:$0xf]
        %v828 = vld [vmem:[%s7 + $0x34] sm:$0xf]
        %v829 = vld [vmem:[%s7 + $0x38] sm:$0xf]
        %v830 = vld [vmem:[%s7 + $0x3c] sm:$0xf]
        %v831 = vld [vmem:[%s7 + $0x40] sm:$0xf]
        %v832 = vld [vmem:[%s7 + $0x44] sm:$0xf]
        %v833 = vld [vmem:[%s7 + $0x48] sm:$0xf]
        %v834 = vld [vmem:[%s7 + $0x4c] sm:$0xf]
        %v835 = vld [vmem:[%s7 + $0x50] sm:$0xf]
        %v836 = vld [vmem:[%s7 + $0x54] sm:$0xf]
        %v837 = vld [vmem:[%s7 + $0x58] sm:$0xf]
        %v838 = vld [vmem:[%s7 + $0x5c] sm:$0xf]
        %v839 = vld [vmem:[%s7 + $0x60] sm:$0xf]
        %v840 = vld [vmem:[%s7 + $0x64] sm:$0xf]
        %v841 = vld [vmem:[%s7 + $0x68] sm:$0xf]
        %v842 = vld [vmem:[%s7 + $0x6c] sm:$0xf]
        %v843 = vld [vmem:[%s7 + $0x70] sm:$0xf]
        %v844 = vld [vmem:[%s7 + $0x74] sm:$0xf]
        %v845 = vld [vmem:[%s7 + $0x78] sm:$0xf]
        %v846 = vld [vmem:[%s7 + $0x7c] sm:$0xf]
        %v847 = vld [vmem:[%s7 + $0x80] sm:$0xf]
        %v848 = vld [vmem:[%s7 + $0x84] sm:$0xf]
        %v849 = vld [vmem:[%s7 + $0x88] sm:$0xf]
        %v850 = vld [vmem:[%s7 + $0x8c] sm:$0xf]
        %v851 = vld [vmem:[%s7 + $0x90] sm:$0xf]
        %v852 = vld [vmem:[%s7 + $0x94] sm:$0xf]
        %v853 = vld [vmem:[%s7 + $0x98] sm:$0xf]
        %v854 = vld [vmem:[%s7 + $0x9c] sm:$0xf]
        %v855 = vld [vmem:[%s7 + $0xa0] sm:$0xf]
        %v856 = vld [vmem:[%s7 + $0xa4] sm:$0xf]
        %v857 = vld [vmem:[%s7 + $0xa8] sm:$0xf]
        %v858 = vld [vmem:[%s7 + $0xac] sm:$0xf]
        %v859 = vld [vmem:[%s7 + $0xb0] sm:$0xf]
        %v860 = vld [vmem:[%s7 + $0xb4] sm:$0xf]
        %v861 = vld [vmem:[%s7 + $0xb8] sm:$0xf]
        %v862 = vld [vmem:[%s7 + $0xbc] sm:$0xf]
        %v863 = vld [vmem:[%s8] sm:$0x1]
        %v864 = vld [vmem:[%s8 + $0x1] sm:$0x1]
        %v865 = vld [vmem:[%s8 + $0x2] sm:$0x1]
        %v866 = vld [vmem:[%s8 + $0x3] sm:$0x1]
        %v867 = vld [vmem:[%s8 + $0x4] sm:$0x1]
        %v868 = vld [vmem:[%s8 + $0x5] sm:$0x1]
        %v869 = vld [vmem:[%s8 + $0x6] sm:$0x1]
        %v870 = vld [vmem:[%s8 + $0x7] sm:$0x1]
        %v871 = vld [vmem:[%s8 + $0x8] sm:$0x1]
        %v872 = vld [vmem:[%s8 + $0x9] sm:$0x1]
        %v873 = vld [vmem:[%s8 + $0xa] sm:$0x1]
        %v874 = vld [vmem:[%s8 + $0xb] sm:$0x1]
        %v887 = vperm.slane %v863, 0
        %v888 = vperm.slane %v864, 0
        %v889 = vperm.slane %v865, 0
        %v890 = vperm.slane %v866, 0
        %v891 = vperm.slane %v867, 0
        %v892 = vperm.slane %v868, 0
        %v893 = vperm.slane %v869, 0
        %v894 = vperm.slane %v870, 0
        %v895 = vperm.slane %v871, 0
        %v896 = vperm.slane %v872, 0
        %v897 = vperm.slane %v873, 0
        %v898 = vperm.slane %v874, 0
        %v915 = vunpack.c.l.b16 %v815
        %v916 = vunpack.c.l.b16 %v816
        %v917 = vunpack.c.l.b16 %v817
        %v918 = vunpack.c.l.b16 %v818
        %v919 = vpack.c.b16 %v916, %v915
        %v920 = vpack.c.b16 %v918, %v917
        %v924 = vsel %vm773, %v814, 0
        %926 = vmatpush.bf16.msra.mxu0 0
        %927 = vmatpush.bf16.msra.mxu0 0
        %928 = vmatpush.bf16.msra.mxu0 0
        %929 = vmatpush.bf16.msra.mxu0 0
        %930 = vmatpush.bf16.msra.mxu0 0
        %931 = vmatpush.bf16.msra.mxu0 0
        %932 = vmatpush.bf16.msra.mxu0 %v920
        %933 = vmatpush.bf16.msra.mxu0 %v919
        %934 = vmatmul.bf16.gmra.mxu0 %v924
        %v935 = vpop.f32.mrf.mxu0
        %v936 = vadd.f32 %v887, %v935
        %v937 = vpop.f32.mrf.mxu0
        %938 = vdwg.mxu0
        %v943 = vunpack.c.l.b16 %v819
        %v944 = vunpack.c.l.b16 %v820
        %v945 = vunpack.c.l.b16 %v821
        %v946 = vunpack.c.l.b16 %v822
        %v947 = vpack.c.b16 %v944, %v943
        %v948 = vpack.c.b16 %v946, %v945
        %951 = vmatpush.bf16.msra.mxu0 0
        %952 = vmatpush.bf16.msra.mxu0 0
        %953 = vmatpush.bf16.msra.mxu0 0
        %954 = vmatpush.bf16.msra.mxu0 0
        %955 = vmatpush.bf16.msra.mxu0 0
        %956 = vmatpush.bf16.msra.mxu0 0
        %957 = vmatpush.bf16.msra.mxu0 %v948
        %958 = vmatpush.bf16.msra.mxu0 %v947
        %959 = vmatmul.bf16.gmra.mxu0 %v924
        %v960 = vpop.f32.mrf.mxu0
        %v961 = vadd.f32 %v888, %v960
        %v962 = vpop.f32.mrf.mxu0
        %963 = vdwg.mxu0
        %v968 = vunpack.c.l.b16 %v823
        %v969 = vunpack.c.l.b16 %v824
        %v970 = vunpack.c.l.b16 %v825
        %v971 = vunpack.c.l.b16 %v826
        %v972 = vpack.c.b16 %v969, %v968
        %v973 = vpack.c.b16 %v971, %v970
        %976 = vmatpush.bf16.msra.mxu0 0
        %977 = vmatpush.bf16.msra.mxu0 0
        %978 = vmatpush.bf16.msra.mxu0 0
        %979 = vmatpush.bf16.msra.mxu0 0
        %980 = vmatpush.bf16.msra.mxu0 0
        %981 = vmatpush.bf16.msra.mxu0 0
        %982 = vmatpush.bf16.msra.mxu0 %v973
        %983 = vmatpush.bf16.msra.mxu0 %v972
        %984 = vmatmul.bf16.gmra.mxu0 %v924
        %v985 = vpop.f32.mrf.mxu0
        %v986 = vadd.f32 %v889, %v985
        %v987 = vpop.f32.mrf.mxu0
        %988 = vdwg.mxu0
        %v993 = vunpack.c.l.b16 %v827
        %v994 = vunpack.c.l.b16 %v828
        %v995 = vunpack.c.l.b16 %v829
        %v996 = vunpack.c.l.b16 %v830
        %v997 = vpack.c.b16 %v994, %v993
        %v998 = vpack.c.b16 %v996, %v995
        %1001 = vmatpush.bf16.msra.mxu0 0
        %1002 = vmatpush.bf16.msra.mxu0 0
        %1003 = vmatpush.bf16.msra.mxu0 0
        %1004 = vmatpush.bf16.msra.mxu0 0
        %1005 = vmatpush.bf16.msra.mxu0 0
        %1006 = vmatpush.bf16.msra.mxu0 0
        %1007 = vmatpush.bf16.msra.mxu0 %v998
        %1008 = vmatpush.bf16.msra.mxu0 %v997
        %1009 = vmatmul.bf16.gmra.mxu0 %v924
        %v1010 = vpop.f32.mrf.mxu0
        %v1011 = vadd.f32 %v890, %v1010
        %v1012 = vpop.f32.mrf.mxu0
        %1013 = vdwg.mxu0
        %v1018 = vunpack.c.l.b16 %v831
        %v1019 = vunpack.c.l.b16 %v832
        %v1020 = vunpack.c.l.b16 %v833
        %v1021 = vunpack.c.l.b16 %v834
        %v1022 = vpack.c.b16 %v1019, %v1018
        %v1023 = vpack.c.b16 %v1021, %v1020
        %1026 = vmatpush.bf16.msra.mxu0 0
        %1027 = vmatpush.bf16.msra.mxu0 0
        %1028 = vmatpush.bf16.msra.mxu0 0
        %1029 = vmatpush.bf16.msra.mxu0 0
        %1030 = vmatpush.bf16.msra.mxu0 0
        %1031 = vmatpush.bf16.msra.mxu0 0
        %1032 = vmatpush.bf16.msra.mxu0 %v1023
        %1033 = vmatpush.bf16.msra.mxu0 %v1022
        %1034 = vmatmul.bf16.gmra.mxu0 %v924
        %v1035 = vpop.f32.mrf.mxu0
        %v1036 = vadd.f32 %v891, %v1035
        %v1037 = vpop.f32.mrf.mxu0
        %1038 = vdwg.mxu0
        %v1043 = vunpack.c.l.b16 %v835
        %v1044 = vunpack.c.l.b16 %v836
        %v1045 = vunpack.c.l.b16 %v837
        %v1046 = vunpack.c.l.b16 %v838
        %v1047 = vpack.c.b16 %v1044, %v1043
        %v1048 = vpack.c.b16 %v1046, %v1045
        %1051 = vmatpush.bf16.msra.mxu0 0
        %1052 = vmatpush.bf16.msra.mxu0 0
        %1053 = vmatpush.bf16.msra.mxu0 0
        %1054 = vmatpush.bf16.msra.mxu0 0
        %1055 = vmatpush.bf16.msra.mxu0 0
        %1056 = vmatpush.bf16.msra.mxu0 0
        %1057 = vmatpush.bf16.msra.mxu0 %v1048
        %1058 = vmatpush.bf16.msra.mxu0 %v1047
        %1059 = vmatmul.bf16.gmra.mxu0 %v924
        %v1060 = vpop.f32.mrf.mxu0
        %v1061 = vadd.f32 %v892, %v1060
        %v1062 = vpop.f32.mrf.mxu0
        %1063 = vdwg.mxu0
        %v1068 = vunpack.c.l.b16 %v839
        %v1069 = vunpack.c.l.b16 %v840
        %v1070 = vunpack.c.l.b16 %v841
        %v1071 = vunpack.c.l.b16 %v842
        %v1072 = vpack.c.b16 %v1069, %v1068
        %v1073 = vpack.c.b16 %v1071, %v1070
        %1076 = vmatpush.bf16.msra.mxu0 0
        %1077 = vmatpush.bf16.msra.mxu0 0
        %1078 = vmatpush.bf16.msra.mxu0 0
        %1079 = vmatpush.bf16.msra.mxu0 0
        %1080 = vmatpush.bf16.msra.mxu0 0
        %1081 = vmatpush.bf16.msra.mxu0 0
        %1082 = vmatpush.bf16.msra.mxu0 %v1073
        %1083 = vmatpush.bf16.msra.mxu0 %v1072
        %1084 = vmatmul.bf16.gmra.mxu0 %v924
        %v1085 = vpop.f32.mrf.mxu0
        %v1086 = vadd.f32 %v893, %v1085
        %v1087 = vpop.f32.mrf.mxu0
        %1088 = vdwg.mxu0
        %v1093 = vunpack.c.l.b16 %v843
        %v1094 = vunpack.c.l.b16 %v844
        %v1095 = vunpack.c.l.b16 %v845
        %v1096 = vunpack.c.l.b16 %v846
        %v1097 = vpack.c.b16 %v1094, %v1093
        %v1098 = vpack.c.b16 %v1096, %v1095
        %1101 = vmatpush.bf16.msra.mxu0 0
        %1102 = vmatpush.bf16.msra.mxu0 0
        %1103 = vmatpush.bf16.msra.mxu0 0
        %1104 = vmatpush.bf16.msra.mxu0 0
        %1105 = vmatpush.bf16.msra.mxu0 0
        %1106 = vmatpush.bf16.msra.mxu0 0
        %1107 = vmatpush.bf16.msra.mxu0 %v1098
        %1108 = vmatpush.bf16.msra.mxu0 %v1097
        %1109 = vmatmul.bf16.gmra.mxu0 %v924
        %v1110 = vpop.f32.mrf.mxu0
        %v1111 = vadd.f32 %v894, %v1110
        %v1112 = vpop.f32.mrf.mxu0
        %1113 = vdwg.mxu0
        %v1118 = vunpack.c.l.b16 %v847
        %v1119 = vunpack.c.l.b16 %v848
        %v1120 = vunpack.c.l.b16 %v849
        %v1121 = vunpack.c.l.b16 %v850
        %v1122 = vpack.c.b16 %v1119, %v1118
        %v1123 = vpack.c.b16 %v1121, %v1120
        %1126 = vmatpush.bf16.msra.mxu0 0
        %1127 = vmatpush.bf16.msra.mxu0 0
        %1128 = vmatpush.bf16.msra.mxu0 0
        %1129 = vmatpush.bf16.msra.mxu0 0
        %1130 = vmatpush.bf16.msra.mxu0 0
        %1131 = vmatpush.bf16.msra.mxu0 0
        %1132 = vmatpush.bf16.msra.mxu0 %v1123
        %1133 = vmatpush.bf16.msra.mxu0 %v1122
        %1134 = vmatmul.bf16.gmra.mxu0 %v924
        %v1135 = vpop.f32.mrf.mxu0
        %v1136 = vadd.f32 %v895, %v1135
        %v1137 = vpop.f32.mrf.mxu0
        %1138 = vdwg.mxu0
        %v1143 = vunpack.c.l.b16 %v851
        %v1144 = vunpack.c.l.b16 %v852
        %v1145 = vunpack.c.l.b16 %v853
        %v1146 = vunpack.c.l.b16 %v854
        %v1147 = vpack.c.b16 %v1144, %v1143
        %v1148 = vpack.c.b16 %v1146, %v1145
        %1151 = vmatpush.bf16.msra.mxu0 0
        %1152 = vmatpush.bf16.msra.mxu0 0
        %1153 = vmatpush.bf16.msra.mxu0 0
        %1154 = vmatpush.bf16.msra.mxu0 0
        %1155 = vmatpush.bf16.msra.mxu0 0
        %1156 = vmatpush.bf16.msra.mxu0 0
        %1157 = vmatpush.bf16.msra.mxu0 %v1148
        %1158 = vmatpush.bf16.msra.mxu0 %v1147
        %1159 = vmatmul.bf16.gmra.mxu0 %v924
        %v1160 = vpop.f32.mrf.mxu0
        %v1161 = vadd.f32 %v896, %v1160
        %v1162 = vpop.f32.mrf.mxu0
        %1163 = vdwg.mxu0
        %v1168 = vunpack.c.l.b16 %v855
        %v1169 = vunpack.c.l.b16 %v856
        %v1170 = vunpack.c.l.b16 %v857
        %v1171 = vunpack.c.l.b16 %v858
        %v1172 = vpack.c.b16 %v1169, %v1168
        %v1173 = vpack.c.b16 %v1171, %v1170
        %1176 = vmatpush.bf16.msra.mxu0 0
        %1177 = vmatpush.bf16.msra.mxu0 0
        %1178 = vmatpush.bf16.msra.mxu0 0
        %1179 = vmatpush.bf16.msra.mxu0 0
        %1180 = vmatpush.bf16.msra.mxu0 0
        %1181 = vmatpush.bf16.msra.mxu0 0
        %1182 = vmatpush.bf16.msra.mxu0 %v1173
        %1183 = vmatpush.bf16.msra.mxu0 %v1172
        %1184 = vmatmul.bf16.gmra.mxu0 %v924
        %v1185 = vpop.f32.mrf.mxu0
        %v1186 = vadd.f32 %v897, %v1185
        %v1187 = vpop.f32.mrf.mxu0
        %1188 = vdwg.mxu0
        %v1193 = vunpack.c.l.b16 %v859
        %v1194 = vunpack.c.l.b16 %v860
        %v1195 = vunpack.c.l.b16 %v861
        %v1196 = vunpack.c.l.b16 %v862
        %v1197 = vpack.c.b16 %v1194, %v1193
        %v1198 = vpack.c.b16 %v1196, %v1195
        %1201 = vmatpush.bf16.msra.mxu0 0
        %1202 = vmatpush.bf16.msra.mxu0 0
        %1203 = vmatpush.bf16.msra.mxu0 0
        %1204 = vmatpush.bf16.msra.mxu0 0
        %1205 = vmatpush.bf16.msra.mxu0 0
        %1206 = vmatpush.bf16.msra.mxu0 0
        %1207 = vmatpush.bf16.msra.mxu0 %v1198
        %1208 = vmatpush.bf16.msra.mxu0 %v1197
        %1209 = vmatmul.bf16.gmra.mxu0 %v924
        %v1210 = vpop.f32.mrf.mxu0
        %v1211 = vadd.f32 %v898, %v1210
        %v1212 = vpop.f32.mrf.mxu0
        %1213 = vdwg.mxu0
        %v1214 = vpack.c.bf16 %v936, %v936
        %v1215 = vpack.c.bf16 %v961, %v961
        %v1216 = vpack.c.bf16 %v986, %v986
        %v1217 = vpack.c.bf16 %v1011, %v1011
        %v1218 = vpack.c.bf16 %v1036, %v1036
        %v1219 = vpack.c.bf16 %v1061, %v1061
        %v1220 = vpack.c.bf16 %v1086, %v1086
        %v1221 = vpack.c.bf16 %v1111, %v1111
        %v1222 = vpack.c.bf16 %v1136, %v1136
        %v1223 = vpack.c.bf16 %v1161, %v1161
        %v1224 = vpack.c.bf16 %v1186, %v1186
        %v1225 = vpack.c.bf16 %v1211, %v1211
        %vm1226 = vcmask 64512
        %v1228 = vsel %vm1226, %v1214, 0
        %v1231 = vsel %vm1226, %v1218, 0
        %1233 = vmatpush.bf16.xpose.msra.mxu0 0
        %1234 = vmatpush.bf16.xpose.msra.mxu0 0
        %1235 = vmatpush.bf16.xpose.msra.mxu0 0
        %1236 = vmatpush.bf16.xpose.msra.mxu0 0
        %1237 = vmatpush.bf16.xpose.msra.mxu0 0
        %1238 = vmatpush.bf16.xpose.msra.mxu0 0
        %1239 = vmatpush.bf16.xpose.msra.mxu0 0
        %1240 = vmatpush.bf16.xpose.msra.mxu0 %v1231
        %1241 = vmatmul.bf16.gmra.mxu0 %v1228
        %v1242 = vpop.f32.mrf.mxu0
        %v1243 = vadd.f32 0.0, %v1242
        %v1244 = vpop.f32.mrf.mxu0
        %1245 = vdwg.mxu0
        %v1247 = vsel %vm1226, %v1215, 0
        %v1250 = vsel %vm1226, %v1219, 0
        %1252 = vmatpush.bf16.xpose.msra.mxu0 0
        %1253 = vmatpush.bf16.xpose.msra.mxu0 0
        %1254 = vmatpush.bf16.xpose.msra.mxu0 0
        %1255 = vmatpush.bf16.xpose.msra.mxu0 0
        %1256 = vmatpush.bf16.xpose.msra.mxu0 0
        %1257 = vmatpush.bf16.xpose.msra.mxu0 0
        %1258 = vmatpush.bf16.xpose.msra.mxu0 0
        %1259 = vmatpush.bf16.xpose.msra.mxu0 %v1250
        %1260 = vmatmul.bf16.gmra.mxu0 %v1247
        %v1261 = vpop.f32.mrf.mxu0
        %v1262 = vadd.f32 0.0, %v1261
        %v1263 = vpop.f32.mrf.mxu0
        %1264 = vdwg.mxu0
        %v1266 = vsel %vm1226, %v1216, 0
        %v1269 = vsel %vm1226, %v1220, 0
        %1271 = vmatpush.bf16.xpose.msra.mxu0 0
        %1272 = vmatpush.bf16.xpose.msra.mxu0 0
        %1273 = vmatpush.bf16.xpose.msra.mxu0 0
        %1274 = vmatpush.bf16.xpose.msra.mxu0 0
        %1275 = vmatpush.bf16.xpose.msra.mxu0 0
        %1276 = vmatpush.bf16.xpose.msra.mxu0 0
        %1277 = vmatpush.bf16.xpose.msra.mxu0 0
        %1278 = vmatpush.bf16.xpose.msra.mxu0 %v1269
        %1279 = vmatmul.bf16.gmra.mxu0 %v1266
        %v1280 = vpop.f32.mrf.mxu0
        %v1281 = vadd.f32 0.0, %v1280
        %v1282 = vpop.f32.mrf.mxu0
        %1283 = vdwg.mxu0
        %v1285 = vsel %vm1226, %v1217, 0
        %v1288 = vsel %vm1226, %v1221, 0
        %1290 = vmatpush.bf16.xpose.msra.mxu0 0
        %1291 = vmatpush.bf16.xpose.msra.mxu0 0
        %1292 = vmatpush.bf16.xpose.msra.mxu0 0
        %1293 = vmatpush.bf16.xpose.msra.mxu0 0
        %1294 = vmatpush.bf16.xpose.msra.mxu0 0
        %1295 = vmatpush.bf16.xpose.msra.mxu0 0
        %1296 = vmatpush.bf16.xpose.msra.mxu0 0
        %1297 = vmatpush.bf16.xpose.msra.mxu0 %v1288
        %1298 = vmatmul.bf16.gmra.mxu0 %v1285
        %v1299 = vpop.f32.mrf.mxu0
        %v1300 = vadd.f32 0.0, %v1299
        %v1301 = vpop.f32.mrf.mxu0
        %1302 = vdwg.mxu0
        %v1303 = vmul.f32 %v1243, 0.35355338
        %v1304 = vmul.f32 %v1262, 0.35355338
        %v1305 = vmul.f32 %v1281, 0.35355338
        %v1306 = vmul.f32 %v1300, 0.35355338
        %v1308 = vperm.slane %v813, 0
        %v1310 = vadd.f32 %v1303, %v1308
        %v1311 = vadd.f32 %v1304, %v1308
        %v1312 = vadd.f32 %v1305, %v1308
        %v1313 = vadd.f32 %v1306, %v1308
        %v1314 = vsel %vm1226, %v1310, -inf
        %1315 = vmax.xlane.f32.xlu0 %v1314
        %v1316 = vpop.xlane.xlu0 %1315
        %v1317 = vsel %vm1226, %v1311, -inf
        %1318 = vmax.xlane.f32.xlu0 %v1317
        %v1319 = vpop.xlane.xlu0 %1318
        %v1320 = vsel %vm1226, %v1312, -inf
        %1321 = vmax.xlane.f32.xlu0 %v1320
        %v1322 = vpop.xlane.xlu0 %1321
        %v1323 = vsel %vm1226, %v1313, -inf
        %1324 = vmax.xlane.f32.xlu0 %v1323
        %v1325 = vpop.xlane.xlu0 %1324
        %v1326 = vsub.f32 %v1310, %v1316
        %v1327 = vsub.f32 %v1311, %v1319
        %v1328 = vsub.f32 %v1312, %v1322
        %v1329 = vsub.f32 %v1313, %v1325
        %v1330 = vmul.f32 %v1326, 1.442695
        %v1331 = vpow.pop %v1330
        %v1332 = vmul.f32 %v1327, 1.442695
        %v1333 = vpow.pop %v1332
        %v1334 = vmul.f32 %v1328, 1.442695
        %v1335 = vpow.pop %v1334
        %v1336 = vmul.f32 %v1329, 1.442695
        %v1337 = vpow.pop %v1336
        %v1338 = vsel %vm1226, %v1331, 0.0
        %1339 = vadd.xlane.f32.xlu0 %v1338
        %v1340 = vpop.xlane.xlu0 %1339
        %v1341 = vsel %vm1226, %v1333, 0.0
        %1342 = vadd.xlane.f32.xlu0 %v1341
        %v1343 = vpop.xlane.xlu0 %1342
        %v1344 = vsel %vm1226, %v1335, 0.0
        %1345 = vadd.xlane.f32.xlu0 %v1344
        %v1346 = vpop.xlane.xlu0 %1345
        %v1347 = vsel %vm1226, %v1337, 0.0
        %1348 = vadd.xlane.f32.xlu0 %v1347
        %v1349 = vpop.xlane.xlu0 %1348
        %v1350 = vrcp.pop %v1340
        %v1351 = vmul.f32 %v1340, %v1350
        %v1352 = vsub.f32 1.0, %v1351
        %v1353 = vmul.f32 %v1350, %v1352
        %v1354 = vadd.f32 %v1350, %v1353
        %vm1355 = vweird.f32 %v1340
        %vm1356 = vweird.f32 %v1350
        %vm1357 = vmor %vm1355, %vm1356
        %v1358 = vsel %vm1357, %v1350, %v1354
        %v1359 = vand.u32 2147483647, %v1340
        %vm1360 = vcmp.eq.f32.partialorder %v1359, 8.507059e+37
        %v1361 = vand.u32 %v1340, 2147483648
        %v1362 = vor.u32 1.1754944e-38, %v1361
        %v1363 = vsel %vm1360, %v1362, %v1358
        %v1364 = vmul.f32 %v1331, %v1363
        %v1365 = vrcp.pop %v1343
        %v1366 = vmul.f32 %v1343, %v1365
        %v1367 = vsub.f32 1.0, %v1366
        %v1368 = vmul.f32 %v1365, %v1367
        %v1369 = vadd.f32 %v1365, %v1368
        %vm1370 = vweird.f32 %v1343
        %vm1371 = vweird.f32 %v1365
        %vm1372 = vmor %vm1370, %vm1371
        %v1373 = vsel %vm1372, %v1365, %v1369
        %v1374 = vand.u32 2147483647, %v1343
        %vm1375 = vcmp.eq.f32.partialorder %v1374, 8.507059e+37
        %v1376 = vand.u32 %v1343, 2147483648
        %v1377 = vor.u32 1.1754944e-38, %v1376
        %v1378 = vsel %vm1375, %v1377, %v1373
        %v1379 = vmul.f32 %v1333, %v1378
        %v1380 = vrcp.pop %v1346
        %v1381 = vmul.f32 %v1346, %v1380
        %v1382 = vsub.f32 1.0, %v1381
        %v1383 = vmul.f32 %v1380, %v1382
        %v1384 = vadd.f32 %v1380, %v1383
        %vm1385 = vweird.f32 %v1346
        %vm1386 = vweird.f32 %v1380
        %vm1387 = vmor %vm1385, %vm1386
        %v1388 = vsel %vm1387, %v1380, %v1384
        %v1389 = vand.u32 2147483647, %v1346
        %vm1390 = vcmp.eq.f32.partialorder %v1389, 8.507059e+37
        %v1391 = vand.u32 %v1346, 2147483648
        %v1392 = vor.u32 1.1754944e-38, %v1391
        %v1393 = vsel %vm1390, %v1392, %v1388
        %v1394 = vmul.f32 %v1335, %v1393
        %v1395 = vrcp.pop %v1349
        %v1396 = vmul.f32 %v1349, %v1395
        %v1397 = vsub.f32 1.0, %v1396
        %v1398 = vmul.f32 %v1395, %v1397
        %v1399 = vadd.f32 %v1395, %v1398
        %vm1400 = vweird.f32 %v1349
        %vm1401 = vweird.f32 %v1395
        %vm1402 = vmor %vm1400, %vm1401
        %v1403 = vsel %vm1402, %v1395, %v1399
        %v1404 = vand.u32 2147483647, %v1349
        %vm1405 = vcmp.eq.f32.partialorder %v1404, 8.507059e+37
        %v1406 = vand.u32 %v1349, 2147483648
        %v1407 = vor.u32 1.1754944e-38, %v1406
        %v1408 = vsel %vm1405, %v1407, %v1403
        %v1409 = vmul.f32 %v1337, %v1408
        %v1410 = vpack.c.bf16 %v1364, %v1364
        %v1411 = vpack.c.bf16 %v1379, %v1379
        %v1412 = vpack.c.bf16 %v1394, %v1394
        %v1413 = vpack.c.bf16 %v1409, %v1409
        %v1415 = vsel %vm1226, %v1410, 0
        %vm1417 = vcmask 1043456
        %v1419 = vsel %vm1417, %v1222, 0
        %1421 = vmatpush.bf16.msra.mxu0 0
        %1422 = vmatpush.bf16.msra.mxu0 0
        %1423 = vmatpush.bf16.msra.mxu0 0
        %1424 = vmatpush.bf16.msra.mxu0 0
        %1425 = vmatpush.bf16.msra.mxu0 0
        %1426 = vmatpush.bf16.msra.mxu0 0
        %1427 = vmatpush.bf16.msra.mxu0 0
        %1428 = vmatpush.bf16.msra.mxu0 %v1419
        %1429 = vmatmul.bf16.gmra.mxu0 %v1415
        %v1430 = vpop.f32.mrf.mxu0
        %v1431 = vadd.f32 0.0, %v1430
        %v1432 = vpop.f32.mrf.mxu0
        %1433 = vdwg.mxu0
        %v1435 = vsel %vm1226, %v1411, 0
        %v1438 = vsel %vm1417, %v1223, 0
        %1440 = vmatpush.bf16.msra.mxu0 0
        %1441 = vmatpush.bf16.msra.mxu0 0
        %1442 = vmatpush.bf16.msra.mxu0 0
        %1443 = vmatpush.bf16.msra.mxu0 0
        %1444 = vmatpush.bf16.msra.mxu0 0
        %1445 = vmatpush.bf16.msra.mxu0 0
        %1446 = vmatpush.bf16.msra.mxu0 0
        %1447 = vmatpush.bf16.msra.mxu0 %v1438
        %1448 = vmatmul.bf16.gmra.mxu0 %v1435
        %v1449 = vpop.f32.mrf.mxu0
        %v1450 = vadd.f32 0.0, %v1449
        %v1451 = vpop.f32.mrf.mxu0
        %1452 = vdwg.mxu0
        %v1454 = vsel %vm1226, %v1412, 0
        %v1457 = vsel %vm1417, %v1224, 0
        %1459 = vmatpush.bf16.msra.mxu0 0
        %1460 = vmatpush.bf16.msra.mxu0 0
        %1461 = vmatpush.bf16.msra.mxu0 0
        %1462 = vmatpush.bf16.msra.mxu0 0
        %1463 = vmatpush.bf16.msra.mxu0 0
        %1464 = vmatpush.bf16.msra.mxu0 0
        %1465 = vmatpush.bf16.msra.mxu0 0
        %1466 = vmatpush.bf16.msra.mxu0 %v1457
        %1467 = vmatmul.bf16.gmra.mxu0 %v1454
        %v1468 = vpop.f32.mrf.mxu0
        %v1469 = vadd.f32 0.0, %v1468
        %v1470 = vpop.f32.mrf.mxu0
        %1471 = vdwg.mxu0
        %v1473 = vsel %vm1226, %v1413, 0
        %v1476 = vsel %vm1417, %v1225, 0
        %1478 = vmatpush.bf16.msra.mxu0 0
        %1479 = vmatpush.bf16.msra.mxu0 0
        %1480 = vmatpush.bf16.msra.mxu0 0
        %1481 = vmatpush.bf16.msra.mxu0 0
        %1482 = vmatpush.bf16.msra.mxu0 0
        %1483 = vmatpush.bf16.msra.mxu0 0
        %1484 = vmatpush.bf16.msra.mxu0 0
        %1485 = vmatpush.bf16.msra.mxu0 %v1476
        %1486 = vmatmul.bf16.gmra.mxu0 %v1473
        %v1487 = vpop.f32.mrf.mxu0
        %v1488 = vadd.f32 0.0, %v1487
        %v1489 = vpop.f32.mrf.mxu0
        %1490 = vdwg.mxu0
        %v1491 = vpack.c.bf16 %v1431, %v1431
        %v1492 = vpack.c.bf16 %v1450, %v1450
        %v1493 = vpack.c.bf16 %v1469, %v1469
        %v1494 = vpack.c.bf16 %v1488, %v1488
        %v1495 = vld [vmem:[%s9] sm:$0xf]
        %v1496 = vld [vmem:[%s9 + $0x4] sm:$0xf]
        %v1497 = vld [vmem:[%s9 + $0x8] sm:$0xf]
        %v1498 = vld [vmem:[%s9 + $0xc] sm:$0xf]
        %v1500 = vsel %vm1226, %v1491, 0
        %v1503 = vsel %vm1417, %v1495, 0
        %1505 = vmatpush.bf16.msra.mxu0 0
        %1506 = vmatpush.bf16.msra.mxu0 0
        %1507 = vmatpush.bf16.msra.mxu0 0
        %1508 = vmatpush.bf16.msra.mxu0 0
        %1509 = vmatpush.bf16.msra.mxu0 0
        %1510 = vmatpush.bf16.msra.mxu0 0
        %1511 = vmatpush.bf16.msra.mxu0 0
        %1512 = vmatpush.bf16.msra.mxu0 %v1503
        %1513 = vmatmul.bf16.gmra.mxu0 %v1500
        %v1514 = vpop.f32.mrf.mxu0
        %v1515 = vadd.f32 0.0, %v1514
        %v1516 = vpop.f32.mrf.mxu0
        %1517 = vdwg.mxu0
        %v1519 = vsel %vm1226, %v1492, 0
        %v1522 = vsel %vm1417, %v1496, 0
        %1524 = vmatpush.bf16.msra.mxu0 0
        %1525 = vmatpush.bf16.msra.mxu0 0
        %1526 = vmatpush.bf16.msra.mxu0 0
        %1527 = vmatpush.bf16.msra.mxu0 0
        %1528 = vmatpush.bf16.msra.mxu0 0
        %1529 = vmatpush.bf16.msra.mxu0 0
        %1530 = vmatpush.bf16.msra.mxu0 0
        %1531 = vmatpush.bf16.msra.mxu0 %v1522
        %1532 = vmatmul.bf16.gmra.mxu0 %v1519
        %v1533 = vpop.f32.mrf.mxu0
        %v1534 = vadd.f32 0.0, %v1533
        %v1535 = vpop.f32.mrf.mxu0
        %1536 = vdwg.mxu0
        %v1538 = vsel %vm1226, %v1493, 0
        %v1541 = vsel %vm1417, %v1497, 0
        %1543 = vmatpush.bf16.msra.mxu0 0
        %1544 = vmatpush.bf16.msra.mxu0 0
        %1545 = vmatpush.bf16.msra.mxu0 0
        %1546 = vmatpush.bf16.msra.mxu0 0
        %1547 = vmatpush.bf16.msra.mxu0 0
        %1548 = vmatpush.bf16.msra.mxu0 0
        %1549 = vmatpush.bf16.msra.mxu0 0
        %1550 = vmatpush.bf16.msra.mxu0 %v1541
        %1551 = vmatmul.bf16.gmra.mxu0 %v1538
        %v1552 = vpop.f32.mrf.mxu0
        %v1553 = vadd.f32 0.0, %v1552
        %v1554 = vpop.f32.mrf.mxu0
        %1555 = vdwg.mxu0
        %v1557 = vsel %vm1226, %v1494, 0
        %v1560 = vsel %vm1417, %v1498, 0
        %1562 = vmatpush.bf16.msra.mxu0 0
        %1563 = vmatpush.bf16.msra.mxu0 0
        %1564 = vmatpush.bf16.msra.mxu0 0
        %1565 = vmatpush.bf16.msra.mxu0 0
        %1566 = vmatpush.bf16.msra.mxu0 0
        %1567 = vmatpush.bf16.msra.mxu0 0
        %1568 = vmatpush.bf16.msra.mxu0 0
        %1569 = vmatpush.bf16.msra.mxu0 %v1560
        %1570 = vmatmul.bf16.gmra.mxu0 %v1557
        %v1571 = vpop.f32.mrf.mxu0
        %v1572 = vadd.f32 0.0, %v1571
        %v1573 = vpop.f32.mrf.mxu0
        %1574 = vdwg.mxu0
        %v1575 = vsel %vm773, %v1515, 0.0
        %v1576 = vsel %vm773, %v1534, 0.0
        %v1577 = vadd.f32 %v1575, %v1576
        %v1578 = vsel %vm773, %v1553, 0.0
        %v1579 = vadd.f32 %v1577, %v1578
        %v1580 = vsel %vm773, %v1572, 0.0
        %v1581 = vadd.f32 %v1579, %v1580
        %v1582 = vld [vmem:[%s10] sm:$0x1]
        %v1584 = vperm.slane %v1582, 0
        %v1586 = vadd.f32 %v1581, %v1584
        %v1587 = vadd.f32 %v1586, %v810
        %v1588 = vld [vmem:[%s11] sm:$0x1]
        %v1589 = vld [vmem:[%s12] sm:$0x1]
        %v1590 = vsel %vm773, %v1587, 0.0
        %1591 = vadd.xlane.f32.xlu0 %v1590
        %v1592 = vpop.xlane.xlu0 %1591
        %v1593 = vmul.f32 %v1592, %v783
        %v1594 = vsub.f32 %v1587, %v1593
        %v1595 = vmul.f32 %v1594, %v1594
        %v1596 = vsel %vm773, %v1595, 0.0
        %1597 = vadd.xlane.f32.xlu0 %v1596
        %v1598 = vpop.xlane.xlu0 %1597
        %v1599 = vmul.f32 %v1598, %v783
        %v1600 = vadd.f32 %v1599, 1e-12
        %v1601 = vrsqrt.pop %v1600
        %v1602 = vmul.f32 %v1601, %v1600
        %v1603 = vmul.f32 %v1602, %v1601
        %v1604 = vmul.f32 0.5, %v1603
        %v1605 = vsub.f32 1.5, %v1604
        %v1606 = vmul.f32 %v1601, %v1605
        %vm1607 = vweird.f32 %v1600
        %vm1608 = vweird.f32 %v1601
        %vm1609 = vmor %vm1607, %vm1608
        %v1610 = vsel %vm1609, %v1601, %v1606
        %v1611 = vmul.f32 %v1594, %v1610
        %v1613 = vperm.slane %v1588, 0
        %v1615 = vmul.f32 %v1611, %v1613
        %v1617 = vperm.slane %v1589, 0
        %v1619 = vadd.f32 %v1615, %v1617
        %v1620 = vpack.c.bf16 %v1619, %v1619
        %v1621 = vld [vmem:[%s13] sm:$0xf]
        %v1622 = vld [vmem:[%s13 + $0x4] sm:$0xf]
        %v1623 = vld [vmem:[%s13 + $0x8] sm:$0xf]
        %v1624 = vld [vmem:[%s13 + $0xc] sm:$0xf]
        %v1625 = vld [vmem:[%s14] sm:$0x1]
        %v1627 = vperm.slane %v1625, 0
        %v1633 = vunpack.c.l.b16 %v1621
        %v1634 = vunpack.c.l.b16 %v1622
        %v1635 = vunpack.c.l.b16 %v1623
        %v1636 = vunpack.c.l.b16 %v1624
        %v1637 = vpack.c.b16 %v1634, %v1633
        %v1638 = vpack.c.b16 %v1636, %v1635
        %v1642 = vsel %vm773, %v1620, 0
        %1644 = vmatpush.bf16.msra.mxu0 0
        %1645 = vmatpush.bf16.msra.mxu0 0
        %1646 = vmatpush.bf16.msra.mxu0 0
        %1647 = vmatpush.bf16.msra.mxu0 0
        %1648 = vmatpush.bf16.msra.mxu0 0
        %1649 = vmatpush.bf16.msra.mxu0 0
        %1650 = vmatpush.bf16.msra.mxu0 %v1638
        %1651 = vmatpush.bf16.msra.mxu0 %v1637
        %1652 = vmatmul.bf16.gmra.mxu0 %v1642
        %v1653 = vpop.f32.mrf.mxu0
        %v1654 = vadd.f32 %v1627, %v1653
        %v1655 = vpop.f32.mrf.mxu0
        %1656 = vdwg.mxu0
        %v1657 = vmul.f32 %v1654, 0.5
        %v1658 = vmul.f32 %v1654, 0.044715
        %v1659 = vmul.f32 %v1658, %v1654
        %v1660 = vmul.f32 %v1659, %v1654
        %v1661 = vadd.f32 %v1654, %v1660
        %v1662 = vmul.f32 %v1661, 0.7978846
        %v1663 = vtanh.pop %v1662
        %v1664 = vadd.f32 %v1663, 1.0
        %v1665 = vmul.f32 %v1657, %v1664
        %v1666 = vpack.c.bf16 %v1665, %v1665
        %v1667 = vld [vmem:[%s15] sm:$0xf]
        %v1668 = vld [vmem:[%s15 + $0x4] sm:$0xf]
        %v1669 = vld [vmem:[%s15 + $0x8] sm:$0xf]
        %v1670 = vld [vmem:[%s15 + $0xc] sm:$0xf]
        %v1671 = vld [vmem:[%s15 + $0x10] sm:$0xf]
        %v1672 = vld [vmem:[%s15 + $0x14] sm:$0xf]
        %v1673 = vld [vmem:[%s15 + $0x18] sm:$0xf]
        %v1674 = vld [vmem:[%s15 + $0x1c] sm:$0xf]
        %v1675 = vld [vmem:[%s16] sm:$0x1]
        %v1677 = vperm.slane %v1675, 0
        %v1687 = vunpack.c.l.b16 %v1667
        %v1688 = vunpack.c.l.b16 %v1668
        %v1689 = vunpack.c.l.b16 %v1669
        %v1690 = vunpack.c.l.b16 %v1670
        %v1691 = vunpack.c.l.b16 %v1671
        %v1692 = vunpack.c.l.b16 %v1672
        %v1693 = vunpack.c.l.b16 %v1673
        %v1694 = vunpack.c.l.b16 %v1674
        %v1695 = vpack.c.b16 %v1688, %v1687
        %v1696 = vpack.c.b16 %v1690, %v1689
        %v1697 = vpack.c.b16 %v1692, %v1691
        %v1698 = vpack.c.b16 %v1694, %v1693
        %vm1703 = vcmask 523264
        %v1705 = vsel %vm1703, %v1666, 0
        %1707 = vmatpush.bf16.msra.mxu0 0
        %1708 = vmatpush.bf16.msra.mxu0 0
        %1709 = vmatpush.bf16.msra.mxu0 0
        %1710 = vmatpush.bf16.msra.mxu0 0
        %1711 = vmatpush.bf16.msra.mxu0 %v1698
        %1712 = vmatpush.bf16.msra.mxu0 %v1697
        %1713 = vmatpush.bf16.msra.mxu0 %v1696
        %1714 = vmatpush.bf16.msra.mxu0 %v1695
        %1715 = vmatmul.bf16.gmra.mxu0 %v1705
        %v1716 = vpop.f32.mrf.mxu0
        %v1717 = vadd.f32 %v1677, %v1716
        %v1718 = vpop.f32.mrf.mxu0
        %1719 = vdwg.mxu0
        %v1720 = vadd.f32 %v1717, %v1619
        %v1721 = vld [vmem:[%s17] sm:$0x1]
        %v1722 = vld [vmem:[%s18] sm:$0x1]
        %v1723 = vsel %vm773, %v1720, 0.0
        %1724 = vadd.xlane.f32.xlu0 %v1723
        %v1725 = vpop.xlane.xlu0 %1724
        %v1726 = vmul.f32 %v1725, %v783
        %v1727 = vsub.f32 %v1720, %v1726
        %v1728 = vmul.f32 %v1727, %v1727
        %v1729 = vsel %vm773, %v1728, 0.0
        %1730 = vadd.xlane.f32.xlu0 %v1729
        %v1731 = vpop.xlane.xlu0 %1730
        %v1732 = vmul.f32 %v1731, %v783
        %v1733 = vadd.f32 %v1732, 1e-12
        %v1734 = vrsqrt.pop %v1733
        %v1735 = vmul.f32 %v1734, %v1733
        %v1736 = vmul.f32 %v1735, %v1734
        %v1737 = vmul.f32 0.5, %v1736
        %v1738 = vsub.f32 1.5, %v1737
        %v1739 = vmul.f32 %v1734, %v1738
        %vm1740 = vweird.f32 %v1733
        %vm1741 = vweird.f32 %v1734
        %vm1742 = vmor %vm1740, %vm1741
        %v1743 = vsel %vm1742, %v1734, %v1739
        %v1744 = vmul.f32 %v1727, %v1743
        %v1746 = vperm.slane %v1721, 0
        %v1748 = vmul.f32 %v1744, %v1746
        %v1750 = vperm.slane %v1722, 0
        %v1752 = vadd.f32 %v1748, %v1750
        %v1753 = vpack.c.bf16 %v1752, %v1752
        %s1754 = scalar_lea.vmem %s7, 192
        %v1755 = vld [vmem:[%s1754] sm:$0xf]
        %v1756 = vld [vmem:[%s1754 + $0x4] sm:$0xf]
        %v1757 = vld [vmem:[%s1754 + $0x8] sm:$0xf]
        %v1758 = vld [vmem:[%s1754 + $0xc] sm:$0xf]
        %v1759 = vld [vmem:[%s1754 + $0x10] sm:$0xf]
        %v1760 = vld [vmem:[%s1754 + $0x14] sm:$0xf]
        %v1761 = vld [vmem:[%s1754 + $0x18] sm:$0xf]
        %v1762 = vld [vmem:[%s1754 + $0x1c] sm:$0xf]
        %v1763 = vld [vmem:[%s1754 + $0x20] sm:$0xf]
        %v1764 = vld [vmem:[%s1754 + $0x24] sm:$0xf]
        %v1765 = vld [vmem:[%s1754 + $0x28] sm:$0xf]
        %v1766 = vld [vmem:[%s1754 + $0x2c] sm:$0xf]
        %v1767 = vld [vmem:[%s1754 + $0x30] sm:$0xf]
        %v1768 = vld [vmem:[%s1754 + $0x34] sm:$0xf]
        %v1769 = vld [vmem:[%s1754 + $0x38] sm:$0xf]
        %v1770 = vld [vmem:[%s1754 + $0x3c] sm:$0xf]
        %v1771 = vld [vmem:[%s1754 + $0x40] sm:$0xf]
        %v1772 = vld [vmem:[%s1754 + $0x44] sm:$0xf]
        %v1773 = vld [vmem:[%s1754 + $0x48] sm:$0xf]
        %v1774 = vld [vmem:[%s1754 + $0x4c] sm:$0xf]
        %v1775 = vld [vmem:[%s1754 + $0x50] sm:$0xf]
        %v1776 = vld [vmem:[%s1754 + $0x54] sm:$0xf]
        %v1777 = vld [vmem:[%s1754 + $0x58] sm:$0xf]
        %v1778 = vld [vmem:[%s1754 + $0x5c] sm:$0xf]
        %v1779 = vld [vmem:[%s1754 + $0x60] sm:$0xf]
        %v1780 = vld [vmem:[%s1754 + $0x64] sm:$0xf]
        %v1781 = vld [vmem:[%s1754 + $0x68] sm:$0xf]
        %v1782 = vld [vmem:[%s1754 + $0x6c] sm:$0xf]
        %v1783 = vld [vmem:[%s1754 + $0x70] sm:$0xf]
        %v1784 = vld [vmem:[%s1754 + $0x74] sm:$0xf]
        %v1785 = vld [vmem:[%s1754 + $0x78] sm:$0xf]
        %v1786 = vld [vmem:[%s1754 + $0x7c] sm:$0xf]
        %v1787 = vld [vmem:[%s1754 + $0x80] sm:$0xf]
        %v1788 = vld [vmem:[%s1754 + $0x84] sm:$0xf]
        %v1789 = vld [vmem:[%s1754 + $0x88] sm:$0xf]
        %v1790 = vld [vmem:[%s1754 + $0x8c] sm:$0xf]
        %v1791 = vld [vmem:[%s1754 + $0x90] sm:$0xf]
        %v1792 = vld [vmem:[%s1754 + $0x94] sm:$0xf]
        %v1793 = vld [vmem:[%s1754 + $0x98] sm:$0xf]
        %v1794 = vld [vmem:[%s1754 + $0x9c] sm:$0xf]
        %v1795 = vld [vmem:[%s1754 + $0xa0] sm:$0xf]
        %v1796 = vld [vmem:[%s1754 + $0xa4] sm:$0xf]
        %v1797 = vld [vmem:[%s1754 + $0xa8] sm:$0xf]
        %v1798 = vld [vmem:[%s1754 + $0xac] sm:$0xf]
        %v1799 = vld [vmem:[%s1754 + $0xb0] sm:$0xf]
        %v1800 = vld [vmem:[%s1754 + $0xb4] sm:$0xf]
        %v1801 = vld [vmem:[%s1754 + $0xb8] sm:$0xf]
        %v1802 = vld [vmem:[%s1754 + $0xbc] sm:$0xf]
        %s1803 = scalar_lea.vmem %s8, 12
        %v1804 = vld [vmem:[%s1803] sm:$0x1]
        %v1805 = vld [vmem:[%s1803 + $0x1] sm:$0x1]
        %v1806 = vld [vmem:[%s1803 + $0x2] sm:$0x1]
        %v1807 = vld [vmem:[%s1803 + $0x3] sm:$0x1]
        %v1808 = vld [vmem:[%s1803 + $0x4] sm:$0x1]
        %v1809 = vld [vmem:[%s1803 + $0x5] sm:$0x1]
        %v1810 = vld [vmem:[%s1803 + $0x6] sm:$0x1]
        %v1811 = vld [vmem:[%s1803 + $0x7] sm:$0x1]
        %v1812 = vld [vmem:[%s1803 + $0x8] sm:$0x1]
        %v1813 = vld [vmem:[%s1803 + $0x9] sm:$0x1]
        %v1814 = vld [vmem:[%s1803 + $0xa] sm:$0x1]
        %v1815 = vld [vmem:[%s1803 + $0xb] sm:$0x1]
        %v1828 = vperm.slane %v1804, 0
        %v1829 = vperm.slane %v1805, 0
        %v1830 = vperm.slane %v1806, 0
        %v1831 = vperm.slane %v1807, 0
        %v1832 = vperm.slane %v1808, 0
        %v1833 = vperm.slane %v1809, 0
        %v1834 = vperm.slane %v1810, 0
        %v1835 = vperm.slane %v1811, 0
        %v1836 = vperm.slane %v1812, 0
        %v1837 = vperm.slane %v1813, 0
        %v1838 = vperm.slane %v1814, 0
        %v1839 = vperm.slane %v1815, 0
        %v1856 = vunpack.c.l.b16 %v1755
        %v1857 = vunpack.c.l.b16 %v1756
        %v1858 = vunpack.c.l.b16 %v1757
        %v1859 = vunpack.c.l.b16 %v1758
        %v1860 = vpack.c.b16 %v1857, %v1856
        %v1861 = vpack.c.b16 %v1859, %v1858
        %v1865 = vsel %vm773, %v1753, 0
        %1867 = vmatpush.bf16.msra.mxu0 0
        %1868 = vmatpush.bf16.msra.mxu0 0
        %1869 = vmatpush.bf16.msra.mxu0 0
        %1870 = vmatpush.bf16.msra.mxu0 0
        %1871 = vmatpush.bf16.msra.mxu0 0
        %1872 = vmatpush.bf16.msra.mxu0 0
        %1873 = vmatpush.bf16.msra.mxu0 %v1861
        %1874 = vmatpush.bf16.msra.mxu0 %v1860
        %1875 = vmatmul.bf16.gmra.mxu0 %v1865
        %v1876 = vpop.f32.mrf.mxu0
        %v1877 = vadd.f32 %v1828, %v1876
        %v1878 = vpop.f32.mrf.mxu0
        %1879 = vdwg.mxu0
        %v1884 = vunpack.c.l.b16 %v1759
        %v1885 = vunpack.c.l.b16 %v1760
        %v1886 = vunpack.c.l.b16 %v1761
        %v1887 = vunpack.c.l.b16 %v1762
        %v1888 = vpack.c.b16 %v1885, %v1884
        %v1889 = vpack.c.b16 %v1887, %v1886
        %1892 = vmatpush.bf16.msra.mxu0 0
        %1893 = vmatpush.bf16.msra.mxu0 0
        %1894 = vmatpush.bf16.msra.mxu0 0
        %1895 = vmatpush.bf16.msra.mxu0 0
        %1896 = vmatpush.bf16.msra.mxu0 0
        %1897 = vmatpush.bf16.msra.mxu0 0
        %1898 = vmatpush.bf16.msra.mxu0 %v1889
        %1899 = vmatpush.bf16.msra.mxu0 %v1888
        %1900 = vmatmul.bf16.gmra.mxu0 %v1865
        %v1901 = vpop.f32.mrf.mxu0
        %v1902 = vadd.f32 %v1829, %v1901
        %v1903 = vpop.f32.mrf.mxu0
        %1904 = vdwg.mxu0
        %v1909 = vunpack.c.l.b16 %v1763
        %v1910 = vunpack.c.l.b16 %v1764
        %v1911 = vunpack.c.l.b16 %v1765
        %v1912 = vunpack.c.l.b16 %v1766
        %v1913 = vpack.c.b16 %v1910, %v1909
        %v1914 = vpack.c.b16 %v1912, %v1911
        %1917 = vmatpush.bf16.msra.mxu0 0
        %1918 = vmatpush.bf16.msra.mxu0 0
        %1919 = vmatpush.bf16.msra.mxu0 0
        %1920 = vmatpush.bf16.msra.mxu0 0
        %1921 = vmatpush.bf16.msra.mxu0 0
        %1922 = vmatpush.bf16.msra.mxu0 0
        %1923 = vmatpush.bf16.msra.mxu0 %v1914
        %1924 = vmatpush.bf16.msra.mxu0 %v1913
        %1925 = vmatmul.bf16.gmra.mxu0 %v1865
        %v1926 = vpop.f32.mrf.mxu0
        %v1927 = vadd.f32 %v1830, %v1926
        %v1928 = vpop.f32.mrf.mxu0
        %1929 = vdwg.mxu0
        %v1934 = vunpack.c.l.b16 %v1767
        %v1935 = vunpack.c.l.b16 %v1768
        %v1936 = vunpack.c.l.b16 %v1769
        %v1937 = vunpack.c.l.b16 %v1770
        %v1938 = vpack.c.b16 %v1935, %v1934
        %v1939 = vpack.c.b16 %v1937, %v1936
        %1942 = vmatpush.bf16.msra.mxu0 0
        %1943 = vmatpush.bf16.msra.mxu0 0
        %1944 = vmatpush.bf16.msra.mxu0 0
        %1945 = vmatpush.bf16.msra.mxu0 0
        %1946 = vmatpush.bf16.msra.mxu0 0
        %1947 = vmatpush.bf16.msra.mxu0 0
        %1948 = vmatpush.bf16.msra.mxu0 %v1939
        %1949 = vmatpush.bf16.msra.mxu0 %v1938
        %1950 = vmatmul.bf16.gmra.mxu0 %v1865
        %v1951 = vpop.f32.mrf.mxu0
        %v1952 = vadd.f32 %v1831, %v1951
        %v1953 = vpop.f32.mrf.mxu0
        %1954 = vdwg.mxu0
        %v1959 = vunpack.c.l.b16 %v1771
        %v1960 = vunpack.c.l.b16 %v1772
        %v1961 = vunpack.c.l.b16 %v1773
        %v1962 = vunpack.c.l.b16 %v1774
        %v1963 = vpack.c.b16 %v1960, %v1959
        %v1964 = vpack.c.b16 %v1962, %v1961
        %1967 = vmatpush.bf16.msra.mxu0 0
        %1968 = vmatpush.bf16.msra.mxu0 0
        %1969 = vmatpush.bf16.msra.mxu0 0
        %1970 = vmatpush.bf16.msra.mxu0 0
        %1971 = vmatpush.bf16.msra.mxu0 0
        %1972 = vmatpush.bf16.msra.mxu0 0
        %1973 = vmatpush.bf16.msra.mxu0 %v1964
        %1974 = vmatpush.bf16.msra.mxu0 %v1963
        %1975 = vmatmul.bf16.gmra.mxu0 %v1865
        %v1976 = vpop.f32.mrf.mxu0
        %v1977 = vadd.f32 %v1832, %v1976
        %v1978 = vpop.f32.mrf.mxu0
        %1979 = vdwg.mxu0
        %v1984 = vunpack.c.l.b16 %v1775
        %v1985 = vunpack.c.l.b16 %v1776
        %v1986 = vunpack.c.l.b16 %v1777
        %v1987 = vunpack.c.l.b16 %v1778
        %v1988 = vpack.c.b16 %v1985, %v1984
        %v1989 = vpack.c.b16 %v1987, %v1986
        %1992 = vmatpush.bf16.msra.mxu0 0
        %1993 = vmatpush.bf16.msra.mxu0 0
        %1994 = vmatpush.bf16.msra.mxu0 0
        %1995 = vmatpush.bf16.msra.mxu0 0
        %1996 = vmatpush.bf16.msra.mxu0 0
        %1997 = vmatpush.bf16.msra.mxu0 0
        %1998 = vmatpush.bf16.msra.mxu0 %v1989
        %1999 = vmatpush.bf16.msra.mxu0 %v1988
        %2000 = vmatmul.bf16.gmra.mxu0 %v1865
        %v2001 = vpop.f32.mrf.mxu0
        %v2002 = vadd.f32 %v1833, %v2001
        %v2003 = vpop.f32.mrf.mxu0
        %2004 = vdwg.mxu0
        %v2009 = vunpack.c.l.b16 %v1779
        %v2010 = vunpack.c.l.b16 %v1780
        %v2011 = vunpack.c.l.b16 %v1781
        %v2012 = vunpack.c.l.b16 %v1782
        %v2013 = vpack.c.b16 %v2010, %v2009
        %v2014 = vpack.c.b16 %v2012, %v2011
        %2017 = vmatpush.bf16.msra.mxu0 0
        %2018 = vmatpush.bf16.msra.mxu0 0
        %2019 = vmatpush.bf16.msra.mxu0 0
        %2020 = vmatpush.bf16.msra.mxu0 0
        %2021 = vmatpush.bf16.msra.mxu0 0
        %2022 = vmatpush.bf16.msra.mxu0 0
        %2023 = vmatpush.bf16.msra.mxu0 %v2014
        %2024 = vmatpush.bf16.msra.mxu0 %v2013
        %2025 = vmatmul.bf16.gmra.mxu0 %v1865
        %v2026 = vpop.f32.mrf.mxu0
        %v2027 = vadd.f32 %v1834, %v2026
        %v2028 = vpop.f32.mrf.mxu0
        %2029 = vdwg.mxu0
        %v2034 = vunpack.c.l.b16 %v1783
        %v2035 = vunpack.c.l.b16 %v1784
        %v2036 = vunpack.c.l.b16 %v1785
        %v2037 = vunpack.c.l.b16 %v1786
        %v2038 = vpack.c.b16 %v2035, %v2034
        %v2039 = vpack.c.b16 %v2037, %v2036
        %2042 = vmatpush.bf16.msra.mxu0 0
        %2043 = vmatpush.bf16.msra.mxu0 0
        %2044 = vmatpush.bf16.msra.mxu0 0
        %2045 = vmatpush.bf16.msra.mxu0 0
        %2046 = vmatpush.bf16.msra.mxu0 0
        %2047 = vmatpush.bf16.msra.mxu0 0
        %2048 = vmatpush.bf16.msra.mxu0 %v2039
        %2049 = vmatpush.bf16.msra.mxu0 %v2038
        %2050 = vmatmul.bf16.gmra.mxu0 %v1865
        %v2051 = vpop.f32.mrf.mxu0
        %v2052 = vadd.f32 %v1835, %v2051
        %v2053 = vpop.f32.mrf.mxu0
        %2054 = vdwg.mxu0
        %v2059 = vunpack.c.l.b16 %v1787
        %v2060 = vunpack.c.l.b16 %v1788
        %v2061 = vunpack.c.l.b16 %v1789
        %v2062 = vunpack.c.l.b16 %v1790
        %v2063 = vpack.c.b16 %v2060, %v2059
        %v2064 = vpack.c.b16 %v2062, %v2061
        %2067 = vmatpush.bf16.msra.mxu0 0
        %2068 = vmatpush.bf16.msra.mxu0 0
        %2069 = vmatpush.bf16.msra.mxu0 0
        %2070 = vmatpush.bf16.msra.mxu0 0
        %2071 = vmatpush.bf16.msra.mxu0 0
        %2072 = vmatpush.bf16.msra.mxu0 0
        %2073 = vmatpush.bf16.msra.mxu0 %v2064
        %2074 = vmatpush.bf16.msra.mxu0 %v2063
        %2075 = vmatmul.bf16.gmra.mxu0 %v1865
        %v2076 = vpop.f32.mrf.mxu0
        %v2077 = vadd.f32 %v1836, %v2076
        %v2078 = vpop.f32.mrf.mxu0
        %2079 = vdwg.mxu0
        %v2084 = vunpack.c.l.b16 %v1791
        %v2085 = vunpack.c.l.b16 %v1792
        %v2086 = vunpack.c.l.b16 %v1793
        %v2087 = vunpack.c.l.b16 %v1794
        %v2088 = vpack.c.b16 %v2085, %v2084
        %v2089 = vpack.c.b16 %v2087, %v2086
        %2092 = vmatpush.bf16.msra.mxu0 0
        %2093 = vmatpush.bf16.msra.mxu0 0
        %2094 = vmatpush.bf16.msra.mxu0 0
        %2095 = vmatpush.bf16.msra.mxu0 0
        %2096 = vmatpush.bf16.msra.mxu0 0
        %2097 = vmatpush.bf16.msra.mxu0 0
        %2098 = vmatpush.bf16.msra.mxu0 %v2089
        %2099 = vmatpush.bf16.msra.mxu0 %v2088
        %2100 = vmatmul.bf16.gmra.mxu0 %v1865
        %v2101 = vpop.f32.mrf.mxu0
        %v2102 = vadd.f32 %v1837, %v2101
        %v2103 = vpop.f32.mrf.mxu0
        %2104 = vdwg.mxu0
        %v2109 = vunpack.c.l.b16 %v1795
        %v2110 = vunpack.c.l.b16 %v1796
        %v2111 = vunpack.c.l.b16 %v1797
        %v2112 = vunpack.c.l.b16 %v1798
        %v2113 = vpack.c.b16 %v2110, %v2109
        %v2114 = vpack.c.b16 %v2112, %v2111
        %2117 = vmatpush.bf16.msra.mxu0 0
        %2118 = vmatpush.bf16.msra.mxu0 0
        %2119 = vmatpush.bf16.msra.mxu0 0
        %2120 = vmatpush.bf16.msra.mxu0 0
        %2121 = vmatpush.bf16.msra.mxu0 0
        %2122 = vmatpush.bf16.msra.mxu0 0
        %2123 = vmatpush.bf16.msra.mxu0 %v2114
        %2124 = vmatpush.bf16.msra.mxu0 %v2113
        %2125 = vmatmul.bf16.gmra.mxu0 %v1865
        %v2126 = vpop.f32.mrf.mxu0
        %v2127 = vadd.f32 %v1838, %v2126
        %v2128 = vpop.f32.mrf.mxu0
        %2129 = vdwg.mxu0
        %v2134 = vunpack.c.l.b16 %v1799
        %v2135 = vunpack.c.l.b16 %v1800
        %v2136 = vunpack.c.l.b16 %v1801
        %v2137 = vunpack.c.l.b16 %v1802
        %v2138 = vpack.c.b16 %v2135, %v2134
        %v2139 = vpack.c.b16 %v2137, %v2136
        %2142 = vmatpush.bf16.msra.mxu0 0
        %2143 = vmatpush.bf16.msra.mxu0 0
        %2144 = vmatpush.bf16.msra.mxu0 0
        %2145 = vmatpush.bf16.msra.mxu0 0
        %2146 = vmatpush.bf16.msra.mxu0 0
        %2147 = vmatpush.bf16.msra.mxu0 0
        %2148 = vmatpush.bf16.msra.mxu0 %v2139
        %2149 = vmatpush.bf16.msra.mxu0 %v2138
        %2150 = vmatmul.bf16.gmra.mxu0 %v1865
        %v2151 = vpop.f32.mrf.mxu0
        %v2152 = vadd.f32 %v1839, %v2151
        %v2153 = vpop.f32.mrf.mxu0
        %2154 = vdwg.mxu0
        %v2155 = vpack.c.bf16 %v1877, %v1877
        %v2156 = vpack.c.bf16 %v1902, %v1902
        %v2157 = vpack.c.bf16 %v1927, %v1927
        %v2158 = vpack.c.bf16 %v1952, %v1952
        %v2159 = vpack.c.bf16 %v1977, %v1977
        %v2160 = vpack.c.bf16 %v2002, %v2002
        %v2161 = vpack.c.bf16 %v2027, %v2027
        %v2162 = vpack.c.bf16 %v2052, %v2052
        %v2163 = vpack.c.bf16 %v2077, %v2077
        %v2164 = vpack.c.bf16 %v2102, %v2102
        %v2165 = vpack.c.bf16 %v2127, %v2127
        %v2166 = vpack.c.bf16 %v2152, %v2152
        %v2168 = vsel %vm1226, %v2155, 0
        %v2171 = vsel %vm1226, %v2159, 0
        %2173 = vmatpush.bf16.xpose.msra.mxu0 0
        %2174 = vmatpush.bf16.xpose.msra.mxu0 0
        %2175 = vmatpush.bf16.xpose.msra.mxu0 0
        %2176 = vmatpush.bf16.xpose.msra.mxu0 0
        %2177 = vmatpush.bf16.xpose.msra.mxu0 0
        %2178 = vmatpush.bf16.xpose.msra.mxu0 0
        %2179 = vmatpush.bf16.xpose.msra.mxu0 0
        %2180 = vmatpush.bf16.xpose.msra.mxu0 %v2171
        %2181 = vmatmul.bf16.gmra.mxu0 %v2168
        %v2182 = vpop.f32.mrf.mxu0
        %v2183 = vadd.f32 0.0, %v2182
        %v2184 = vpop.f32.mrf.mxu0
        %2185 = vdwg.mxu0
        %v2187 = vsel %vm1226, %v2156, 0
        %v2190 = vsel %vm1226, %v2160, 0
        %2192 = vmatpush.bf16.xpose.msra.mxu0 0
        %2193 = vmatpush.bf16.xpose.msra.mxu0 0
        %2194 = vmatpush.bf16.xpose.msra.mxu0 0
        %2195 = vmatpush.bf16.xpose.msra.mxu0 0
        %2196 = vmatpush.bf16.xpose.msra.mxu0 0
        %2197 = vmatpush.bf16.xpose.msra.mxu0 0
        %2198 = vmatpush.bf16.xpose.msra.mxu0 0
        %2199 = vmatpush.bf16.xpose.msra.mxu0 %v2190
        %2200 = vmatmul.bf16.gmra.mxu0 %v2187
        %v2201 = vpop.f32.mrf.mxu0
        %v2202 = vadd.f32 0.0, %v2201
        %v2203 = vpop.f32.mrf.mxu0
        %2204 = vdwg.mxu0
        %v2206 = vsel %vm1226, %v2157, 0
        %v2209 = vsel %vm1226, %v2161, 0
        %2211 = vmatpush.bf16.xpose.msra.mxu0 0
        %2212 = vmatpush.bf16.xpose.msra.mxu0 0
        %2213 = vmatpush.bf16.xpose.msra.mxu0 0
        %2214 = vmatpush.bf16.xpose.msra.mxu0 0
        %2215 = vmatpush.bf16.xpose.msra.mxu0 0
        %2216 = vmatpush.bf16.xpose.msra.mxu0 0
        %2217 = vmatpush.bf16.xpose.msra.mxu0 0
        %2218 = vmatpush.bf16.xpose.msra.mxu0 %v2209
        %2219 = vmatmul.bf16.gmra.mxu0 %v2206
        %v2220 = vpop.f32.mrf.mxu0
        %v2221 = vadd.f32 0.0, %v2220
        %v2222 = vpop.f32.mrf.mxu0
        %2223 = vdwg.mxu0
        %v2225 = vsel %vm1226, %v2158, 0
        %v2228 = vsel %vm1226, %v2162, 0
        %2230 = vmatpush.bf16.xpose.msra.mxu0 0
        %2231 = vmatpush.bf16.xpose.msra.mxu0 0
        %2232 = vmatpush.bf16.xpose.msra.mxu0 0
        %2233 = vmatpush.bf16.xpose.msra.mxu0 0
        %2234 = vmatpush.bf16.xpose.msra.mxu0 0
        %2235 = vmatpush.bf16.xpose.msra.mxu0 0
        %2236 = vmatpush.bf16.xpose.msra.mxu0 0
        %2237 = vmatpush.bf16.xpose.msra.mxu0 %v2228
        %2238 = vmatmul.bf16.gmra.mxu0 %v2225
        %v2239 = vpop.f32.mrf.mxu0
        %v2240 = vadd.f32 0.0, %v2239
        %v2241 = vpop.f32.mrf.mxu0
        %2242 = vdwg.mxu0
        %v2243 = vmul.f32 %v2183, 0.35355338
        %v2244 = vmul.f32 %v2202, 0.35355338
        %v2245 = vmul.f32 %v2221, 0.35355338
        %v2246 = vmul.f32 %v2240, 0.35355338
        %v2247 = vadd.f32 %v2243, %v1308
        %v2248 = vadd.f32 %v2244, %v1308
        %v2249 = vadd.f32 %v2245, %v1308
        %v2250 = vadd.f32 %v2246, %v1308
        %v2251 = vsel %vm1226, %v2247, -inf
        %2252 = vmax.xlane.f32.xlu0 %v2251
        %v2253 = vpop.xlane.xlu0 %2252
        %v2254 = vsel %vm1226, %v2248, -inf
        %2255 = vmax.xlane.f32.xlu0 %v2254
        %v2256 = vpop.xlane.xlu0 %2255
        %v2257 = vsel %vm1226, %v2249, -inf
        %2258 = vmax.xlane.f32.xlu0 %v2257
        %v2259 = vpop.xlane.xlu0 %2258
        %v2260 = vsel %vm1226, %v2250, -inf
        %2261 = vmax.xlane.f32.xlu0 %v2260
        %v2262 = vpop.xlane.xlu0 %2261
        %v2263 = vsub.f32 %v2247, %v2253
        %v2264 = vsub.f32 %v2248, %v2256
        %v2265 = vsub.f32 %v2249, %v2259
        %v2266 = vsub.f32 %v2250, %v2262
        %v2267 = vmul.f32 %v2263, 1.442695
        %v2268 = vpow.pop %v2267
        %v2269 = vmul.f32 %v2264, 1.442695
        %v2270 = vpow.pop %v2269
        %v2271 = vmul.f32 %v2265, 1.442695
        %v2272 = vpow.pop %v2271
        %v2273 = vmul.f32 %v2266, 1.442695
        %v2274 = vpow.pop %v2273
        %v2275 = vsel %vm1226, %v2268, 0.0
        %2276 = vadd.xlane.f32.xlu0 %v2275
        %v2277 = vpop.xlane.xlu0 %2276
        %v2278 = vsel %vm1226, %v2270, 0.0
        %2279 = vadd.xlane.f32.xlu0 %v2278
        %v2280 = vpop.xlane.xlu0 %2279
        %v2281 = vsel %vm1226, %v2272, 0.0
        %2282 = vadd.xlane.f32.xlu0 %v2281
        %v2283 = vpop.xlane.xlu0 %2282
        %v2284 = vsel %vm1226, %v2274, 0.0
        %2285 = vadd.xlane.f32.xlu0 %v2284
        %v2286 = vpop.xlane.xlu0 %2285
        %v2287 = vrcp.pop %v2277
        %v2288 = vmul.f32 %v2277, %v2287
        %v2289 = vsub.f32 1.0, %v2288
        %v2290 = vmul.f32 %v2287, %v2289
        %v2291 = vadd.f32 %v2287, %v2290
        %vm2292 = vweird.f32 %v2277
        %vm2293 = vweird.f32 %v2287
        %vm2294 = vmor %vm2292, %vm2293
        %v2295 = vsel %vm2294, %v2287, %v2291
        %v2296 = vand.u32 2147483647, %v2277
        %vm2297 = vcmp.eq.f32.partialorder %v2296, 8.507059e+37
        %v2298 = vand.u32 %v2277, 2147483648
        %v2299 = vor.u32 1.1754944e-38, %v2298
        %v2300 = vsel %vm2297, %v2299, %v2295
        %v2301 = vmul.f32 %v2268, %v2300
        %v2302 = vrcp.pop %v2280
        %v2303 = vmul.f32 %v2280, %v2302
        %v2304 = vsub.f32 1.0, %v2303
        %v2305 = vmul.f32 %v2302, %v2304
        %v2306 = vadd.f32 %v2302, %v2305
        %vm2307 = vweird.f32 %v2280
        %vm2308 = vweird.f32 %v2302
        %vm2309 = vmor %vm2307, %vm2308
        %v2310 = vsel %vm2309, %v2302, %v2306
        %v2311 = vand.u32 2147483647, %v2280
        %vm2312 = vcmp.eq.f32.partialorder %v2311, 8.507059e+37
        %v2313 = vand.u32 %v2280, 2147483648
        %v2314 = vor.u32 1.1754944e-38, %v2313
        %v2315 = vsel %vm2312, %v2314, %v2310
        %v2316 = vmul.f32 %v2270, %v2315
        %v2317 = vrcp.pop %v2283
        %v2318 = vmul.f32 %v2283, %v2317
        %v2319 = vsub.f32 1.0, %v2318
        %v2320 = vmul.f32 %v2317, %v2319
        %v2321 = vadd.f32 %v2317, %v2320
        %vm2322 = vweird.f32 %v2283
        %vm2323 = vweird.f32 %v2317
        %vm2324 = vmor %vm2322, %vm2323
        %v2325 = vsel %vm2324, %v2317, %v2321
        %v2326 = vand.u32 2147483647, %v2283
        %vm2327 = vcmp.eq.f32.partialorder %v2326, 8.507059e+37
        %v2328 = vand.u32 %v2283, 2147483648
        %v2329 = vor.u32 1.1754944e-38, %v2328
        %v2330 = vsel %vm2327, %v2329, %v2325
        %v2331 = vmul.f32 %v2272, %v2330
        %v2332 = vrcp.pop %v2286
        %v2333 = vmul.f32 %v2286, %v2332
        %v2334 = vsub.f32 1.0, %v2333
        %v2335 = vmul.f32 %v2332, %v2334
        %v2336 = vadd.f32 %v2332, %v2335
        %vm2337 = vweird.f32 %v2286
        %vm2338 = vweird.f32 %v2332
        %vm2339 = vmor %vm2337, %vm2338
        %v2340 = vsel %vm2339, %v2332, %v2336
        %v2341 = vand.u32 2147483647, %v2286
        %vm2342 = vcmp.eq.f32.partialorder %v2341, 8.507059e+37
        %v2343 = vand.u32 %v2286, 2147483648
        %v2344 = vor.u32 1.1754944e-38, %v2343
        %v2345 = vsel %vm2342, %v2344, %v2340
        %v2346 = vmul.f32 %v2274, %v2345
        %v2347 = vpack.c.bf16 %v2301, %v2301
        %v2348 = vpack.c.bf16 %v2316, %v2316
        %v2349 = vpack.c.bf16 %v2331, %v2331
        %v2350 = vpack.c.bf16 %v2346, %v2346
        %v2352 = vsel %vm1226, %v2347, 0
        %v2355 = vsel %vm1417, %v2163, 0
        %2357 = vmatpush.bf16.msra.mxu0 0
        %2358 = vmatpush.bf16.msra.mxu0 0
        %2359 = vmatpush.bf16.msra.mxu0 0
        %2360 = vmatpush.bf16.msra.mxu0 0
        %2361 = vmatpush.bf16.msra.mxu0 0
        %2362 = vmatpush.bf16.msra.mxu0 0
        %2363 = vmatpush.bf16.msra.mxu0 0
        %2364 = vmatpush.bf16.msra.mxu0 %v2355
        %2365 = vmatmul.bf16.gmra.mxu0 %v2352
        %v2366 = vpop.f32.mrf.mxu0
        %v2367 = vadd.f32 0.0, %v2366
        %v2368 = vpop.f32.mrf.mxu0
        %2369 = vdwg.mxu0
        %v2371 = vsel %vm1226, %v2348, 0
        %v2374 = vsel %vm1417, %v2164, 0
        %2376 = vmatpush.bf16.msra.mxu0 0
        %2377 = vmatpush.bf16.msra.mxu0 0
        %2378 = vmatpush.bf16.msra.mxu0 0
        %2379 = vmatpush.bf16.msra.mxu0 0
        %2380 = vmatpush.bf16.msra.mxu0 0
        %2381 = vmatpush.bf16.msra.mxu0 0
        %2382 = vmatpush.bf16.msra.mxu0 0
        %2383 = vmatpush.bf16.msra.mxu0 %v2374
        %2384 = vmatmul.bf16.gmra.mxu0 %v2371
        %v2385 = vpop.f32.mrf.mxu0
        %v2386 = vadd.f32 0.0, %v2385
        %v2387 = vpop.f32.mrf.mxu0
        %2388 = vdwg.mxu0
        %v2390 = vsel %vm1226, %v2349, 0
        %v2393 = vsel %vm1417, %v2165, 0
        %2395 = vmatpush.bf16.msra.mxu0 0
        %2396 = vmatpush.bf16.msra.mxu0 0
        %2397 = vmatpush.bf16.msra.mxu0 0
        %2398 = vmatpush.bf16.msra.mxu0 0
        %2399 = vmatpush.bf16.msra.mxu0 0
        %2400 = vmatpush.bf16.msra.mxu0 0
        %2401 = vmatpush.bf16.msra.mxu0 0
        %2402 = vmatpush.bf16.msra.mxu0 %v2393
        %2403 = vmatmul.bf16.gmra.mxu0 %v2390
        %v2404 = vpop.f32.mrf.mxu0
        %v2405 = vadd.f32 0.0, %v2404
        %v2406 = vpop.f32.mrf.mxu0
        %2407 = vdwg.mxu0
        %v2409 = vsel %vm1226, %v2350, 0
        %v2412 = vsel %vm1417, %v2166, 0
        %2414 = vmatpush.bf16.msra.mxu0 0
        %2415 = vmatpush.bf16.msra.mxu0 0
        %2416 = vmatpush.bf16.msra.mxu0 0
        %2417 = vmatpush.bf16.msra.mxu0 0
        %2418 = vmatpush.bf16.msra.mxu0 0
        %2419 = vmatpush.bf16.msra.mxu0 0
        %2420 = vmatpush.bf16.msra.mxu0 0
        %2421 = vmatpush.bf16.msra.mxu0 %v2412
        %2422 = vmatmul.bf16.gmra.mxu0 %v2409
        %v2423 = vpop.f32.mrf.mxu0
        %v2424 = vadd.f32 0.0, %v2423
        %v2425 = vpop.f32.mrf.mxu0
        %2426 = vdwg.mxu0
        %v2427 = vpack.c.bf16 %v2367, %v2367
        %v2428 = vpack.c.bf16 %v2386, %v2386
        %v2429 = vpack.c.bf16 %v2405, %v2405
        %v2430 = vpack.c.bf16 %v2424, %v2424
        %s2431 = scalar_lea.vmem %s9, 16
        %v2432 = vld [vmem:[%s2431] sm:$0xf]
        %v2433 = vld [vmem:[%s2431 + $0x4] sm:$0xf]
        %v2434 = vld [vmem:[%s2431 + $0x8] sm:$0xf]
        %v2435 = vld [vmem:[%s2431 + $0xc] sm:$0xf]
        %v2437 = vsel %vm1226, %v2427, 0
        %v2440 = vsel %vm1417, %v2432, 0
        %2442 = vmatpush.bf16.msra.mxu0 0
        %2443 = vmatpush.bf16.msra.mxu0 0
        %2444 = vmatpush.bf16.msra.mxu0 0
        %2445 = vmatpush.bf16.msra.mxu0 0
        %2446 = vmatpush.bf16.msra.mxu0 0
        %2447 = vmatpush.bf16.msra.mxu0 0
        %2448 = vmatpush.bf16.msra.mxu0 0
        %2449 = vmatpush.bf16.msra.mxu0 %v2440
        %2450 = vmatmul.bf16.gmra.mxu0 %v2437
        %v2451 = vpop.f32.mrf.mxu0
        %v2452 = vadd.f32 0.0, %v2451
        %v2453 = vpop.f32.mrf.mxu0
        %2454 = vdwg.mxu0
        %v2456 = vsel %vm1226, %v2428, 0
        %v2459 = vsel %vm1417, %v2433, 0
        %2461 = vmatpush.bf16.msra.mxu0 0
        %2462 = vmatpush.bf16.msra.mxu0 0
        %2463 = vmatpush.bf16.msra.mxu0 0
        %2464 = vmatpush.bf16.msra.mxu0 0
        %2465 = vmatpush.bf16.msra.mxu0 0
        %2466 = vmatpush.bf16.msra.mxu0 0
        %2467 = vmatpush.bf16.msra.mxu0 0
        %2468 = vmatpush.bf16.msra.mxu0 %v2459
        %2469 = vmatmul.bf16.gmra.mxu0 %v2456
        %v2470 = vpop.f32.mrf.mxu0
        %v2471 = vadd.f32 0.0, %v2470
        %v2472 = vpop.f32.mrf.mxu0
        %2473 = vdwg.mxu0
        %v2475 = vsel %vm1226, %v2429, 0
        %v2478 = vsel %vm1417, %v2434, 0
        %2480 = vmatpush.bf16.msra.mxu0 0
        %2481 = vmatpush.bf16.msra.mxu0 0
        %2482 = vmatpush.bf16.msra.mxu0 0
        %2483 = vmatpush.bf16.msra.mxu0 0
        %2484 = vmatpush.bf16.msra.mxu0 0
        %2485 = vmatpush.bf16.msra.mxu0 0
        %2486 = vmatpush.bf16.msra.mxu0 0
        %2487 = vmatpush.bf16.msra.mxu0 %v2478
        %2488 = vmatmul.bf16.gmra.mxu0 %v2475
        %v2489 = vpop.f32.mrf.mxu0
        %v2490 = vadd.f32 0.0, %v2489
        %v2491 = vpop.f32.mrf.mxu0
        %2492 = vdwg.mxu0
        %v2494 = vsel %vm1226, %v2430, 0
        %v2497 = vsel %vm1417, %v2435, 0
        %2499 = vmatpush.bf16.msra.mxu0 0
        %2500 = vmatpush.bf16.msra.mxu0 0
        %2501 = vmatpush.bf16.msra.mxu0 0
        %2502 = vmatpush.bf16.msra.mxu0 0
        %2503 = vmatpush.bf16.msra.mxu0 0
        %2504 = vmatpush.bf16.msra.mxu0 0
        %2505 = vmatpush.bf16.msra.mxu0 0
        %2506 = vmatpush.bf16.msra.mxu0 %v2497
        %2507 = vmatmul.bf16.gmra.mxu0 %v2494
        %v2508 = vpop.f32.mrf.mxu0
        %v2509 = vadd.f32 0.0, %v2508
        %v2510 = vpop.f32.mrf.mxu0
        %2511 = vdwg.mxu0
        %v2512 = vsel %vm773, %v2452, 0.0
        %v2513 = vsel %vm773, %v2471, 0.0
        %v2514 = vadd.f32 %v2512, %v2513
        %v2515 = vsel %vm773, %v2490, 0.0
        %v2516 = vadd.f32 %v2514, %v2515
        %v2517 = vsel %vm773, %v2509, 0.0
        %v2518 = vadd.f32 %v2516, %v2517
        %s2519 = scalar_lea.vmem %s10, 1
        %v2520 = vld [vmem:[%s2519] sm:$0x1]
        %v2522 = vperm.slane %v2520, 0
        %v2524 = vadd.f32 %v2518, %v2522
        %v2525 = vadd.f32 %v2524, %v1752
        %s2526 = scalar_lea.vmem %s11, 1
        %v2527 = vld [vmem:[%s2526] sm:$0x1]
        %s2528 = scalar_lea.vmem %s12, 1
        %v2529 = vld [vmem:[%s2528] sm:$0x1]
        %v2530 = vsel %vm773, %v2525, 0.0
        %2531 = vadd.xlane.f32.xlu0 %v2530
        %v2532 = vpop.xlane.xlu0 %2531
        %v2533 = vmul.f32 %v2532, %v783
        %v2534 = vsub.f32 %v2525, %v2533
        %v2535 = vmul.f32 %v2534, %v2534
        %v2536 = vsel %vm773, %v2535, 0.0
        %2537 = vadd.xlane.f32.xlu0 %v2536
        %v2538 = vpop.xlane.xlu0 %2537
        %v2539 = vmul.f32 %v2538, %v783
        %v2540 = vadd.f32 %v2539, 1e-12
        %v2541 = vrsqrt.pop %v2540
        %v2542 = vmul.f32 %v2541, %v2540
        %v2543 = vmul.f32 %v2542, %v2541
        %v2544 = vmul.f32 0.5, %v2543
        %v2545 = vsub.f32 1.5, %v2544
        %v2546 = vmul.f32 %v2541, %v2545
        %vm2547 = vweird.f32 %v2540
        %vm2548 = vweird.f32 %v2541
        %vm2549 = vmor %vm2547, %vm2548
        %v2550 = vsel %vm2549, %v2541, %v2546
        %v2551 = vmul.f32 %v2534, %v2550
        %v2553 = vperm.slane %v2527, 0
        %v2555 = vmul.f32 %v2551, %v2553
        %v2557 = vperm.slane %v2529, 0
        %v2559 = vadd.f32 %v2555, %v2557
        %v2560 = vpack.c.bf16 %v2559, %v2559
        %s2561 = scalar_lea.vmem %s13, 16
        %v2562 = vld [vmem:[%s2561] sm:$0xf]
        %v2563 = vld [vmem:[%s2561 + $0x4] sm:$0xf]
        %v2564 = vld [vmem:[%s2561 + $0x8] sm:$0xf]
        %v2565 = vld [vmem:[%s2561 + $0xc] sm:$0xf]
        %s2566 = scalar_lea.vmem %s14, 1
        %v2567 = vld [vmem:[%s2566] sm:$0x1]
        %v2569 = vperm.slane %v2567, 0
        %v2575 = vunpack.c.l.b16 %v2562
        %v2576 = vunpack.c.l.b16 %v2563
        %v2577 = vunpack.c.l.b16 %v2564
        %v2578 = vunpack.c.l.b16 %v2565
        %v2579 = vpack.c.b16 %v2576, %v2575
        %v2580 = vpack.c.b16 %v2578, %v2577
        %v2584 = vsel %vm773, %v2560, 0
        %2586 = vmatpush.bf16.msra.mxu0 0
        %2587 = vmatpush.bf16.msra.mxu0 0
        %2588 = vmatpush.bf16.msra.mxu0 0
        %2589 = vmatpush.bf16.msra.mxu0 0
        %2590 = vmatpush.bf16.msra.mxu0 0
        %2591 = vmatpush.bf16.msra.mxu0 0
        %2592 = vmatpush.bf16.msra.mxu0 %v2580
        %2593 = vmatpush.bf16.msra.mxu0 %v2579
        %2594 = vmatmul.bf16.gmra.mxu0 %v2584
        %v2595 = vpop.f32.mrf.mxu0
        %v2596 = vadd.f32 %v2569, %v2595
        %v2597 = vpop.f32.mrf.mxu0
        %2598 = vdwg.mxu0
        %v2599 = vmul.f32 %v2596, 0.5
        %v2600 = vmul.f32 %v2596, 0.044715
        %v2601 = vmul.f32 %v2600, %v2596
        %v2602 = vmul.f32 %v2601, %v2596
        %v2603 = vadd.f32 %v2596, %v2602
        %v2604 = vmul.f32 %v2603, 0.7978846
        %v2605 = vtanh.pop %v2604
        %v2606 = vadd.f32 %v2605, 1.0
        %v2607 = vmul.f32 %v2599, %v2606
        %v2608 = vpack.c.bf16 %v2607, %v2607
        %s2609 = scalar_lea.vmem %s15, 32
        %v2610 = vld [vmem:[%s2609] sm:$0xf]
        %v2611 = vld [vmem:[%s2609 + $0x4] sm:$0xf]
        %v2612 = vld [vmem:[%s2609 + $0x8] sm:$0xf]
        %v2613 = vld [vmem:[%s2609 + $0xc] sm:$0xf]
        %v2614 = vld [vmem:[%s2609 + $0x10] sm:$0xf]
        %v2615 = vld [vmem:[%s2609 + $0x14] sm:$0xf]
        %v2616 = vld [vmem:[%s2609 + $0x18] sm:$0xf]
        %v2617 = vld [vmem:[%s2609 + $0x1c] sm:$0xf]
        %s2618 = scalar_lea.vmem %s16, 1
        %v2619 = vld [vmem:[%s2618] sm:$0x1]
        %v2621 = vperm.slane %v2619, 0
        %v2631 = vunpack.c.l.b16 %v2610
        %v2632 = vunpack.c.l.b16 %v2611
        %v2633 = vunpack.c.l.b16 %v2612
        %v2634 = vunpack.c.l.b16 %v2613
        %v2635 = vunpack.c.l.b16 %v2614
        %v2636 = vunpack.c.l.b16 %v2615
        %v2637 = vunpack.c.l.b16 %v2616
        %v2638 = vunpack.c.l.b16 %v2617
        %v2639 = vpack.c.b16 %v2632, %v2631
        %v2640 = vpack.c.b16 %v2634, %v2633
        %v2641 = vpack.c.b16 %v2636, %v2635
        %v2642 = vpack.c.b16 %v2638, %v2637
        %v2648 = vsel %vm1703, %v2608, 0
        %2650 = vmatpush.bf16.msra.mxu0 0
        %2651 = vmatpush.bf16.msra.mxu0 0
        %2652 = vmatpush.bf16.msra.mxu0 0
        %2653 = vmatpush.bf16.msra.mxu0 0
        %2654 = vmatpush.bf16.msra.mxu0 %v2642
        %2655 = vmatpush.bf16.msra.mxu0 %v2641
        %2656 = vmatpush.bf16.msra.mxu0 %v2640
        %2657 = vmatpush.bf16.msra.mxu0 %v2639
        %2658 = vmatmul.bf16.gmra.mxu0 %v2648
        %v2659 = vpop.f32.mrf.mxu0
        %v2660 = vadd.f32 %v2621, %v2659
        %v2661 = vpop.f32.mrf.mxu0
        %2662 = vdwg.mxu0
        %v2663 = vadd.f32 %v2660, %v2559
        %s2664 = scalar_lea.vmem %s17, 1
        %v2665 = vld [vmem:[%s2664] sm:$0x1]
        %s2666 = scalar_lea.vmem %s18, 1
        %v2667 = vld [vmem:[%s2666] sm:$0x1]
        %v2668 = vsel %vm773, %v2663, 0.0
        %2669 = vadd.xlane.f32.xlu0 %v2668
        %v2670 = vpop.xlane.xlu0 %2669
        %v2671 = vmul.f32 %v2670, %v783
        %v2672 = vsub.f32 %v2663, %v2671
        %v2673 = vmul.f32 %v2672, %v2672
        %v2674 = vsel %vm773, %v2673, 0.0
        %2675 = vadd.xlane.f32.xlu0 %v2674
        %v2676 = vpop.xlane.xlu0 %2675
        %v2677 = vmul.f32 %v2676, %v783
        %v2678 = vadd.f32 %v2677, 1e-12
        %v2679 = vrsqrt.pop %v2678
        %v2680 = vmul.f32 %v2679, %v2678
        %v2681 = vmul.f32 %v2680, %v2679
        %v2682 = vmul.f32 0.5, %v2681
        %v2683 = vsub.f32 1.5, %v2682
        %v2684 = vmul.f32 %v2679, %v2683
        %vm2685 = vweird.f32 %v2678
        %vm2686 = vweird.f32 %v2679
        %vm2687 = vmor %vm2685, %vm2686
        %v2688 = vsel %vm2687, %v2679, %v2684
        %v2689 = vmul.f32 %v2672, %v2688
        %v2691 = vperm.slane %v2665, 0
        %v2693 = vmul.f32 %v2689, %v2691
        %v2695 = vperm.slane %v2667, 0
        %v2697 = vadd.f32 %v2693, %v2695
        %v2698 = vpack.c.bf16 %v2697, %v2697
        %v2699 = vld [vmem:[%s19] sm:$0xf]
        %v2700 = vld [vmem:[%s19 + $0x4] sm:$0xf]
        %v2701 = vld [vmem:[%s19 + $0x8] sm:$0xf]
        %v2702 = vld [vmem:[%s19 + $0xc] sm:$0xf]
        %v2703 = vld [vmem:[%s20] sm:$0x1]
        %v2708 = vunpack.c.l.b16 %v2699
        %v2709 = vunpack.c.l.b16 %v2700
        %v2710 = vunpack.c.l.b16 %v2701
        %v2711 = vunpack.c.l.b16 %v2702
        %v2712 = vpack.c.b16 %v2709, %v2708
        %v2713 = vpack.c.b16 %v2711, %v2710
        %v2717 = vsel %vm773, %v2698, 0
        %2719 = vmatpush.bf16.msra.mxu0 0
        %2720 = vmatpush.bf16.msra.mxu0 0
        %2721 = vmatpush.bf16.msra.mxu0 0
        %2722 = vmatpush.bf16.msra.mxu0 0
        %2723 = vmatpush.bf16.msra.mxu0 0
        %2724 = vmatpush.bf16.msra.mxu0 0
        %2725 = vmatpush.bf16.msra.mxu0 %v2713
        %2726 = vmatpush.bf16.msra.mxu0 %v2712
        %2727 = vmatmul.bf16.gmra.mxu0 %v2717
        %v2728 = vpop.f32.mrf.mxu0
        %v2729 = vadd.f32 %v2703, %v2728
        %v2730 = vpop.f32.mrf.mxu0
        %2731 = vdwg.mxu0
        %v2732 = vtanh.pop %v2729
        %v2733 = vpack.c.bf16 %v2732, %v2732
        %v2734 = vld [vmem:[%s21] sm:$0xf]
        %v2735 = vld [vmem:[%s21 + $0x4] sm:$0xf]
        %v2736 = vld [vmem:[%s21 + $0x8] sm:$0xf]
        %v2737 = vld [vmem:[%s21 + $0xc] sm:$0xf]
        %v2738 = vld [vmem:[%s22] sm:$0x1]
        %v2743 = vunpack.c.l.b16 %v2734
        %v2744 = vunpack.c.l.b16 %v2735
        %v2745 = vunpack.c.l.b16 %v2736
        %v2746 = vunpack.c.l.b16 %v2737
        %v2747 = vpack.c.b16 %v2744, %v2743
        %v2748 = vpack.c.b16 %v2746, %v2745
        %v2752 = vsel %vm773, %v2733, 0
        %2754 = vmatpush.bf16.msra.mxu0 0
        %2755 = vmatpush.bf16.msra.mxu0 0
        %2756 = vmatpush.bf16.msra.mxu0 0
        %2757 = vmatpush.bf16.msra.mxu0 0
        %2758 = vmatpush.bf16.msra.mxu0 0
        %2759 = vmatpush.bf16.msra.mxu0 0
        %2760 = vmatpush.bf16.msra.mxu0 %v2748
        %2761 = vmatpush.bf16.msra.mxu0 %v2747
        %2762 = vmatmul.bf16.gmra.mxu0 %v2752
        %v2763 = vpop.f32.mrf.mxu0
        %v2764 = vadd.f32 %v2738, %v2763
        %v2765 = vpop.f32.mrf.mxu0
        %2766 = vdwg.mxu0
        %2767 = vst [vmem:[%s711] sm:$0x1] %v2764
        %s2768 = sand.u32 %s538, 1
        %s2769 = scalar_lea.sflag [#allocation3], %s2768
        %s2770 = sand.u32 %s538, 1
        %s2771 = scalar_lea.vmem [#allocation2], %s2770
        // Predicated region
        $region113: #{bert_classifier_forward.1} parent=111 // pred_check
          %p2772 = pneg %p548
        $region114: #{bert_classifier_forward.1} parent=111 // pred_check_branch
          %2774 = sbr.rel (%p2772) target = $region116
        $region115: #{bert_classifier_forward.1} parent=111 // pred_region
          %2776 = vsyncadd %s2769, 0
          %s2777 = scalar_lea.hbm %s23, %s37
          %s2779 = sshll.u32 %s2771, 4
          %s2780 = int_to_ptr.vmem [resolvable:$true] %s2779
          %s2781 = sshll.u32 %s2777, 4
          %s2782 = int_to_ptr.hbm [resolvable:$true] %s2781
          %2784 = dma.vmem_to_hbm [thread:$0]  %s2780, 16, %s2782, %s2769
        $region116: #{bert_classifier_forward.1} parent=111 // pred_fallthru
          _
      $region112: #{bert_classifier_forward.1} parent=5 // pred_fallthru
        _
      %p2785 = scmp.le.s32.totalorder 2, %s32
      // Predicated region
      $region117: #{bert_classifier_forward.1} parent=5 // pred_check
        %p2786 = pneg %p2785
      $region118: #{bert_classifier_forward.1} parent=5 // pred_check_branch
        %2788 = sbr.rel (%p2786) target = $region120
      $region119: #{bert_classifier_forward.1} parent=5 // pred_region
        %s2789 = ssub.s32 %s32, 2
        // Predicated region
        $region121: #{bert_classifier_forward.1} parent=119 // pred_check
          %p2790 = pneg %p554
        $region122: #{bert_classifier_forward.1} parent=119 // pred_check_branch
          %2792 = sbr.rel (%p2790) target = $region124
        $region123: #{bert_classifier_forward.1} parent=119 // pred_region
          %s2793 = sand.u32 %s539, 1
          %s2794 = scalar_lea.sflag [#allocation3], %s2793
          %s2795 = sand.u32 %s539, 1
          %s2796 = scalar_lea.vmem [#allocation2], %s2795
          %2798 = dma.done %s2794, 16
        $region124: #{bert_classifier_forward.1} parent=119 // pred_fallthru
          _
      $region120: #{bert_classifier_forward.1} parent=5 // pred_fallthru
        _
    $region6: #{bert_classifier_forward.1} parent=1 // loop_footer
      %s36 = sadd.s32 1, %s32
    $region7: #{bert_classifier_forward.1} parent=1 // loop_footer_branch
      %31 = sbr.rel target = $region3
    $region8: #{bert_classifier_forward.1} parent=1 // loop_exit
      _
    %2799 = vsyncpa [#allocation3], 1
    %s2800 = scalar_lea.sflag [#allocation3], 1
    %2801 = vsyncpa %s2800, 1

</llo_original>
